<compile_context>
chip_gen: v7x
topology: tpu7x:2x2x1
jax: 0.10.0
libtpu: 0.0.40
codegen_flags: <defaults>
</compile_context>

<pallas_src>
import functools
import math

import jax
import jax.numpy as jnp
from jax import lax
from jax.experimental import pallas as pl
from jax.experimental.pallas import tpu as pltpu

EPS = 1e-5
CHUNK = 8                 # timesteps per scan chunk (sublane aligned)
_TARGET_M_ROWS = 256      # target rows per block for MXU-shaped matmuls


def _silu(x):
    return x * jax.nn.sigmoid(x)


# ----------------------------------------------------------------------------
# Pallas kernels
# ----------------------------------------------------------------------------
def _mamba_block_kernel(h_ref, r_ref, norm_w_ref, w_in_ref, conv_w_ref,
                        conv_b_ref, w_dt_ref, w_b_ref, w_c_ref, dtw_ref,
                        dtb_ref, a_nt_ref, d_ref, w_out_ref,
                        h_out_ref, r_out_ref,
                        dt_s, dtx_s, b_s, c_s, st_s, y_s,
                        *, L, E, N, K, Bb):
    M = Bb * L

    # --- residual stream + RMSNorm (fp32) ---
    residual = h_ref[...] + r_ref[...]                       # (Bb, L, D)
    var = jnp.mean(residual * residual, axis=-1, keepdims=True)
    xn = residual * lax.rsqrt(var + EPS) * norm_w_ref[...]   # (Bb, L, D)
    xn2 = xn.reshape(M, -1)                                  # (M, D)  (L % 8 == 0)

    # --- fused in_proj (bf16 weights, fp32 accumulate) ---
    xz = jnp.dot(xn2.astype(jnp.bfloat16), w_in_ref[...],
                 preferred_element_type=jnp.float32)         # (M, 2E)
    x2 = xz[:, :E]                                           # (M, E)
    z2 = xz[:, E:]                                           # (M, E)

    # --- causal depthwise conv1d along L (flattened rows; cross-batch leakage
    #     from the roll wrap-around is masked out with the in-sequence pos) ---
    pos = lax.broadcasted_iota(jnp.int32, (Bb, L, E), 1).reshape(M, E)
    cw = conv_w_ref[...]                                     # (K, E)
    acc = x2 * cw[K - 1:K, :]                                # tap s = 0
    for s in range(1, K):
        shifted = jnp.where(pos >= s, pltpu.roll(x2, s, 0), 0.0)
        acc = acc + shifted * cw[K - 1 - s:K - s, :]
    xc = _silu(acc + conv_b_ref[...])                        # (M, E)

    # --- x_proj / dt_proj ---
    xc_b = xc.astype(jnp.bfloat16)
    dt_low = jnp.dot(xc_b, w_dt_ref[...], preferred_element_type=jnp.float32)  # (M, R)
    bmat = jnp.dot(xc_b, w_b_ref[...], preferred_element_type=jnp.float32)     # (M, N)
    cmat = jnp.dot(xc_b, w_c_ref[...], preferred_element_type=jnp.float32)     # (M, N)
    dt = jnp.dot(dt_low.astype(jnp.bfloat16), dtw_ref[...],
                 preferred_element_type=jnp.float32) + dtb_ref[...]
    dt = jax.nn.softplus(dt)                                 # (M, E) fp32

    # stage the scan operands in VMEM so chunks can be sliced with pl.ds
    dt_s[...] = dt
    dtx_s[...] = dt * xc
    b_s[...] = bmat
    c_s[...] = cmat

    # --- selective scan: chunked, with exp / outer products hoisted out of the
    #     serial recurrence (only mul+add remain on the critical chain) ---
    a_nt = a_nt_ref[...]                                     # (N, E) == A.T
    n_chunks = L // CHUNK
    for b in range(Bb):                                      # static, small
        def chunk_body(ci, state, _b=b):
            base = pl.multiple_of(_b * L + ci * CHUNK, CHUNK)
            dt_c = dt_s[pl.ds(base, CHUNK), :]               # (CHUNK, E)
            dtx_c = dtx_s[pl.ds(base, CHUNK), :]             # (CHUNK, E)
            b_c = b_s[pl.ds(base, CHUNK), :]                 # (CHUNK, N)
            c_c = c_s[pl.ds(base, CHUNK), :]                 # (CHUNK, N)
            dA_c = jnp.exp(dt_c[:, None, :] * a_nt[None, :, :])   # (CHUNK, N, E)
            dBu_c = dtx_c[:, None, :] * b_c[:, :, None]           # (CHUNK, N, E)
            for t in range(CHUNK):                           # short static unroll
                state = dA_c[t] * state + dBu_c[t]
                st_s[t] = state
            states = st_s[...]                               # (CHUNK, N, E)
            # C reduction done in batch, off the serial chain
            yc = jnp.sum(states * c_c[:, :, None], axis=1)   # (CHUNK, E)
            y_s[pl.ds(base, CHUNK), :] = yc
            return state
        lax.fori_loop(0, n_chunks, chunk_body,
                      jnp.zeros((N, E), jnp.float32))

    # --- skip connection D*u, SiLU gate, out_proj ---
    y = (y_s[...] + d_ref[...] * xc) * _silu(z2)             # (M, E)
    out = jnp.dot(y.astype(jnp.bfloat16), w_out_ref[...],
                  preferred_element_type=jnp.float32)        # (M, D)
    h_out_ref[...] = out.reshape(residual.shape)
    r_out_ref[...] = residual


def _head_kernel(h_ref, r_ref, nw_ref, w_ref, out_ref):
    # h_ref/r_ref: (B, D) last-token rows; w_ref: (V_tile, D) bf16 tied weight
    last = h_ref[...] + r_ref[...]
    var = jnp.mean(last * last, axis=-1, keepdims=True)
    xn = last * lax.rsqrt(var + EPS) * nw_ref[...]
    out_ref[...] = lax.dot_general(
        xn.astype(jnp.bfloat16), w_ref[...],
        dimension_numbers=(((1,), (1,)), ((), ())),          # contract D on both
        preferred_element_type=jnp.float32)                  # (B, V_tile)


# ----------------------------------------------------------------------------
# pallas_call wrappers
# ----------------------------------------------------------------------------
def mamba_block_call(h, r, layer, *, block_batch=None):
    B, L, D = h.shape
    (norm_w, w_in, conv_w, conv_b, w_dt, w_b, w_c,
     dtw, dtb, a_nt, d_p, w_out) = layer
    E = w_out.shape[0]
    N = w_b.shape[1]
    K = conv_w.shape[0]

    if block_batch is None:
        block_batch = max(1, min(B, _TARGET_M_ROWS // L))
    Bb = block_batch
    assert B % Bb == 0, "batch must be divisible by block_batch"
    assert L % CHUNK == 0, "sequence length must be a multiple of 8"
    M = Bb * L

    block3 = lambda g: (g, 0, 0)
    rep2 = lambda g: (0, 0)

    kern = functools.partial(_mamba_block_kernel, L=L, E=E, N=N, K=K, Bb=Bb)
    return pl.pallas_call(
        kern,
        out_shape=[jax.ShapeDtypeStruct((B, L, D), jnp.float32),
                   jax.ShapeDtypeStruct((B, L, D), jnp.float32)],
        grid_spec=pltpu.PrefetchScalarGridSpec(
            num_scalar_prefetch=0,
            grid=(B // Bb,),
            in_specs=[pl.BlockSpec((Bb, L, D), block3),
                      pl.BlockSpec((Bb, L, D), block3),
                      pl.BlockSpec(norm_w.shape, rep2),
                      pl.BlockSpec(w_in.shape, rep2),
                      pl.BlockSpec(conv_w.shape, rep2),
                      pl.BlockSpec(conv_b.shape, rep2),
                      pl.BlockSpec(w_dt.shape, rep2),
                      pl.BlockSpec(w_b.shape, rep2),
                      pl.BlockSpec(w_c.shape, rep2),
                      pl.BlockSpec(dtw.shape, rep2),
                      pl.BlockSpec(dtb.shape, rep2),
                      pl.BlockSpec(a_nt.shape, rep2),
                      pl.BlockSpec(d_p.shape, rep2),
                      pl.BlockSpec(w_out.shape, rep2)],
            out_specs=[pl.BlockSpec((Bb, L, D), block3),
                       pl.BlockSpec((Bb, L, D), block3)],
            scratch_shapes=[pltpu.VMEM((M, E), jnp.float32),        # dt
                            pltpu.VMEM((M, E), jnp.float32),        # dt * u
                            pltpu.VMEM((M, N), jnp.float32),        # B
                            pltpu.VMEM((M, N), jnp.float32),        # C
                            pltpu.VMEM((CHUNK, N, E), jnp.float32),  # state snaps
                            pltpu.VMEM((M, E), jnp.float32)]),      # y
        compiler_params=pltpu.CompilerParams(
            dimension_semantics=("parallel",)),
        input_output_aliases={0: 0, 1: 1},   # write h/r streams in place
    )(h, r, norm_w, w_in, conv_w, conv_b, w_dt, w_b, w_c,
      dtw, dtb, a_nt, d_p, w_out)


def head_call(last_h, last_r, norm_f, emb_bf16, *, v_tile=128):
    B, D = last_h.shape
    V = emb_bf16.shape[0]
    v_tile = min(v_tile, V)
    assert V % v_tile == 0, "vocab must be divisible by the vocab tile"
    logits = pl.pallas_call(
        _head_kernel,
        out_shape=jax.ShapeDtypeStruct((B, V), jnp.float32),
        grid_spec=pltpu.PrefetchScalarGridSpec(
            num_scalar_prefetch=0,
            grid=(V // v_tile,),
            in_specs=[pl.BlockSpec((B, D), lambda v: (0, 0)),
                      pl.BlockSpec((B, D), lambda v: (0, 0)),
                      pl.BlockSpec((1, D), lambda v: (0, 0)),
                      pl.BlockSpec((v_tile, D), lambda v: (v, 0))],
            out_specs=pl.BlockSpec((B, v_tile), lambda v: (0, v))),
        compiler_params=pltpu.CompilerParams(
            dimension_semantics=("parallel",)),
    )(last_h, last_r, norm_f, emb_bf16)
    return logits[:, None, :]                                # (B, 1, V)


def mamba_lm_forward(tokens, emb_w, layers, norm_f, *, block_batch=None):
    h = emb_w[tokens]                     # embedding gather (plain-JAX glue)
    r = jnp.zeros_like(h)
    for layer in layers:
        h, r = mamba_block_call(h, r, layer, block_batch=block_batch)
    # tied lm_head on the last token only; emb_w is never transposed in HBM.
    last_h = h[:, -1, :]
    last_r = r[:, -1, :]
    head_w = emb_w.astype(jnp.bfloat16)   # (V, D), tied weights
    return head_call(last_h, last_r, norm_f, head_w)


# ----------------------------------------------------------------------------
# deterministic parameter init (synthetic; mirrors mamba_ssm shapes)
# ----------------------------------------------------------------------------
def init_params(key, d_model, n_layer, vocab, d_state, d_conv, d_inner, dt_rank):
    keys = jax.random.split(key, 1 + n_layer)
    emb_w = jax.random.normal(keys[0], (vocab, d_model), jnp.float32) * 0.02

    layers = []
    for i in range(n_layer):
        k = jax.random.split(keys[1 + i], 6)
        norm_w = jnp.ones((1, d_model), jnp.float32)

        in_w = jax.random.normal(k[0], (2 * d_inner, d_model), jnp.float32) * 0.02
        w_in = in_w.T.astype(jnp.bfloat16)                 # (D, 2E): [:E]=x, [E:]=z

        conv_w = (jax.random.normal(k[1], (d_inner, d_conv), jnp.float32) * 0.2).T  # (K, E)
        conv_b = jnp.zeros((1, d_inner), jnp.float32)

        x_proj_w = jax.random.normal(k[2], (dt_rank + 2 * d_state, d_inner),
                                     jnp.float32) * 0.02
        w_dt = x_proj_w[:dt_rank].T.astype(jnp.bfloat16)                 # (E, R)
        w_b = x_proj_w[dt_rank:dt_rank + d_state].T.astype(jnp.bfloat16)  # (E, N)
        w_c = x_proj_w[dt_rank + d_state:].T.astype(jnp.bfloat16)         # (E, N)

        dt_proj_w = jax.random.normal(k[3], (d_inner, dt_rank), jnp.float32) * (dt_rank ** -0.5)
        dtw = dt_proj_w.T.astype(jnp.bfloat16)             # (R, E)
        dt_init = jnp.exp(jax.random.uniform(k[4], (d_inner,), jnp.float32)
                          * (math.log(0.1) - math.log(0.001)) + math.log(0.001))
        dt_init = jnp.maximum(dt_init, 1e-4)
        dtb = jnp.log(jnp.expm1(dt_init)).reshape(1, d_inner)   # inverse softplus

        a_log = jnp.log(jnp.tile(jnp.arange(1, d_state + 1, dtype=jnp.float32)[None, :],
                                 (d_inner, 1)))                 # (E, N)
        a_nt = (-jnp.exp(a_log)).T                              # (N, E)
        d_p = jnp.ones((1, d_inner), jnp.float32)

        out_w = jax.random.normal(k[5], (d_model, d_inner), jnp.float32) * 0.02
        w_out = out_w.T.astype(jnp.bfloat16)                    # (E, D)

        layers.append((norm_w, w_in, conv_w, conv_b, w_dt, w_b, w_c,
                       dtw, dtb, a_nt, d_p, w_out))
    norm_f = jnp.ones((1, d_model), jnp.float32)
    return emb_w, layers, norm_f


# ----------------------------------------------------------------------------
# pure-JAX reference (same math, same bf16 matmul dtypes) for correctness
# ----------------------------------------------------------------------------
def ref_forward(tokens, emb_w, layers, norm_f):
    def mm(a, w):
        return jnp.dot(a.astype(jnp.bfloat16), w, preferred_element_type=jnp.float32)

    h = emb_w[tokens]
    r = jnp.zeros_like(h)
    for (norm_w, w_in, conv_w, conv_b, w_dt, w_b, w_c,
         dtw, dtb, a_nt, d_p, w_out) in layers:
        residual = h + r
        var = jnp.mean(residual * residual, axis=-1, keepdims=True)
        xn = residual * lax.rsqrt(var + EPS) * norm_w[0]
        E = w_out.shape[0]
        xz = mm(xn, w_in)
        x = xz[..., :E]
        z = xz[..., E:]
        L = x.shape[1]
        K = conv_w.shape[0]
        acc = jnp.zeros_like(x)
        for k in range(K):
            s = K - 1 - k
            xs = jnp.pad(x, ((0, 0), (s, 0), (0, 0)))[:, :L, :]
            acc = acc + xs * conv_w[k][None, None, :]
        xc = jax.nn.silu(acc + conv_b[0])
        dt = jax.nn.softplus(mm(mm(xc, w_dt), dtw) + dtb[0])
        bm = mm(xc, w_b)
        cm = mm(xc, w_c)
        a = a_nt.T                                   # (E, N)

        def scan_fn(state, inp):
            dt_t, x_t, b_t, c_t = inp
            dA = jnp.exp(dt_t[..., None] * a[None])
            dBu = (dt_t * x_t)[..., None] * b_t[:, None, :]
            state = dA * state + dBu
            y = jnp.sum(state * c_t[:, None, :], axis=-1)
            return state, y

        bsz, _, e = xc.shape
        n = bm.shape[-1]
        _, ys = lax.scan(scan_fn, jnp.zeros((bsz, e, n), jnp.float32),
                         (jnp.swapaxes(dt, 0, 1), jnp.swapaxes(xc, 0, 1),
                          jnp.swapaxes(bm, 0, 1), jnp.swapaxes(cm, 0, 1)))
        y = jnp.swapaxes(ys, 0, 1)
        y = (y + d_p[0] * xc) * jax.nn.silu(z)
        h, r = mm(y, w_out), residual
    residual = h + r
    last = residual[:, -1, :]
    var = jnp.mean(last * last, axis=-1, keepdims=True)
    xn = last * lax.rsqrt(var + EPS) * norm_f[0]
    logits = mm(xn, emb_w.astype(jnp.bfloat16).T)
    return logits[:, None, :]


# ----------------------------------------------------------------------------
if __name__ == "__main__":
    d_model = 128             # lane-aligned demo dims (D=128, E=256)
    n_layer = 2
    vocab_size = 256          # multiple of pad_vocab_size_multiple=8 and of the vocab tile
    d_state = 16
    d_conv = 4
    expand = 2
    d_inner = expand * d_model
    dt_rank = math.ceil(d_model / 16)
    B, L = 4, 16

    emb_w, layers, norm_f = init_params(jax.random.PRNGKey(0), d_model, n_layer,
                                        vocab_size, d_state, d_conv, d_inner, dt_rank)
    tokens = jax.random.randint(jax.random.PRNGKey(1), (B, L), 0, vocab_size)

    # block_batch=2 -> grid of 2 batch tiles per layer (exercises pipelining +
    # aliasing); at real sizes pick block_batch so block_batch*L ~ 256 rows.
    logits = mamba_lm_forward(tokens, emb_w, layers, norm_f, block_batch=2)
    logits = jax.block_until_ready(logits)

    ref = ref_forward(tokens, emb_w, layers, norm_f)
    assert logits.shape == (B, 1, vocab_size)
    err = float(jnp.max(jnp.abs(logits - ref)))
    assert jnp.allclose(logits, ref, rtol=2e-2, atol=5e-3), (
        "max abs err = %g" % err)

    print("KERNEL_OK")
</pallas_src>

<mosaic_0001>
module attributes {stable_mosaic.version = 11 : i64} {
  func.func @_mamba_block_kernel(%arg0: i32, %arg1: memref<2x16x128xf32, #tpu.memory_space<vmem>>, %arg2: memref<2x16x128xf32, #tpu.memory_space<vmem>>, %arg3: memref<1x128xf32, #tpu.memory_space<vmem>>, %arg4: memref<128x512xbf16, #tpu.memory_space<vmem>>, %arg5: memref<4x256xf32, #tpu.memory_space<vmem>>, %arg6: memref<1x256xf32, #tpu.memory_space<vmem>>, %arg7: memref<256x8xbf16, #tpu.memory_space<vmem>>, %arg8: memref<256x16xbf16, #tpu.memory_space<vmem>>, %arg9: memref<256x16xbf16, #tpu.memory_space<vmem>>, %arg10: memref<8x256xbf16, #tpu.memory_space<vmem>>, %arg11: memref<1x256xf32, #tpu.memory_space<vmem>>, %arg12: memref<16x256xf32, #tpu.memory_space<vmem>>, %arg13: memref<1x256xf32, #tpu.memory_space<vmem>>, %arg14: memref<256x128xbf16, #tpu.memory_space<vmem>>, %arg15: memref<2x16x128xf32, #tpu.memory_space<vmem>>, %arg16: memref<2x16x128xf32, #tpu.memory_space<vmem>>, %arg17: memref<32x256xf32, #tpu.memory_space<vmem>>, %arg18: memref<32x256xf32, #tpu.memory_space<vmem>>, %arg19: memref<32x16xf32, #tpu.memory_space<vmem>>, %arg20: memref<32x16xf32, #tpu.memory_space<vmem>>, %arg21: memref<8x16x256xf32, #tpu.memory_space<vmem>>, %arg22: memref<32x256xf32, #tpu.memory_space<vmem>>) attributes {dimension_semantics = [#tpu.dimension_semantics<parallel>], iteration_bounds = array<i64: 2>, scalar_prefetch = 0 : i64, scratch_operands = 6 : i64, tpu.core_type = #tpu.core_type<tc>, window_params = [{transform_indices = @transform_0, window_bounds = array<i64: 2, 16, 128>}, {transform_indices = @transform_1, window_bounds = array<i64: 2, 16, 128>}, {pipeline_mode = #tpu.pipeline_mode<synchronous>, transform_indices = @transform_2, window_bounds = array<i64: 1, 128>}, {pipeline_mode = #tpu.pipeline_mode<synchronous>, transform_indices = @transform_3, window_bounds = array<i64: 128, 512>}, {pipeline_mode = #tpu.pipeline_mode<synchronous>, transform_indices = @transform_4, window_bounds = array<i64: 4, 256>}, {pipeline_mode = #tpu.pipeline_mode<synchronous>, transform_indices = @transform_5, window_bounds = array<i64: 1, 256>}, {pipeline_mode = #tpu.pipeline_mode<synchronous>, transform_indices = @transform_6, window_bounds = array<i64: 256, 8>}, {pipeline_mode = #tpu.pipeline_mode<synchronous>, transform_indices = @transform_7, window_bounds = array<i64: 256, 16>}, {pipeline_mode = #tpu.pipeline_mode<synchronous>, transform_indices = @transform_8, window_bounds = array<i64: 256, 16>}, {pipeline_mode = #tpu.pipeline_mode<synchronous>, transform_indices = @transform_9, window_bounds = array<i64: 8, 256>}, {pipeline_mode = #tpu.pipeline_mode<synchronous>, transform_indices = @transform_10, window_bounds = array<i64: 1, 256>}, {pipeline_mode = #tpu.pipeline_mode<synchronous>, transform_indices = @transform_11, window_bounds = array<i64: 16, 256>}, {pipeline_mode = #tpu.pipeline_mode<synchronous>, transform_indices = @transform_12, window_bounds = array<i64: 1, 256>}, {pipeline_mode = #tpu.pipeline_mode<synchronous>, transform_indices = @transform_13, window_bounds = array<i64: 256, 128>}, {transform_indices = @transform_14, window_bounds = array<i64: 2, 16, 128>}, {transform_indices = @transform_15, window_bounds = array<i64: 2, 16, 128>}]} {
    %c0 = arith.constant 0 : index
    %c0_0 = arith.constant 0 : index
    %c0_1 = arith.constant 0 : index
    %0 = vector.load %arg1[%c0, %c0_0, %c0_1] : memref<2x16x128xf32, #tpu.memory_space<vmem>>, vector<2x16x128xf32>
    %c0_2 = arith.constant 0 : index
    %c0_3 = arith.constant 0 : index
    %c0_4 = arith.constant 0 : index
    %1 = vector.load %arg2[%c0_2, %c0_3, %c0_4] : memref<2x16x128xf32, #tpu.memory_space<vmem>>, vector<2x16x128xf32>
    %2 = arith.addf %0, %1 : vector<2x16x128xf32>
    %3 = arith.mulf %2, %2 : vector<2x16x128xf32>
    %cst = arith.constant dense<0.000000e+00> : vector<2x16xf32>
    %4 = vector.multi_reduction <add>, %3, %cst [2] : vector<2x16x128xf32> to vector<2x16xf32>
    %5 = vector.shape_cast %4 : vector<2x16xf32> to vector<2x16x1xf32>
    %cst_5 = arith.constant 1.280000e+02 : f32
    %6 = vector.broadcast %cst_5 : f32 to vector<2x16x1xf32>
    %7 = arith.divf %5, %6 : vector<2x16x1xf32>
    %cst_6 = arith.constant 9.99999974E-6 : f32
    %8 = vector.broadcast %cst_6 : f32 to vector<2x16x1xf32>
    %9 = arith.addf %7, %8 : vector<2x16x1xf32>
    %10 = math.rsqrt %9 : vector<2x16x1xf32>
    %11 = vector.broadcast %10 : vector<2x16x1xf32> to vector<2x16x128xf32>
    %12 = arith.mulf %2, %11 : vector<2x16x128xf32>
    %c0_7 = arith.constant 0 : index
    %c0_8 = arith.constant 0 : index
    %13 = vector.load %arg3[%c0_7, %c0_8] : memref<1x128xf32, #tpu.memory_space<vmem>>, vector<1x128xf32>
    %14 = vector.shape_cast %13 : vector<1x128xf32> to vector<1x1x128xf32>
    %15 = vector.broadcast %14 : vector<1x1x128xf32> to vector<2x16x128xf32>
    %16 = arith.mulf %12, %15 : vector<2x16x128xf32>
    %17 = vector.shape_cast %16 : vector<2x16x128xf32> to vector<32x128xf32>
    %18 = arith.truncf %17 : vector<32x128xf32> to vector<32x128xbf16>
    %c0_9 = arith.constant 0 : index
    %c0_10 = arith.constant 0 : index
    %19 = vector.load %arg4[%c0_9, %c0_10] : memref<128x512xbf16, #tpu.memory_space<vmem>>, vector<128x512xbf16>
    %cst_11 = arith.constant dense<0.000000e+00> : vector<32x512xf32>
    %20 = tpu.matmul %18, %19, %cst_11 {dimension_numbers = #tpu.dot_dimension_numbers<[1], [0], [0], [1], [0, 0, 1, 1], [], []>} : vector<32x128xbf16>, vector<128x512xbf16>, vector<32x512xf32> -> vector<32x512xf32>
    %21 = vector.extract_strided_slice %20 {offsets = [0, 0], sizes = [32, 256], strides = [1, 1]} : vector<32x512xf32> to vector<32x256xf32>
    %22 = vector.extract_strided_slice %20 {offsets = [0, 256], sizes = [32, 256], strides = [1, 1]} : vector<32x512xf32> to vector<32x256xf32>
    %23 = tpu.iota {dimensions = array<i32: 1>} : vector<2x16x256xi32>
    %24 = vector.shape_cast %23 : vector<2x16x256xi32> to vector<32x256xi32>
    %c0_12 = arith.constant 0 : index
    %c0_13 = arith.constant 0 : index
    %25 = vector.load %arg5[%c0_12, %c0_13] : memref<4x256xf32, #tpu.memory_space<vmem>>, vector<4x256xf32>
    %26 = vector.extract_strided_slice %25 {offsets = [3, 0], sizes = [1, 256], strides = [1, 1]} : vector<4x256xf32> to vector<1x256xf32>
    %27 = vector.broadcast %26 : vector<1x256xf32> to vector<32x256xf32>
    %28 = arith.mulf %21, %27 : vector<32x256xf32>
    %c1_i32 = arith.constant 1 : i32
    %29 = vector.broadcast %c1_i32 : i32 to vector<32x256xi32>
    %30 = arith.cmpi sge, %24, %29 : vector<32x256xi32>
    %c1_i32_14 = arith.constant 1 : i32
    %31 = tpu.dynamic_rotate %21 by %c1_i32_14 dim 0 : vector<32x256xf32>, i32 -> vector<32x256xf32>
    %cst_15 = arith.constant 0.000000e+00 : f32
    %32 = vector.broadcast %cst_15 : f32 to vector<32x256xf32>
    %33 = arith.select %30, %31, %32 : vector<32x256xi1>, vector<32x256xf32>
    %34 = vector.extract_strided_slice %25 {offsets = [2, 0], sizes = [1, 256], strides = [1, 1]} : vector<4x256xf32> to vector<1x256xf32>
    %35 = vector.broadcast %34 : vector<1x256xf32> to vector<32x256xf32>
    %36 = arith.mulf %33, %35 : vector<32x256xf32>
    %37 = arith.addf %28, %36 : vector<32x256xf32>
    %c2_i32 = arith.constant 2 : i32
    %38 = vector.broadcast %c2_i32 : i32 to vector<32x256xi32>
    %39 = arith.cmpi sge, %24, %38 : vector<32x256xi32>
    %c2_i32_16 = arith.constant 2 : i32
    %40 = tpu.dynamic_rotate %21 by %c2_i32_16 dim 0 : vector<32x256xf32>, i32 -> vector<32x256xf32>
    %cst_17 = arith.constant 0.000000e+00 : f32
    %41 = vector.broadcast %cst_17 : f32 to vector<32x256xf32>
    %42 = arith.select %39, %40, %41 : vector<32x256xi1>, vector<32x256xf32>
    %43 = vector.extract_strided_slice %25 {offsets = [1, 0], sizes = [1, 256], strides = [1, 1]} : vector<4x256xf32> to vector<1x256xf32>
    %44 = vector.broadcast %43 : vector<1x256xf32> to vector<32x256xf32>
    %45 = arith.mulf %42, %44 : vector<32x256xf32>
    %46 = arith.addf %37, %45 : vector<32x256xf32>
    %c3_i32 = arith.constant 3 : i32
    %47 = vector.broadcast %c3_i32 : i32 to vector<32x256xi32>
    %48 = arith.cmpi sge, %24, %47 : vector<32x256xi32>
    %c3_i32_18 = arith.constant 3 : i32
    %49 = tpu.dynamic_rotate %21 by %c3_i32_18 dim 0 : vector<32x256xf32>, i32 -> vector<32x256xf32>
    %cst_19 = arith.constant 0.000000e+00 : f32
    %50 = vector.broadcast %cst_19 : f32 to vector<32x256xf32>
    %51 = arith.select %48, %49, %50 : vector<32x256xi1>, vector<32x256xf32>
    %52 = vector.extract_strided_slice %25 {offsets = [0, 0], sizes = [1, 256], strides = [1, 1]} : vector<4x256xf32> to vector<1x256xf32>
    %53 = vector.broadcast %52 : vector<1x256xf32> to vector<32x256xf32>
    %54 = arith.mulf %51, %53 : vector<32x256xf32>
    %55 = arith.addf %46, %54 : vector<32x256xf32>
    %c0_20 = arith.constant 0 : index
    %c0_21 = arith.constant 0 : index
    %56 = vector.load %arg6[%c0_20, %c0_21] : memref<1x256xf32, #tpu.memory_space<vmem>>, vector<1x256xf32>
    %57 = vector.broadcast %56 : vector<1x256xf32> to vector<32x256xf32>
    %58 = arith.addf %55, %57 : vector<32x256xf32>
    %59 = arith.negf %58 : vector<32x256xf32>
    %60 = math.exp %59 : vector<32x256xf32>
    %cst_22 = arith.constant 1.000000e+00 : f32
    %61 = vector.broadcast %cst_22 : f32 to vector<32x256xf32>
    %62 = arith.addf %61, %60 : vector<32x256xf32>
    %63 = arith.divf %61, %62 : vector<32x256xf32>
    %64 = arith.mulf %58, %63 : vector<32x256xf32>
    %65 = arith.truncf %64 : vector<32x256xf32> to vector<32x256xbf16>
    %c0_23 = arith.constant 0 : index
    %c0_24 = arith.constant 0 : index
    %66 = vector.load %arg7[%c0_23, %c0_24] : memref<256x8xbf16, #tpu.memory_space<vmem>>, vector<256x8xbf16>
    %cst_25 = arith.constant dense<0.000000e+00> : vector<32x8xf32>
    %67 = tpu.matmul %65, %66, %cst_25 {dimension_numbers = #tpu.dot_dimension_numbers<[1], [0], [0], [1], [0, 0, 1, 1], [], []>} : vector<32x256xbf16>, vector<256x8xbf16>, vector<32x8xf32> -> vector<32x8xf32>
    %c0_26 = arith.constant 0 : index
    %c0_27 = arith.constant 0 : index
    %68 = vector.load %arg8[%c0_26, %c0_27] : memref<256x16xbf16, #tpu.memory_space<vmem>>, vector<256x16xbf16>
    %cst_28 = arith.constant dense<0.000000e+00> : vector<32x16xf32>
    %69 = tpu.matmul %65, %68, %cst_28 {dimension_numbers = #tpu.dot_dimension_numbers<[1], [0], [0], [1], [0, 0, 1, 1], [], []>} : vector<32x256xbf16>, vector<256x16xbf16>, vector<32x16xf32> -> vector<32x16xf32>
    %c0_29 = arith.constant 0 : index
    %c0_30 = arith.constant 0 : index
    %70 = vector.load %arg9[%c0_29, %c0_30] : memref<256x16xbf16, #tpu.memory_space<vmem>>, vector<256x16xbf16>
    %cst_31 = arith.constant dense<0.000000e+00> : vector<32x16xf32>
    %71 = tpu.matmul %65, %70, %cst_31 {dimension_numbers = #tpu.dot_dimension_numbers<[1], [0], [0], [1], [0, 0, 1, 1], [], []>} : vector<32x256xbf16>, vector<256x16xbf16>, vector<32x16xf32> -> vector<32x16xf32>
    %72 = arith.truncf %67 : vector<32x8xf32> to vector<32x8xbf16>
    %c0_32 = arith.constant 0 : index
    %c0_33 = arith.constant 0 : index
    %73 = vector.load %arg10[%c0_32, %c0_33] : memref<8x256xbf16, #tpu.memory_space<vmem>>, vector<8x256xbf16>
    %cst_34 = arith.constant dense<0.000000e+00> : vector<32x256xf32>
    %74 = tpu.matmul %72, %73, %cst_34 {dimension_numbers = #tpu.dot_dimension_numbers<[1], [0], [0], [1], [0, 0, 1, 1], [], []>} : vector<32x8xbf16>, vector<8x256xbf16>, vector<32x256xf32> -> vector<32x256xf32>
    %c0_35 = arith.constant 0 : index
    %c0_36 = arith.constant 0 : index
    %75 = vector.load %arg11[%c0_35, %c0_36] : memref<1x256xf32, #tpu.memory_space<vmem>>, vector<1x256xf32>
    %76 = vector.broadcast %75 : vector<1x256xf32> to vector<32x256xf32>
    %77 = arith.addf %74, %76 : vector<32x256xf32>
    %cst_37 = arith.constant 0.000000e+00 : f32
    %78 = vector.broadcast %cst_37 : f32 to vector<32x256xf32>
    %79 = arith.maximumf %77, %78 : vector<32x256xf32>
    %80 = vector.broadcast %cst_37 : f32 to vector<32x256xf32>
    %81 = arith.subf %77, %80 : vector<32x256xf32>
    %82 = arith.cmpf one, %81, %81 : vector<32x256xf32>
    %83 = vector.broadcast %cst_37 : f32 to vector<32x256xf32>
    %84 = arith.addf %77, %83 : vector<32x256xf32>
    %85 = math.absf %81 : vector<32x256xf32>
    %cst_38 = arith.constant 0.000000e+00 : f32
    %86 = vector.broadcast %cst_38 : f32 to vector<32x256xf32>
    %87 = arith.subf %86, %85 : vector<32x256xf32>
    %88 = math.exp %87 : vector<32x256xf32>
    %89 = math.log1p %88 : vector<32x256xf32>
    %90 = arith.addf %79, %89 : vector<32x256xf32>
    %91 = arith.select %82, %84, %90 : vector<32x256xi1>, vector<32x256xf32>
    %c0_39 = arith.constant 0 : index
    %c0_40 = arith.constant 0 : index
    %92 = vector.load %arg17[%c0_39, %c0_40] : memref<32x256xf32, #tpu.memory_space<vmem>>, vector<32x256xf32>
    tpu.vector_store %arg17[%c0_39, %c0_40], %91 {strides = array<i32>} : memref<32x256xf32, #tpu.memory_space<vmem>>, vector<32x256xf32>,
    %93 = arith.mulf %91, %64 : vector<32x256xf32>
    %c0_41 = arith.constant 0 : index
    %c0_42 = arith.constant 0 : index
    %94 = vector.load %arg18[%c0_41, %c0_42] : memref<32x256xf32, #tpu.memory_space<vmem>>, vector<32x256xf32>
    tpu.vector_store %arg18[%c0_41, %c0_42], %93 {strides = array<i32>} : memref<32x256xf32, #tpu.memory_space<vmem>>, vector<32x256xf32>,
    %c0_43 = arith.constant 0 : index
    %c0_44 = arith.constant 0 : index
    %95 = vector.load %arg19[%c0_43, %c0_44] : memref<32x16xf32, #tpu.memory_space<vmem>>, vector<32x16xf32>
    tpu.vector_store %arg19[%c0_43, %c0_44], %69 {strides = array<i32>} : memref<32x16xf32, #tpu.memory_space<vmem>>, vector<32x16xf32>,
    %c0_45 = arith.constant 0 : index
    %c0_46 = arith.constant 0 : index
    %96 = vector.load %arg20[%c0_45, %c0_46] : memref<32x16xf32, #tpu.memory_space<vmem>>, vector<32x16xf32>
    tpu.vector_store %arg20[%c0_45, %c0_46], %71 {strides = array<i32>} : memref<32x16xf32, #tpu.memory_space<vmem>>, vector<32x16xf32>,
    %c0_47 = arith.constant 0 : index
    %c0_48 = arith.constant 0 : index
    %97 = vector.load %arg12[%c0_47, %c0_48] : memref<16x256xf32, #tpu.memory_space<vmem>>, vector<16x256xf32>
    %cst_49 = arith.constant 0.000000e+00 : f32
    %98 = vector.broadcast %cst_49 : f32 to vector<16x256xf32>
    %c0_i32 = arith.constant 0 : i32
    %c2_i32_50 = arith.constant 2 : i32
    %99 = arith.addi %c0_i32, %c2_i32_50 : i32
    %c1_i32_51 = arith.constant 1 : i32
    %100 = scf.for %arg23 = %c0_i32 to %99 step %c1_i32_51 iter_args(%arg24 = %98) -> (vector<16x256xf32>)  : i32 {
      %c8_i32 = arith.constant 8 : i32
      %122 = arith.muli %arg23, %c8_i32 : i32
      %c0_i32_72 = arith.constant 0 : i32
      %123 = arith.addi %c0_i32_72, %122 : i32
      %124 = tpu.assume_multiple %123, 8 : i32
      %125 = arith.index_cast %124 : i32 to index
      %c0_73 = arith.constant 0 : index
      %126 = vector.load %arg17[%125, %c0_73] : memref<32x256xf32, #tpu.memory_space<vmem>>, vector<8x256xf32>
      %127 = arith.index_cast %124 : i32 to index
      %c0_74 = arith.constant 0 : index
      %128 = vector.load %arg18[%127, %c0_74] : memref<32x256xf32, #tpu.memory_space<vmem>>, vector<8x256xf32>
      %129 = arith.index_cast %124 : i32 to index
      %c0_75 = arith.constant 0 : index
      %130 = vector.load %arg19[%129, %c0_75] : memref<32x16xf32, #tpu.memory_space<vmem>>, vector<8x16xf32>
      %131 = arith.index_cast %124 : i32 to index
      %c0_76 = arith.constant 0 : index
      %132 = vector.load %arg20[%131, %c0_76] : memref<32x16xf32, #tpu.memory_space<vmem>>, vector<8x16xf32>
      %133 = vector.shape_cast %126 : vector<8x256xf32> to vector<8x1x256xf32>
      %134 = vector.shape_cast %97 : vector<16x256xf32> to vector<1x16x256xf32>
      %135 = vector.broadcast %133 : vector<8x1x256xf32> to vector<8x16x256xf32>
      %136 = vector.broadcast %134 : vector<1x16x256xf32> to vector<8x16x256xf32>
      %137 = arith.mulf %135, %136 : vector<8x16x256xf32>
      %138 = math.exp %137 : vector<8x16x256xf32>
      %139 = vector.shape_cast %128 : vector<8x256xf32> to vector<8x1x256xf32>
      %140 = vector.shape_cast %130 : vector<8x16xf32> to vector<8x16x1xf32>
      %141 = vector.broadcast %139 : vector<8x1x256xf32> to vector<8x16x256xf32>
      %142 = vector.broadcast %140 : vector<8x16x1xf32> to vector<8x16x256xf32>
      %143 = arith.mulf %141, %142 : vector<8x16x256xf32>
      %144 = vector.extract_strided_slice %138 {offsets = [0, 0, 0], sizes = [1, 16, 256], strides = [1, 1, 1]} : vector<8x16x256xf32> to vector<1x16x256xf32>
      %145 = vector.shape_cast %144 : vector<1x16x256xf32> to vector<16x256xf32>
      %146 = arith.mulf %145, %arg24 : vector<16x256xf32>
      %147 = vector.extract_strided_slice %143 {offsets = [0, 0, 0], sizes = [1, 16, 256], strides = [1, 1, 1]} : vector<8x16x256xf32> to vector<1x16x256xf32>
      %148 = vector.shape_cast %147 : vector<1x16x256xf32> to vector<16x256xf32>
      %149 = arith.addf %146, %148 : vector<16x256xf32>
      %c0_77 = arith.constant 0 : index
      %c0_78 = arith.constant 0 : index
      %c0_79 = arith.constant 0 : index
      %150 = vector.load %arg21[%c0_77, %c0_78, %c0_79] : memref<8x16x256xf32, #tpu.memory_space<vmem>>, vector<1x16x256xf32>
      %151 = vector.shape_cast %150 : vector<1x16x256xf32> to vector<16x256xf32>
      %152 = vector.shape_cast %149 : vector<16x256xf32> to vector<1x16x256xf32>
      tpu.vector_store %arg21[%c0_77, %c0_78, %c0_79], %152 {strides = array<i32>} : memref<8x16x256xf32, #tpu.memory_space<vmem>>, vector<1x16x256xf32>,
      %153 = vector.extract_strided_slice %138 {offsets = [1, 0, 0], sizes = [1, 16, 256], strides = [1, 1, 1]} : vector<8x16x256xf32> to vector<1x16x256xf32>
      %154 = vector.shape_cast %153 : vector<1x16x256xf32> to vector<16x256xf32>
      %155 = arith.mulf %154, %149 : vector<16x256xf32>
      %156 = vector.extract_strided_slice %143 {offsets = [1, 0, 0], sizes = [1, 16, 256], strides = [1, 1, 1]} : vector<8x16x256xf32> to vector<1x16x256xf32>
      %157 = vector.shape_cast %156 : vector<1x16x256xf32> to vector<16x256xf32>
      %158 = arith.addf %155, %157 : vector<16x256xf32>
      %c1 = arith.constant 1 : index
      %c0_80 = arith.constant 0 : index
      %c0_81 = arith.constant 0 : index
      %159 = vector.load %arg21[%c1, %c0_80, %c0_81] : memref<8x16x256xf32, #tpu.memory_space<vmem>>, vector<1x16x256xf32>
      %160 = vector.shape_cast %159 : vector<1x16x256xf32> to vector<16x256xf32>
      %161 = vector.shape_cast %158 : vector<16x256xf32> to vector<1x16x256xf32>
      tpu.vector_store %arg21[%c1, %c0_80, %c0_81], %161 {strides = array<i32>} : memref<8x16x256xf32, #tpu.memory_space<vmem>>, vector<1x16x256xf32>,
      %162 = vector.extract_strided_slice %138 {offsets = [2, 0, 0], sizes = [1, 16, 256], strides = [1, 1, 1]} : vector<8x16x256xf32> to vector<1x16x256xf32>
      %163 = vector.shape_cast %162 : vector<1x16x256xf32> to vector<16x256xf32>
      %164 = arith.mulf %163, %158 : vector<16x256xf32>
      %165 = vector.extract_strided_slice %143 {offsets = [2, 0, 0], sizes = [1, 16, 256], strides = [1, 1, 1]} : vector<8x16x256xf32> to vector<1x16x256xf32>
      %166 = vector.shape_cast %165 : vector<1x16x256xf32> to vector<16x256xf32>
      %167 = arith.addf %164, %166 : vector<16x256xf32>
      %c2 = arith.constant 2 : index
      %c0_82 = arith.constant 0 : index
      %c0_83 = arith.constant 0 : index
      %168 = vector.load %arg21[%c2, %c0_82, %c0_83] : memref<8x16x256xf32, #tpu.memory_space<vmem>>, vector<1x16x256xf32>
      %169 = vector.shape_cast %168 : vector<1x16x256xf32> to vector<16x256xf32>
      %170 = vector.shape_cast %167 : vector<16x256xf32> to vector<1x16x256xf32>
      tpu.vector_store %arg21[%c2, %c0_82, %c0_83], %170 {strides = array<i32>} : memref<8x16x256xf32, #tpu.memory_space<vmem>>, vector<1x16x256xf32>,
      %171 = vector.extract_strided_slice %138 {offsets = [3, 0, 0], sizes = [1, 16, 256], strides = [1, 1, 1]} : vector<8x16x256xf32> to vector<1x16x256xf32>
      %172 = vector.shape_cast %171 : vector<1x16x256xf32> to vector<16x256xf32>
      %173 = arith.mulf %172, %167 : vector<16x256xf32>
      %174 = vector.extract_strided_slice %143 {offsets = [3, 0, 0], sizes = [1, 16, 256], strides = [1, 1, 1]} : vector<8x16x256xf32> to vector<1x16x256xf32>
      %175 = vector.shape_cast %174 : vector<1x16x256xf32> to vector<16x256xf32>
      %176 = arith.addf %173, %175 : vector<16x256xf32>
      %c3 = arith.constant 3 : index
      %c0_84 = arith.constant 0 : index
      %c0_85 = arith.constant 0 : index
      %177 = vector.load %arg21[%c3, %c0_84, %c0_85] : memref<8x16x256xf32, #tpu.memory_space<vmem>>, vector<1x16x256xf32>
      %178 = vector.shape_cast %177 : vector<1x16x256xf32> to vector<16x256xf32>
      %179 = vector.shape_cast %176 : vector<16x256xf32> to vector<1x16x256xf32>
      tpu.vector_store %arg21[%c3, %c0_84, %c0_85], %179 {strides = array<i32>} : memref<8x16x256xf32, #tpu.memory_space<vmem>>, vector<1x16x256xf32>,
      %180 = vector.extract_strided_slice %138 {offsets = [4, 0, 0], sizes = [1, 16, 256], strides = [1, 1, 1]} : vector<8x16x256xf32> to vector<1x16x256xf32>
      %181 = vector.shape_cast %180 : vector<1x16x256xf32> to vector<16x256xf32>
      %182 = arith.mulf %181, %176 : vector<16x256xf32>
      %183 = vector.extract_strided_slice %143 {offsets = [4, 0, 0], sizes = [1, 16, 256], strides = [1, 1, 1]} : vector<8x16x256xf32> to vector<1x16x256xf32>
      %184 = vector.shape_cast %183 : vector<1x16x256xf32> to vector<16x256xf32>
      %185 = arith.addf %182, %184 : vector<16x256xf32>
      %c4 = arith.constant 4 : index
      %c0_86 = arith.constant 0 : index
      %c0_87 = arith.constant 0 : index
      %186 = vector.load %arg21[%c4, %c0_86, %c0_87] : memref<8x16x256xf32, #tpu.memory_space<vmem>>, vector<1x16x256xf32>
      %187 = vector.shape_cast %186 : vector<1x16x256xf32> to vector<16x256xf32>
      %188 = vector.shape_cast %185 : vector<16x256xf32> to vector<1x16x256xf32>
      tpu.vector_store %arg21[%c4, %c0_86, %c0_87], %188 {strides = array<i32>} : memref<8x16x256xf32, #tpu.memory_space<vmem>>, vector<1x16x256xf32>,
      %189 = vector.extract_strided_slice %138 {offsets = [5, 0, 0], sizes = [1, 16, 256], strides = [1, 1, 1]} : vector<8x16x256xf32> to vector<1x16x256xf32>
      %190 = vector.shape_cast %189 : vector<1x16x256xf32> to vector<16x256xf32>
      %191 = arith.mulf %190, %185 : vector<16x256xf32>
      %192 = vector.extract_strided_slice %143 {offsets = [5, 0, 0], sizes = [1, 16, 256], strides = [1, 1, 1]} : vector<8x16x256xf32> to vector<1x16x256xf32>
      %193 = vector.shape_cast %192 : vector<1x16x256xf32> to vector<16x256xf32>
      %194 = arith.addf %191, %193 : vector<16x256xf32>
      %c5 = arith.constant 5 : index
      %c0_88 = arith.constant 0 : index
      %c0_89 = arith.constant 0 : index
      %195 = vector.load %arg21[%c5, %c0_88, %c0_89] : memref<8x16x256xf32, #tpu.memory_space<vmem>>, vector<1x16x256xf32>
      %196 = vector.shape_cast %195 : vector<1x16x256xf32> to vector<16x256xf32>
      %197 = vector.shape_cast %194 : vector<16x256xf32> to vector<1x16x256xf32>
      tpu.vector_store %arg21[%c5, %c0_88, %c0_89], %197 {strides = array<i32>} : memref<8x16x256xf32, #tpu.memory_space<vmem>>, vector<1x16x256xf32>,
      %198 = vector.extract_strided_slice %138 {offsets = [6, 0, 0], sizes = [1, 16, 256], strides = [1, 1, 1]} : vector<8x16x256xf32> to vector<1x16x256xf32>
      %199 = vector.shape_cast %198 : vector<1x16x256xf32> to vector<16x256xf32>
      %200 = arith.mulf %199, %194 : vector<16x256xf32>
      %201 = vector.extract_strided_slice %143 {offsets = [6, 0, 0], sizes = [1, 16, 256], strides = [1, 1, 1]} : vector<8x16x256xf32> to vector<1x16x256xf32>
      %202 = vector.shape_cast %201 : vector<1x16x256xf32> to vector<16x256xf32>
      %203 = arith.addf %200, %202 : vector<16x256xf32>
      %c6 = arith.constant 6 : index
      %c0_90 = arith.constant 0 : index
      %c0_91 = arith.constant 0 : index
      %204 = vector.load %arg21[%c6, %c0_90, %c0_91] : memref<8x16x256xf32, #tpu.memory_space<vmem>>, vector<1x16x256xf32>
      %205 = vector.shape_cast %204 : vector<1x16x256xf32> to vector<16x256xf32>
      %206 = vector.shape_cast %203 : vector<16x256xf32> to vector<1x16x256xf32>
      tpu.vector_store %arg21[%c6, %c0_90, %c0_91], %206 {strides = array<i32>} : memref<8x16x256xf32, #tpu.memory_space<vmem>>, vector<1x16x256xf32>,
      %207 = vector.extract_strided_slice %138 {offsets = [7, 0, 0], sizes = [1, 16, 256], strides = [1, 1, 1]} : vector<8x16x256xf32> to vector<1x16x256xf32>
      %208 = vector.shape_cast %207 : vector<1x16x256xf32> to vector<16x256xf32>
      %209 = arith.mulf %208, %203 : vector<16x256xf32>
      %210 = vector.extract_strided_slice %143 {offsets = [7, 0, 0], sizes = [1, 16, 256], strides = [1, 1, 1]} : vector<8x16x256xf32> to vector<1x16x256xf32>
      %211 = vector.shape_cast %210 : vector<1x16x256xf32> to vector<16x256xf32>
      %212 = arith.addf %209, %211 : vector<16x256xf32>
      %c7 = arith.constant 7 : index
      %c0_92 = arith.constant 0 : index
      %c0_93 = arith.constant 0 : index
      %213 = vector.load %arg21[%c7, %c0_92, %c0_93] : memref<8x16x256xf32, #tpu.memory_space<vmem>>, vector<1x16x256xf32>
      %214 = vector.shape_cast %213 : vector<1x16x256xf32> to vector<16x256xf32>
      %215 = vector.shape_cast %212 : vector<16x256xf32> to vector<1x16x256xf32>
      tpu.vector_store %arg21[%c7, %c0_92, %c0_93], %215 {strides = array<i32>} : memref<8x16x256xf32, #tpu.memory_space<vmem>>, vector<1x16x256xf32>,
      %c0_94 = arith.constant 0 : index
      %c0_95 = arith.constant 0 : index
      %c0_96 = arith.constant 0 : index
      %216 = vector.load %arg21[%c0_94, %c0_95, %c0_96] : memref<8x16x256xf32, #tpu.memory_space<vmem>>, vector<8x16x256xf32>
      %217 = vector.shape_cast %132 : vector<8x16xf32> to vector<8x16x1xf32>
      %218 = vector.broadcast %217 : vector<8x16x1xf32> to vector<8x16x256xf32>
      %219 = arith.mulf %216, %218 : vector<8x16x256xf32>
      %cst_97 = arith.constant dense<0.000000e+00> : vector<8x256xf32>
      %220 = vector.multi_reduction <add>, %219, %cst_97 [1] : vector<8x16x256xf32> to vector<8x256xf32>
      %221 = arith.index_cast %124 : i32 to index
      %c0_98 = arith.constant 0 : index
      %222 = vector.load %arg22[%221, %c0_98] : memref<32x256xf32, #tpu.memory_space<vmem>>, vector<8x256xf32>
      tpu.vector_store %arg22[%221, %c0_98], %220 {strides = array<i32>} : memref<32x256xf32, #tpu.memory_space<vmem>>, vector<8x256xf32>,
      scf.yield %212 : vector<16x256xf32>
    }
    %c2_i32_52 = arith.constant 2 : i32
    %cst_53 = arith.constant 0.000000e+00 : f32
    %101 = vector.broadcast %cst_53 : f32 to vector<16x256xf32>
    %c0_i32_54 = arith.constant 0 : i32
    %c2_i32_55 = arith.constant 2 : i32
    %102 = arith.addi %c0_i32_54, %c2_i32_55 : i32
    %c1_i32_56 = arith.constant 1 : i32
    %103 = scf.for %arg23 = %c0_i32_54 to %102 step %c1_i32_56 iter_args(%arg24 = %101) -> (vector<16x256xf32>)  : i32 {
      %c8_i32 = arith.constant 8 : i32
      %122 = arith.muli %arg23, %c8_i32 : i32
      %c16_i32 = arith.constant 16 : i32
      %123 = arith.addi %c16_i32, %122 : i32
      %124 = tpu.assume_multiple %123, 8 : i32
      %125 = arith.index_cast %124 : i32 to index
      %c0_72 = arith.constant 0 : index
      %126 = vector.load %arg17[%125, %c0_72] : memref<32x256xf32, #tpu.memory_space<vmem>>, vector<8x256xf32>
      %127 = arith.index_cast %124 : i32 to index
      %c0_73 = arith.constant 0 : index
      %128 = vector.load %arg18[%127, %c0_73] : memref<32x256xf32, #tpu.memory_space<vmem>>, vector<8x256xf32>
      %129 = arith.index_cast %124 : i32 to index
      %c0_74 = arith.constant 0 : index
      %130 = vector.load %arg19[%129, %c0_74] : memref<32x16xf32, #tpu.memory_space<vmem>>, vector<8x16xf32>
      %131 = arith.index_cast %124 : i32 to index
      %c0_75 = arith.constant 0 : index
      %132 = vector.load %arg20[%131, %c0_75] : memref<32x16xf32, #tpu.memory_space<vmem>>, vector<8x16xf32>
      %133 = vector.shape_cast %126 : vector<8x256xf32> to vector<8x1x256xf32>
      %134 = vector.shape_cast %97 : vector<16x256xf32> to vector<1x16x256xf32>
      %135 = vector.broadcast %133 : vector<8x1x256xf32> to vector<8x16x256xf32>
      %136 = vector.broadcast %134 : vector<1x16x256xf32> to vector<8x16x256xf32>
      %137 = arith.mulf %135, %136 : vector<8x16x256xf32>
      %138 = math.exp %137 : vector<8x16x256xf32>
      %139 = vector.shape_cast %128 : vector<8x256xf32> to vector<8x1x256xf32>
      %140 = vector.shape_cast %130 : vector<8x16xf32> to vector<8x16x1xf32>
      %141 = vector.broadcast %139 : vector<8x1x256xf32> to vector<8x16x256xf32>
      %142 = vector.broadcast %140 : vector<8x16x1xf32> to vector<8x16x256xf32>
      %143 = arith.mulf %141, %142 : vector<8x16x256xf32>
      %144 = vector.extract_strided_slice %138 {offsets = [0, 0, 0], sizes = [1, 16, 256], strides = [1, 1, 1]} : vector<8x16x256xf32> to vector<1x16x256xf32>
      %145 = vector.shape_cast %144 : vector<1x16x256xf32> to vector<16x256xf32>
      %146 = arith.mulf %145, %arg24 : vector<16x256xf32>
      %147 = vector.extract_strided_slice %143 {offsets = [0, 0, 0], sizes = [1, 16, 256], strides = [1, 1, 1]} : vector<8x16x256xf32> to vector<1x16x256xf32>
      %148 = vector.shape_cast %147 : vector<1x16x256xf32> to vector<16x256xf32>
      %149 = arith.addf %146, %148 : vector<16x256xf32>
      %c0_76 = arith.constant 0 : index
      %c0_77 = arith.constant 0 : index
      %c0_78 = arith.constant 0 : index
      %150 = vector.load %arg21[%c0_76, %c0_77, %c0_78] : memref<8x16x256xf32, #tpu.memory_space<vmem>>, vector<1x16x256xf32>
      %151 = vector.shape_cast %150 : vector<1x16x256xf32> to vector<16x256xf32>
      %152 = vector.shape_cast %149 : vector<16x256xf32> to vector<1x16x256xf32>
      tpu.vector_store %arg21[%c0_76, %c0_77, %c0_78], %152 {strides = array<i32>} : memref<8x16x256xf32, #tpu.memory_space<vmem>>, vector<1x16x256xf32>,
      %153 = vector.extract_strided_slice %138 {offsets = [1, 0, 0], sizes = [1, 16, 256], strides = [1, 1, 1]} : vector<8x16x256xf32> to vector<1x16x256xf32>
      %154 = vector.shape_cast %153 : vector<1x16x256xf32> to vector<16x256xf32>
      %155 = arith.mulf %154, %149 : vector<16x256xf32>
      %156 = vector.extract_strided_slice %143 {offsets = [1, 0, 0], sizes = [1, 16, 256], strides = [1, 1, 1]} : vector<8x16x256xf32> to vector<1x16x256xf32>
      %157 = vector.shape_cast %156 : vector<1x16x256xf32> to vector<16x256xf32>
      %158 = arith.addf %155, %157 : vector<16x256xf32>
      %c1 = arith.constant 1 : index
      %c0_79 = arith.constant 0 : index
      %c0_80 = arith.constant 0 : index
      %159 = vector.load %arg21[%c1, %c0_79, %c0_80] : memref<8x16x256xf32, #tpu.memory_space<vmem>>, vector<1x16x256xf32>
      %160 = vector.shape_cast %159 : vector<1x16x256xf32> to vector<16x256xf32>
      %161 = vector.shape_cast %158 : vector<16x256xf32> to vector<1x16x256xf32>
      tpu.vector_store %arg21[%c1, %c0_79, %c0_80], %161 {strides = array<i32>} : memref<8x16x256xf32, #tpu.memory_space<vmem>>, vector<1x16x256xf32>,
      %162 = vector.extract_strided_slice %138 {offsets = [2, 0, 0], sizes = [1, 16, 256], strides = [1, 1, 1]} : vector<8x16x256xf32> to vector<1x16x256xf32>
      %163 = vector.shape_cast %162 : vector<1x16x256xf32> to vector<16x256xf32>
      %164 = arith.mulf %163, %158 : vector<16x256xf32>
      %165 = vector.extract_strided_slice %143 {offsets = [2, 0, 0], sizes = [1, 16, 256], strides = [1, 1, 1]} : vector<8x16x256xf32> to vector<1x16x256xf32>
      %166 = vector.shape_cast %165 : vector<1x16x256xf32> to vector<16x256xf32>
      %167 = arith.addf %164, %166 : vector<16x256xf32>
      %c2 = arith.constant 2 : index
      %c0_81 = arith.constant 0 : index
      %c0_82 = arith.constant 0 : index
      %168 = vector.load %arg21[%c2, %c0_81, %c0_82] : memref<8x16x256xf32, #tpu.memory_space<vmem>>, vector<1x16x256xf32>
      %169 = vector.shape_cast %168 : vector<1x16x256xf32> to vector<16x256xf32>
      %170 = vector.shape_cast %167 : vector<16x256xf32> to vector<1x16x256xf32>
      tpu.vector_store %arg21[%c2, %c0_81, %c0_82], %170 {strides = array<i32>} : memref<8x16x256xf32, #tpu.memory_space<vmem>>, vector<1x16x256xf32>,
      %171 = vector.extract_strided_slice %138 {offsets = [3, 0, 0], sizes = [1, 16, 256], strides = [1, 1, 1]} : vector<8x16x256xf32> to vector<1x16x256xf32>
      %172 = vector.shape_cast %171 : vector<1x16x256xf32> to vector<16x256xf32>
      %173 = arith.mulf %172, %167 : vector<16x256xf32>
      %174 = vector.extract_strided_slice %143 {offsets = [3, 0, 0], sizes = [1, 16, 256], strides = [1, 1, 1]} : vector<8x16x256xf32> to vector<1x16x256xf32>
      %175 = vector.shape_cast %174 : vector<1x16x256xf32> to vector<16x256xf32>
      %176 = arith.addf %173, %175 : vector<16x256xf32>
      %c3 = arith.constant 3 : index
      %c0_83 = arith.constant 0 : index
      %c0_84 = arith.constant 0 : index
      %177 = vector.load %arg21[%c3, %c0_83, %c0_84] : memref<8x16x256xf32, #tpu.memory_space<vmem>>, vector<1x16x256xf32>
      %178 = vector.shape_cast %177 : vector<1x16x256xf32> to vector<16x256xf32>
      %179 = vector.shape_cast %176 : vector<16x256xf32> to vector<1x16x256xf32>
      tpu.vector_store %arg21[%c3, %c0_83, %c0_84], %179 {strides = array<i32>} : memref<8x16x256xf32, #tpu.memory_space<vmem>>, vector<1x16x256xf32>,
      %180 = vector.extract_strided_slice %138 {offsets = [4, 0, 0], sizes = [1, 16, 256], strides = [1, 1, 1]} : vector<8x16x256xf32> to vector<1x16x256xf32>
      %181 = vector.shape_cast %180 : vector<1x16x256xf32> to vector<16x256xf32>
      %182 = arith.mulf %181, %176 : vector<16x256xf32>
      %183 = vector.extract_strided_slice %143 {offsets = [4, 0, 0], sizes = [1, 16, 256], strides = [1, 1, 1]} : vector<8x16x256xf32> to vector<1x16x256xf32>
      %184 = vector.shape_cast %183 : vector<1x16x256xf32> to vector<16x256xf32>
      %185 = arith.addf %182, %184 : vector<16x256xf32>
      %c4 = arith.constant 4 : index
      %c0_85 = arith.constant 0 : index
      %c0_86 = arith.constant 0 : index
      %186 = vector.load %arg21[%c4, %c0_85, %c0_86] : memref<8x16x256xf32, #tpu.memory_space<vmem>>, vector<1x16x256xf32>
      %187 = vector.shape_cast %186 : vector<1x16x256xf32> to vector<16x256xf32>
      %188 = vector.shape_cast %185 : vector<16x256xf32> to vector<1x16x256xf32>
      tpu.vector_store %arg21[%c4, %c0_85, %c0_86], %188 {strides = array<i32>} : memref<8x16x256xf32, #tpu.memory_space<vmem>>, vector<1x16x256xf32>,
      %189 = vector.extract_strided_slice %138 {offsets = [5, 0, 0], sizes = [1, 16, 256], strides = [1, 1, 1]} : vector<8x16x256xf32> to vector<1x16x256xf32>
      %190 = vector.shape_cast %189 : vector<1x16x256xf32> to vector<16x256xf32>
      %191 = arith.mulf %190, %185 : vector<16x256xf32>
      %192 = vector.extract_strided_slice %143 {offsets = [5, 0, 0], sizes = [1, 16, 256], strides = [1, 1, 1]} : vector<8x16x256xf32> to vector<1x16x256xf32>
      %193 = vector.shape_cast %192 : vector<1x16x256xf32> to vector<16x256xf32>
      %194 = arith.addf %191, %193 : vector<16x256xf32>
      %c5 = arith.constant 5 : index
      %c0_87 = arith.constant 0 : index
      %c0_88 = arith.constant 0 : index
      %195 = vector.load %arg21[%c5, %c0_87, %c0_88] : memref<8x16x256xf32, #tpu.memory_space<vmem>>, vector<1x16x256xf32>
      %196 = vector.shape_cast %195 : vector<1x16x256xf32> to vector<16x256xf32>
      %197 = vector.shape_cast %194 : vector<16x256xf32> to vector<1x16x256xf32>
      tpu.vector_store %arg21[%c5, %c0_87, %c0_88], %197 {strides = array<i32>} : memref<8x16x256xf32, #tpu.memory_space<vmem>>, vector<1x16x256xf32>,
      %198 = vector.extract_strided_slice %138 {offsets = [6, 0, 0], sizes = [1, 16, 256], strides = [1, 1, 1]} : vector<8x16x256xf32> to vector<1x16x256xf32>
      %199 = vector.shape_cast %198 : vector<1x16x256xf32> to vector<16x256xf32>
      %200 = arith.mulf %199, %194 : vector<16x256xf32>
      %201 = vector.extract_strided_slice %143 {offsets = [6, 0, 0], sizes = [1, 16, 256], strides = [1, 1, 1]} : vector<8x16x256xf32> to vector<1x16x256xf32>
      %202 = vector.shape_cast %201 : vector<1x16x256xf32> to vector<16x256xf32>
      %203 = arith.addf %200, %202 : vector<16x256xf32>
      %c6 = arith.constant 6 : index
      %c0_89 = arith.constant 0 : index
      %c0_90 = arith.constant 0 : index
      %204 = vector.load %arg21[%c6, %c0_89, %c0_90] : memref<8x16x256xf32, #tpu.memory_space<vmem>>, vector<1x16x256xf32>
      %205 = vector.shape_cast %204 : vector<1x16x256xf32> to vector<16x256xf32>
      %206 = vector.shape_cast %203 : vector<16x256xf32> to vector<1x16x256xf32>
      tpu.vector_store %arg21[%c6, %c0_89, %c0_90], %206 {strides = array<i32>} : memref<8x16x256xf32, #tpu.memory_space<vmem>>, vector<1x16x256xf32>,
      %207 = vector.extract_strided_slice %138 {offsets = [7, 0, 0], sizes = [1, 16, 256], strides = [1, 1, 1]} : vector<8x16x256xf32> to vector<1x16x256xf32>
      %208 = vector.shape_cast %207 : vector<1x16x256xf32> to vector<16x256xf32>
      %209 = arith.mulf %208, %203 : vector<16x256xf32>
      %210 = vector.extract_strided_slice %143 {offsets = [7, 0, 0], sizes = [1, 16, 256], strides = [1, 1, 1]} : vector<8x16x256xf32> to vector<1x16x256xf32>
      %211 = vector.shape_cast %210 : vector<1x16x256xf32> to vector<16x256xf32>
      %212 = arith.addf %209, %211 : vector<16x256xf32>
      %c7 = arith.constant 7 : index
      %c0_91 = arith.constant 0 : index
      %c0_92 = arith.constant 0 : index
      %213 = vector.load %arg21[%c7, %c0_91, %c0_92] : memref<8x16x256xf32, #tpu.memory_space<vmem>>, vector<1x16x256xf32>
      %214 = vector.shape_cast %213 : vector<1x16x256xf32> to vector<16x256xf32>
      %215 = vector.shape_cast %212 : vector<16x256xf32> to vector<1x16x256xf32>
      tpu.vector_store %arg21[%c7, %c0_91, %c0_92], %215 {strides = array<i32>} : memref<8x16x256xf32, #tpu.memory_space<vmem>>, vector<1x16x256xf32>,
      %c0_93 = arith.constant 0 : index
      %c0_94 = arith.constant 0 : index
      %c0_95 = arith.constant 0 : index
      %216 = vector.load %arg21[%c0_93, %c0_94, %c0_95] : memref<8x16x256xf32, #tpu.memory_space<vmem>>, vector<8x16x256xf32>
      %217 = vector.shape_cast %132 : vector<8x16xf32> to vector<8x16x1xf32>
      %218 = vector.broadcast %217 : vector<8x16x1xf32> to vector<8x16x256xf32>
      %219 = arith.mulf %216, %218 : vector<8x16x256xf32>
      %cst_96 = arith.constant dense<0.000000e+00> : vector<8x256xf32>
      %220 = vector.multi_reduction <add>, %219, %cst_96 [1] : vector<8x16x256xf32> to vector<8x256xf32>
      %221 = arith.index_cast %124 : i32 to index
      %c0_97 = arith.constant 0 : index
      %222 = vector.load %arg22[%221, %c0_97] : memref<32x256xf32, #tpu.memory_space<vmem>>, vector<8x256xf32>
      tpu.vector_store %arg22[%221, %c0_97], %220 {strides = array<i32>} : memref<32x256xf32, #tpu.memory_space<vmem>>, vector<8x256xf32>,
      scf.yield %212 : vector<16x256xf32>
    }
    %c2_i32_57 = arith.constant 2 : i32
    %c0_58 = arith.constant 0 : index
    %c0_59 = arith.constant 0 : index
    %104 = vector.load %arg22[%c0_58, %c0_59] : memref<32x256xf32, #tpu.memory_space<vmem>>, vector<32x256xf32>
    %c0_60 = arith.constant 0 : index
    %c0_61 = arith.constant 0 : index
    %105 = vector.load %arg13[%c0_60, %c0_61] : memref<1x256xf32, #tpu.memory_space<vmem>>, vector<1x256xf32>
    %106 = vector.broadcast %105 : vector<1x256xf32> to vector<32x256xf32>
    %107 = arith.mulf %106, %64 : vector<32x256xf32>
    %108 = arith.addf %104, %107 : vector<32x256xf32>
    %109 = arith.negf %22 : vector<32x256xf32>
    %110 = math.exp %109 : vector<32x256xf32>
    %cst_62 = arith.constant 1.000000e+00 : f32
    %111 = vector.broadcast %cst_62 : f32 to vector<32x256xf32>
    %112 = arith.addf %111, %110 : vector<32x256xf32>
    %113 = arith.divf %111, %112 : vector<32x256xf32>
    %114 = arith.mulf %22, %113 : vector<32x256xf32>
    %115 = arith.mulf %108, %114 : vector<32x256xf32>
    %116 = arith.truncf %115 : vector<32x256xf32> to vector<32x256xbf16>
    %c0_63 = arith.constant 0 : index
    %c0_64 = arith.constant 0 : index
    %117 = vector.load %arg14[%c0_63, %c0_64] : memref<256x128xbf16, #tpu.memory_space<vmem>>, vector<256x128xbf16>
    %cst_65 = arith.constant dense<0.000000e+00> : vector<32x128xf32>
    %118 = tpu.matmul %116, %117, %cst_65 {dimension_numbers = #tpu.dot_dimension_numbers<[1], [0], [0], [1], [0, 0, 1, 1], [], []>} : vector<32x256xbf16>, vector<256x128xbf16>, vector<32x128xf32> -> vector<32x128xf32>
    %119 = vector.shape_cast %118 : vector<32x128xf32> to vector<2x16x128xf32>
    %c0_66 = arith.constant 0 : index
    %c0_67 = arith.constant 0 : index
    %c0_68 = arith.constant 0 : index
    %120 = vector.load %arg15[%c0_66, %c0_67, %c0_68] : memref<2x16x128xf32, #tpu.memory_space<vmem>>, vector<2x16x128xf32>
    tpu.vector_store %arg15[%c0_66, %c0_67, %c0_68], %119 {strides = array<i32>} : memref<2x16x128xf32, #tpu.memory_space<vmem>>, vector<2x16x128xf32>,
    %c0_69 = arith.constant 0 : index
    %c0_70 = arith.constant 0 : index
    %c0_71 = arith.constant 0 : index
    %121 = vector.load %arg16[%c0_69, %c0_70, %c0_71] : memref<2x16x128xf32, #tpu.memory_space<vmem>>, vector<2x16x128xf32>
    tpu.vector_store %arg16[%c0_69, %c0_70, %c0_71], %2 {strides = array<i32>} : memref<2x16x128xf32, #tpu.memory_space<vmem>>, vector<2x16x128xf32>,
    return
  }
  func.func @transform_0(%arg0: i32) -> (i32, i32, i32) {
    %c0_i32 = arith.constant 0 : i32
    %c0_i32_0 = arith.constant 0 : i32
    %c0_i32_1 = arith.constant 0 : i32
    return %arg0, %c0_i32, %c0_i32_0 : i32, i32, i32
  }
  func.func @transform_1(%arg0: i32) -> (i32, i32, i32) {
    %c0_i32 = arith.constant 0 : i32
    %c0_i32_0 = arith.constant 0 : i32
    %c0_i32_1 = arith.constant 0 : i32
    return %arg0, %c0_i32, %c0_i32_0 : i32, i32, i32
  }
  func.func @transform_2(%arg0: i32) -> (i32, i32) {
    %c0_i32 = arith.constant 0 : i32
    %c0_i32_0 = arith.constant 0 : i32
    %c0_i32_1 = arith.constant 0 : i32
    return %c0_i32, %c0_i32_0 : i32, i32
  }
  func.func @transform_3(%arg0: i32) -> (i32, i32) {
    %c0_i32 = arith.constant 0 : i32
    %c0_i32_0 = arith.constant 0 : i32
    %c0_i32_1 = arith.constant 0 : i32
    return %c0_i32, %c0_i32_0 : i32, i32
  }
  func.func @transform_4(%arg0: i32) -> (i32, i32) {
    %c0_i32 = arith.constant 0 : i32
    %c0_i32_0 = arith.constant 0 : i32
    %c0_i32_1 = arith.constant 0 : i32
    return %c0_i32, %c0_i32_0 : i32, i32
  }
  func.func @transform_5(%arg0: i32) -> (i32, i32) {
    %c0_i32 = arith.constant 0 : i32
    %c0_i32_0 = arith.constant 0 : i32
    %c0_i32_1 = arith.constant 0 : i32
    return %c0_i32, %c0_i32_0 : i32, i32
  }
  func.func @transform_6(%arg0: i32) -> (i32, i32) {
    %c0_i32 = arith.constant 0 : i32
    %c0_i32_0 = arith.constant 0 : i32
    %c0_i32_1 = arith.constant 0 : i32
    return %c0_i32, %c0_i32_0 : i32, i32
  }
  func.func @transform_7(%arg0: i32) -> (i32, i32) {
    %c0_i32 = arith.constant 0 : i32
    %c0_i32_0 = arith.constant 0 : i32
    %c0_i32_1 = arith.constant 0 : i32
    return %c0_i32, %c0_i32_0 : i32, i32
  }
  func.func @transform_8(%arg0: i32) -> (i32, i32) {
    %c0_i32 = arith.constant 0 : i32
    %c0_i32_0 = arith.constant 0 : i32
    %c0_i32_1 = arith.constant 0 : i32
    return %c0_i32, %c0_i32_0 : i32, i32
  }
  func.func @transform_9(%arg0: i32) -> (i32, i32) {
    %c0_i32 = arith.constant 0 : i32
    %c0_i32_0 = arith.constant 0 : i32
    %c0_i32_1 = arith.constant 0 : i32
    return %c0_i32, %c0_i32_0 : i32, i32
  }
  func.func @transform_10(%arg0: i32) -> (i32, i32) {
    %c0_i32 = arith.constant 0 : i32
    %c0_i32_0 = arith.constant 0 : i32
    %c0_i32_1 = arith.constant 0 : i32
    return %c0_i32, %c0_i32_0 : i32, i32
  }
  func.func @transform_11(%arg0: i32) -> (i32, i32) {
    %c0_i32 = arith.constant 0 : i32
    %c0_i32_0 = arith.constant 0 : i32
    %c0_i32_1 = arith.constant 0 : i32
    return %c0_i32, %c0_i32_0 : i32, i32
  }
  func.func @transform_12(%arg0: i32) -> (i32, i32) {
    %c0_i32 = arith.constant 0 : i32
    %c0_i32_0 = arith.constant 0 : i32
    %c0_i32_1 = arith.constant 0 : i32
    return %c0_i32, %c0_i32_0 : i32, i32
  }
  func.func @transform_13(%arg0: i32) -> (i32, i32) {
    %c0_i32 = arith.constant 0 : i32
    %c0_i32_0 = arith.constant 0 : i32
    %c0_i32_1 = arith.constant 0 : i32
    return %c0_i32, %c0_i32_0 : i32, i32
  }
  func.func @transform_14(%arg0: i32) -> (i32, i32, i32) {
    %c0_i32 = arith.constant 0 : i32
    %c0_i32_0 = arith.constant 0 : i32
    %c0_i32_1 = arith.constant 0 : i32
    return %arg0, %c0_i32, %c0_i32_0 : i32, i32, i32
  }
  func.func @transform_15(%arg0: i32) -> (i32, i32, i32) {
    %c0_i32 = arith.constant 0 : i32
    %c0_i32_0 = arith.constant 0 : i32
    %c0_i32_1 = arith.constant 0 : i32
    return %arg0, %c0_i32, %c0_i32_0 : i32, i32, i32
  }
}

</mosaic_0001>

<llo_original>
// kernel: tpu_custom_call.1
$region0: #{tpu_custom_call.1}
  #allocation0 [shape = 'u32[]', space=smem, size = 0x4, offset = 0x4, fixed_abs, tag = 'smem constant byte address 0x4 - core index']
  #allocation1 [shape = 'u32[144,128]{1,0:T(1,128)}', space=vmem, size = 0x12000, scoped, tag = 'internal scratch']
  #allocation2 [shape = 'f32[32,256]{1,0:T(8,128)}', space=vmem, size = 0x8000, scoped, tag = 'scratch operand']
  #allocation3 [shape = 'f32[32,256]{1,0:T(8,128)}', space=vmem, size = 0x8000, scoped, tag = 'scratch operand']
  #allocation4 [shape = 'f32[32,16]{1,0:T(8,128)}', space=vmem, size = 0x4000, scoped, tag = 'scratch operand']
  #allocation5 [shape = 'f32[32,16]{1,0:T(8,128)}', space=vmem, size = 0x4000, scoped, tag = 'scratch operand']
  #allocation6 [shape = 'f32[8,16,256]{2,1,0:T(8,128)}', space=vmem, size = 0x20000, scoped, tag = 'scratch operand']
  #allocation7 [shape = 'f32[32,256]{1,0:T(8,128)}', space=vmem, size = 0x8000, scoped, tag = 'scratch operand']
  %s0 = inlined_call_operand.hbm [shape: f32[4,16,128], index: 0, kind: input, shape index: {}, may-alias: {0,14}]
  %s1 = inlined_call_operand.hbm [shape: f32[4,16,128], index: 1, kind: input, shape index: {}, may-alias: {1,15}]
  %s2 = inlined_call_operand.vmem [shape: f32[1,128], index: 2, kind: input, shape index: {}]
  %s3 = inlined_call_operand.vmem [shape: bf16[128,512], index: 3, kind: input, shape index: {}]
  %s4 = inlined_call_operand.vmem [shape: f32[4,256], index: 4, kind: input, shape index: {}]
  %s5 = inlined_call_operand.vmem [shape: f32[1,256], index: 5, kind: input, shape index: {}]
  %s6 = inlined_call_operand.vmem [shape: bf16[256,8], index: 6, kind: input, shape index: {}]
  %s7 = inlined_call_operand.vmem [shape: bf16[256,16], index: 7, kind: input, shape index: {}]
  %s8 = inlined_call_operand.vmem [shape: bf16[256,16], index: 8, kind: input, shape index: {}]
  %s9 = inlined_call_operand.vmem [shape: bf16[8,256], index: 9, kind: input, shape index: {}]
  %s10 = inlined_call_operand.vmem [shape: f32[1,256], index: 10, kind: input, shape index: {}]
  %s11 = inlined_call_operand.vmem [shape: f32[16,256], index: 11, kind: input, shape index: {}]
  %s12 = inlined_call_operand.vmem [shape: f32[1,256], index: 12, kind: input, shape index: {}]
  %s13 = inlined_call_operand.vmem [shape: bf16[256,128], index: 13, kind: input, shape index: {}]
  %s14 = inlined_call_operand.hbm [shape: f32[4,16,128], index: 14, kind: output, shape index: {0}, may-alias: {0,14}]
  %s15 = inlined_call_operand.hbm [shape: f32[4,16,128], index: 15, kind: output, shape index: {1}, may-alias: {1,15}]
  %16 = xla_tuple %s14, %s15
  %s17 = sld [smem:[#allocation0]]
  $region119: #{tpu_custom_call.1} parent=0
    _
  %s19 = ssub.s32 1, %s17
  %s20 = scalar_select 0, %s19, %s17
  $region1: #{tpu_custom_call.1} parent=0
    #allocation8 [shape = 'u8[32768]{0}', space=vmem, size = 0x8000, scoped, tag = 'input window, operand 0']
    #allocation9 [shape = 's32[2]{0}', space=sflag, size = 0x8, scoped, tag = 'scoped memory for tpu_custom_call.1']
    #allocation10 [shape = 's32[2]{0}', space=sflag, size = 0x8, scoped, tag = 'scoped memory for tpu_custom_call.1']
    #allocation11 [shape = 'u8[32768]{0}', space=vmem, size = 0x8000, scoped, tag = 'input window, operand 1']
    #allocation12 [shape = 's32[2]{0}', space=sflag, size = 0x8, scoped, tag = 'scoped memory for tpu_custom_call.1']
    #allocation13 [shape = 'u8[32768]{0}', space=vmem, size = 0x8000, scoped, tag = 'output window, operand 0']
    #allocation14 [shape = 'u8[32768]{0}', space=vmem, size = 0x8000, scoped, tag = 'output window, operand 1']
    #allocation15 [shape = 's32[2]{0}', space=sflag, size = 0x8, scoped, tag = 'scoped memory for tpu_custom_call.1']
    %21 = vsyncpa [#allocation9], 0
    %s22 = scalar_lea.sflag [#allocation9], 1
    %23 = vsyncpa %s22, 0
    %24 = vsyncpa [#allocation12], 0
    %s25 = scalar_lea.sflag [#allocation12], 1
    %26 = vsyncpa %s25, 0
    %27 = vsyncpa [#allocation10], 0
    %s28 = scalar_lea.sflag [#allocation10], 1
    %29 = vsyncpa %s28, 0
    %30 = vsyncpa [#allocation15], 0
    %s31 = scalar_lea.sflag [#allocation15], 1
    %32 = vsyncpa %s31, 0
    loop: start=0, step=1, limit=4
    $region2: #{tpu_custom_call.1} parent=1 // loop_pre_header
      _
    $region3: #{tpu_custom_call.1} parent=1 // loop_header
      %s34 = sphi 0, %s38
      %p35 = scmp.ge.s32.totalorder %s34, 4
      %s44 = sphi 0, %s46
      %s47 = sphi 0, %s44
      %s48 = sphi 0, %s47
      %s64 = sphi 0, %s48
      %s70 = sphi 0, %s72
      %s73 = sphi 0, %s70
      %s74 = sphi 0, %s73
      %s90 = sphi 0, %s74
      %s94 = sphi 0, %s94
      %s96 = sphi 0, %s94
      %s97 = sphi 0, %s96
      %s111 = sphi 0, %s97
      %s115 = sphi 0, %s115
      %s117 = sphi 0, %s115
      %s118 = sphi 0, %s117
      %s132 = sphi 0, %s118
      %s136 = sphi 0, %s136
      %s138 = sphi 0, %s136
      %s139 = sphi 0, %s138
      %s153 = sphi 0, %s139
      %s157 = sphi 0, %s157
      %s159 = sphi 0, %s157
      %s160 = sphi 0, %s159
      %s174 = sphi 0, %s160
      %s178 = sphi 0, %s178
      %s180 = sphi 0, %s178
      %s181 = sphi 0, %s180
      %s195 = sphi 0, %s181
      %s199 = sphi 0, %s199
      %s201 = sphi 0, %s199
      %s202 = sphi 0, %s201
      %s216 = sphi 0, %s202
      %s220 = sphi 0, %s220
      %s222 = sphi 0, %s220
      %s223 = sphi 0, %s222
      %s237 = sphi 0, %s223
      %s241 = sphi 0, %s241
      %s243 = sphi 0, %s241
      %s244 = sphi 0, %s243
      %s258 = sphi 0, %s244
      %s262 = sphi 0, %s262
      %s264 = sphi 0, %s262
      %s265 = sphi 0, %s264
      %s279 = sphi 0, %s265
      %s283 = sphi 0, %s283
      %s285 = sphi 0, %s283
      %s286 = sphi 0, %s285
      %s300 = sphi 0, %s286
      %s304 = sphi 0, %s304
      %s306 = sphi 0, %s304
      %s307 = sphi 0, %s306
      %s321 = sphi 0, %s307
      %s325 = sphi 0, %s325
      %s327 = sphi 0, %s325
      %s328 = sphi 0, %s327
      %s342 = sphi 0, %s328
      %s348 = sphi 0, %s350
      %s351 = sphi 0, %s348
      %s352 = sphi 0, %s351
      %s368 = sphi 0, %s352
      %s374 = sphi 0, %s376
      %s377 = sphi 0, %s374
      %s378 = sphi 0, %s377
      %s394 = sphi 0, %s378
    $region4: #{tpu_custom_call.1} parent=1 // loop_header_branch
      %37 = sbr.rel (%p35) target = $region8
    $region5: #{tpu_custom_call.1} parent=1 // loop_body
      %s39 = ssub.s32 %s34, 1
      %s40 = ssub.s32 %s34, 2
      %s41 = sadd.s32 %s34, 1
      %s42 = ssub.s32 %s34, %s41
      %p43 = scmp.eq.s32.totalorder %s42, 0
      %s45 = sadd.s32 %s44, 1
      %s46 = scalar_select %p43, %s44, %s45
      %p49 = pneg %p43
      %p50 = scmp.eq.s32.totalorder %s34, 1
      %p51 = por %p49, %p50
      %p52 = scmp.ne.s32.totalorder %s44, %s47
      %p53 = scmp.eq.s32.totalorder %s34, 0
      %p54 = por %p52, %p53
      %p55 = scmp.ne.s32.totalorder %s44, %s47
      %p56 = scmp.eq.s32.totalorder %s39, 1
      %p57 = por %p55, %p56
      %p58 = scmp.ne.s32.totalorder %s47, %s48
      %p59 = scmp.eq.s32.totalorder %s39, 0
      %p60 = por %p58, %p59
      %p61 = scmp.ne.s32.totalorder %s47, %s48
      %p62 = scmp.eq.s32.totalorder %s40, 1
      %p63 = por %p61, %p62
      %p65 = scmp.ne.s32.totalorder %s48, %s64
      %p66 = scmp.eq.s32.totalorder %s40, 0
      %p67 = por %p65, %p66
      %s68 = ssub.s32 %s34, %s41
      %p69 = scmp.eq.s32.totalorder %s68, 0
      %s71 = sadd.s32 %s70, 1
      %s72 = scalar_select %p69, %s70, %s71
      %p75 = pneg %p69
      %p76 = scmp.eq.s32.totalorder %s34, 1
      %p77 = por %p75, %p76
      %p78 = scmp.ne.s32.totalorder %s70, %s73
      %p79 = scmp.eq.s32.totalorder %s34, 0
      %p80 = por %p78, %p79
      %p81 = scmp.ne.s32.totalorder %s70, %s73
      %p82 = scmp.eq.s32.totalorder %s39, 1
      %p83 = por %p81, %p82
      %p84 = scmp.ne.s32.totalorder %s73, %s74
      %p85 = scmp.eq.s32.totalorder %s39, 0
      %p86 = por %p84, %p85
      %p87 = scmp.ne.s32.totalorder %s73, %s74
      %p88 = scmp.eq.s32.totalorder %s40, 1
      %p89 = por %p87, %p88
      %p91 = scmp.ne.s32.totalorder %s74, %s90
      %p92 = scmp.eq.s32.totalorder %s40, 0
      %p93 = por %p91, %p92
      %s95 = sadd.s32 %s94, 1
      %p98 = scmp.eq.s32.totalorder %s34, 1
      %p99 = scmp.ne.s32.totalorder %s94, %s96
      %p100 = scmp.eq.s32.totalorder %s34, 0
      %p101 = por %p99, %p100
      %p102 = scmp.ne.s32.totalorder %s94, %s96
      %p103 = scmp.eq.s32.totalorder %s39, 1
      %p104 = por %p102, %p103
      %p105 = scmp.ne.s32.totalorder %s96, %s97
      %p106 = scmp.eq.s32.totalorder %s39, 0
      %p107 = por %p105, %p106
      %p108 = scmp.ne.s32.totalorder %s96, %s97
      %p109 = scmp.eq.s32.totalorder %s40, 1
      %p110 = por %p108, %p109
      %p112 = scmp.ne.s32.totalorder %s97, %s111
      %p113 = scmp.eq.s32.totalorder %s40, 0
      %p114 = por %p112, %p113
      %s116 = sadd.s32 %s115, 1
      %p119 = scmp.eq.s32.totalorder %s34, 1
      %p120 = scmp.ne.s32.totalorder %s115, %s117
      %p121 = scmp.eq.s32.totalorder %s34, 0
      %p122 = por %p120, %p121
      %p123 = scmp.ne.s32.totalorder %s115, %s117
      %p124 = scmp.eq.s32.totalorder %s39, 1
      %p125 = por %p123, %p124
      %p126 = scmp.ne.s32.totalorder %s117, %s118
      %p127 = scmp.eq.s32.totalorder %s39, 0
      %p128 = por %p126, %p127
      %p129 = scmp.ne.s32.totalorder %s117, %s118
      %p130 = scmp.eq.s32.totalorder %s40, 1
      %p131 = por %p129, %p130
      %p133 = scmp.ne.s32.totalorder %s118, %s132
      %p134 = scmp.eq.s32.totalorder %s40, 0
      %p135 = por %p133, %p134
      %s137 = sadd.s32 %s136, 1
      %p140 = scmp.eq.s32.totalorder %s34, 1
      %p141 = scmp.ne.s32.totalorder %s136, %s138
      %p142 = scmp.eq.s32.totalorder %s34, 0
      %p143 = por %p141, %p142
      %p144 = scmp.ne.s32.totalorder %s136, %s138
      %p145 = scmp.eq.s32.totalorder %s39, 1
      %p146 = por %p144, %p145
      %p147 = scmp.ne.s32.totalorder %s138, %s139
      %p148 = scmp.eq.s32.totalorder %s39, 0
      %p149 = por %p147, %p148
      %p150 = scmp.ne.s32.totalorder %s138, %s139
      %p151 = scmp.eq.s32.totalorder %s40, 1
      %p152 = por %p150, %p151
      %p154 = scmp.ne.s32.totalorder %s139, %s153
      %p155 = scmp.eq.s32.totalorder %s40, 0
      %p156 = por %p154, %p155
      %s158 = sadd.s32 %s157, 1
      %p161 = scmp.eq.s32.totalorder %s34, 1
      %p162 = scmp.ne.s32.totalorder %s157, %s159
      %p163 = scmp.eq.s32.totalorder %s34, 0
      %p164 = por %p162, %p163
      %p165 = scmp.ne.s32.totalorder %s157, %s159
      %p166 = scmp.eq.s32.totalorder %s39, 1
      %p167 = por %p165, %p166
      %p168 = scmp.ne.s32.totalorder %s159, %s160
      %p169 = scmp.eq.s32.totalorder %s39, 0
      %p170 = por %p168, %p169
      %p171 = scmp.ne.s32.totalorder %s159, %s160
      %p172 = scmp.eq.s32.totalorder %s40, 1
      %p173 = por %p171, %p172
      %p175 = scmp.ne.s32.totalorder %s160, %s174
      %p176 = scmp.eq.s32.totalorder %s40, 0
      %p177 = por %p175, %p176
      %s179 = sadd.s32 %s178, 1
      %p182 = scmp.eq.s32.totalorder %s34, 1
      %p183 = scmp.ne.s32.totalorder %s178, %s180
      %p184 = scmp.eq.s32.totalorder %s34, 0
      %p185 = por %p183, %p184
      %p186 = scmp.ne.s32.totalorder %s178, %s180
      %p187 = scmp.eq.s32.totalorder %s39, 1
      %p188 = por %p186, %p187
      %p189 = scmp.ne.s32.totalorder %s180, %s181
      %p190 = scmp.eq.s32.totalorder %s39, 0
      %p191 = por %p189, %p190
      %p192 = scmp.ne.s32.totalorder %s180, %s181
      %p193 = scmp.eq.s32.totalorder %s40, 1
      %p194 = por %p192, %p193
      %p196 = scmp.ne.s32.totalorder %s181, %s195
      %p197 = scmp.eq.s32.totalorder %s40, 0
      %p198 = por %p196, %p197
      %s200 = sadd.s32 %s199, 1
      %p203 = scmp.eq.s32.totalorder %s34, 1
      %p204 = scmp.ne.s32.totalorder %s199, %s201
      %p205 = scmp.eq.s32.totalorder %s34, 0
      %p206 = por %p204, %p205
      %p207 = scmp.ne.s32.totalorder %s199, %s201
      %p208 = scmp.eq.s32.totalorder %s39, 1
      %p209 = por %p207, %p208
      %p210 = scmp.ne.s32.totalorder %s201, %s202
      %p211 = scmp.eq.s32.totalorder %s39, 0
      %p212 = por %p210, %p211
      %p213 = scmp.ne.s32.totalorder %s201, %s202
      %p214 = scmp.eq.s32.totalorder %s40, 1
      %p215 = por %p213, %p214
      %p217 = scmp.ne.s32.totalorder %s202, %s216
      %p218 = scmp.eq.s32.totalorder %s40, 0
      %p219 = por %p217, %p218
      %s221 = sadd.s32 %s220, 1
      %p224 = scmp.eq.s32.totalorder %s34, 1
      %p225 = scmp.ne.s32.totalorder %s220, %s222
      %p226 = scmp.eq.s32.totalorder %s34, 0
      %p227 = por %p225, %p226
      %p228 = scmp.ne.s32.totalorder %s220, %s222
      %p229 = scmp.eq.s32.totalorder %s39, 1
      %p230 = por %p228, %p229
      %p231 = scmp.ne.s32.totalorder %s222, %s223
      %p232 = scmp.eq.s32.totalorder %s39, 0
      %p233 = por %p231, %p232
      %p234 = scmp.ne.s32.totalorder %s222, %s223
      %p235 = scmp.eq.s32.totalorder %s40, 1
      %p236 = por %p234, %p235
      %p238 = scmp.ne.s32.totalorder %s223, %s237
      %p239 = scmp.eq.s32.totalorder %s40, 0
      %p240 = por %p238, %p239
      %s242 = sadd.s32 %s241, 1
      %p245 = scmp.eq.s32.totalorder %s34, 1
      %p246 = scmp.ne.s32.totalorder %s241, %s243
      %p247 = scmp.eq.s32.totalorder %s34, 0
      %p248 = por %p246, %p247
      %p249 = scmp.ne.s32.totalorder %s241, %s243
      %p250 = scmp.eq.s32.totalorder %s39, 1
      %p251 = por %p249, %p250
      %p252 = scmp.ne.s32.totalorder %s243, %s244
      %p253 = scmp.eq.s32.totalorder %s39, 0
      %p254 = por %p252, %p253
      %p255 = scmp.ne.s32.totalorder %s243, %s244
      %p256 = scmp.eq.s32.totalorder %s40, 1
      %p257 = por %p255, %p256
      %p259 = scmp.ne.s32.totalorder %s244, %s258
      %p260 = scmp.eq.s32.totalorder %s40, 0
      %p261 = por %p259, %p260
      %s263 = sadd.s32 %s262, 1
      %p266 = scmp.eq.s32.totalorder %s34, 1
      %p267 = scmp.ne.s32.totalorder %s262, %s264
      %p268 = scmp.eq.s32.totalorder %s34, 0
      %p269 = por %p267, %p268
      %p270 = scmp.ne.s32.totalorder %s262, %s264
      %p271 = scmp.eq.s32.totalorder %s39, 1
      %p272 = por %p270, %p271
      %p273 = scmp.ne.s32.totalorder %s264, %s265
      %p274 = scmp.eq.s32.totalorder %s39, 0
      %p275 = por %p273, %p274
      %p276 = scmp.ne.s32.totalorder %s264, %s265
      %p277 = scmp.eq.s32.totalorder %s40, 1
      %p278 = por %p276, %p277
      %p280 = scmp.ne.s32.totalorder %s265, %s279
      %p281 = scmp.eq.s32.totalorder %s40, 0
      %p282 = por %p280, %p281
      %s284 = sadd.s32 %s283, 1
      %p287 = scmp.eq.s32.totalorder %s34, 1
      %p288 = scmp.ne.s32.totalorder %s283, %s285
      %p289 = scmp.eq.s32.totalorder %s34, 0
      %p290 = por %p288, %p289
      %p291 = scmp.ne.s32.totalorder %s283, %s285
      %p292 = scmp.eq.s32.totalorder %s39, 1
      %p293 = por %p291, %p292
      %p294 = scmp.ne.s32.totalorder %s285, %s286
      %p295 = scmp.eq.s32.totalorder %s39, 0
      %p296 = por %p294, %p295
      %p297 = scmp.ne.s32.totalorder %s285, %s286
      %p298 = scmp.eq.s32.totalorder %s40, 1
      %p299 = por %p297, %p298
      %p301 = scmp.ne.s32.totalorder %s286, %s300
      %p302 = scmp.eq.s32.totalorder %s40, 0
      %p303 = por %p301, %p302
      %s305 = sadd.s32 %s304, 1
      %p308 = scmp.eq.s32.totalorder %s34, 1
      %p309 = scmp.ne.s32.totalorder %s304, %s306
      %p310 = scmp.eq.s32.totalorder %s34, 0
      %p311 = por %p309, %p310
      %p312 = scmp.ne.s32.totalorder %s304, %s306
      %p313 = scmp.eq.s32.totalorder %s39, 1
      %p314 = por %p312, %p313
      %p315 = scmp.ne.s32.totalorder %s306, %s307
      %p316 = scmp.eq.s32.totalorder %s39, 0
      %p317 = por %p315, %p316
      %p318 = scmp.ne.s32.totalorder %s306, %s307
      %p319 = scmp.eq.s32.totalorder %s40, 1
      %p320 = por %p318, %p319
      %p322 = scmp.ne.s32.totalorder %s307, %s321
      %p323 = scmp.eq.s32.totalorder %s40, 0
      %p324 = por %p322, %p323
      %s326 = sadd.s32 %s325, 1
      %p329 = scmp.eq.s32.totalorder %s34, 1
      %p330 = scmp.ne.s32.totalorder %s325, %s327
      %p331 = scmp.eq.s32.totalorder %s34, 0
      %p332 = por %p330, %p331
      %p333 = scmp.ne.s32.totalorder %s325, %s327
      %p334 = scmp.eq.s32.totalorder %s39, 1
      %p335 = por %p333, %p334
      %p336 = scmp.ne.s32.totalorder %s327, %s328
      %p337 = scmp.eq.s32.totalorder %s39, 0
      %p338 = por %p336, %p337
      %p339 = scmp.ne.s32.totalorder %s327, %s328
      %p340 = scmp.eq.s32.totalorder %s40, 1
      %p341 = por %p339, %p340
      %p343 = scmp.ne.s32.totalorder %s328, %s342
      %p344 = scmp.eq.s32.totalorder %s40, 0
      %p345 = por %p343, %p344
      %s346 = ssub.s32 %s34, %s41
      %p347 = scmp.eq.s32.totalorder %s346, 0
      %s349 = sadd.s32 %s348, 1
      %s350 = scalar_select %p347, %s348, %s349
      %p353 = pneg %p347
      %p354 = scmp.eq.s32.totalorder %s34, 1
      %p355 = por %p353, %p354
      %p356 = scmp.ne.s32.totalorder %s348, %s351
      %p357 = scmp.eq.s32.totalorder %s34, 0
      %p358 = por %p356, %p357
      %p359 = scmp.ne.s32.totalorder %s348, %s351
      %p360 = scmp.eq.s32.totalorder %s39, 1
      %p361 = por %p359, %p360
      %p362 = scmp.ne.s32.totalorder %s351, %s352
      %p363 = scmp.eq.s32.totalorder %s39, 0
      %p364 = por %p362, %p363
      %p365 = scmp.ne.s32.totalorder %s351, %s352
      %p366 = scmp.eq.s32.totalorder %s40, 1
      %p367 = por %p365, %p366
      %p369 = scmp.ne.s32.totalorder %s352, %s368
      %p370 = scmp.eq.s32.totalorder %s40, 0
      %p371 = por %p369, %p370
      %s372 = ssub.s32 %s34, %s41
      %p373 = scmp.eq.s32.totalorder %s372, 0
      %s375 = sadd.s32 %s374, 1
      %s376 = scalar_select %p373, %s374, %s375
      %p379 = pneg %p373
      %p380 = scmp.eq.s32.totalorder %s34, 1
      %p381 = por %p379, %p380
      %p382 = scmp.ne.s32.totalorder %s374, %s377
      %p383 = scmp.eq.s32.totalorder %s34, 0
      %p384 = por %p382, %p383
      %p385 = scmp.ne.s32.totalorder %s374, %s377
      %p386 = scmp.eq.s32.totalorder %s39, 1
      %p387 = por %p385, %p386
      %p388 = scmp.ne.s32.totalorder %s377, %s378
      %p389 = scmp.eq.s32.totalorder %s39, 0
      %p390 = por %p388, %p389
      %p391 = scmp.ne.s32.totalorder %s377, %s378
      %p392 = scmp.eq.s32.totalorder %s40, 1
      %p393 = por %p391, %p392
      %p395 = scmp.ne.s32.totalorder %s378, %s394
      %p396 = scmp.eq.s32.totalorder %s40, 0
      %p397 = por %p395, %p396
      %p398 = scmp.le.s32.totalorder 1, %s34
      %p399 = scmp.lt.s32.totalorder %s34, 3
      %p400 = pnand %p398, %p399
      %p401 = pneg %p400
      // Predicated region
      $region9: #{tpu_custom_call.1} parent=5 // pred_check
        _
      $region10: #{tpu_custom_call.1} parent=5 // pred_check_branch
        %403 = sbr.rel (%p400) target = $region12
      $region11: #{tpu_custom_call.1} parent=5 // pred_region
        %s404 = ssub.s32 %s34, 1
        // Predicated region
        $region13: #{tpu_custom_call.1} parent=11 // pred_check
          %p405 = pneg %p107
        $region14: #{tpu_custom_call.1} parent=11 // pred_check_branch
          %407 = sbr.rel (%p405) target = $region16
        $region15: #{tpu_custom_call.1} parent=11 // pred_region
          _
        $region16: #{tpu_custom_call.1} parent=11 // pred_fallthru
          _
        // Predicated region
        $region17: #{tpu_custom_call.1} parent=11 // pred_check
          %p408 = pneg %p128
        $region18: #{tpu_custom_call.1} parent=11 // pred_check_branch
          %410 = sbr.rel (%p408) target = $region20
        $region19: #{tpu_custom_call.1} parent=11 // pred_region
          _
        $region20: #{tpu_custom_call.1} parent=11 // pred_fallthru
          _
        // Predicated region
        $region21: #{tpu_custom_call.1} parent=11 // pred_check
          %p411 = pneg %p149
        $region22: #{tpu_custom_call.1} parent=11 // pred_check_branch
          %413 = sbr.rel (%p411) target = $region24
        $region23: #{tpu_custom_call.1} parent=11 // pred_region
          _
        $region24: #{tpu_custom_call.1} parent=11 // pred_fallthru
          _
        // Predicated region
        $region25: #{tpu_custom_call.1} parent=11 // pred_check
          %p414 = pneg %p170
        $region26: #{tpu_custom_call.1} parent=11 // pred_check_branch
          %416 = sbr.rel (%p414) target = $region28
        $region27: #{tpu_custom_call.1} parent=11 // pred_region
          _
        $region28: #{tpu_custom_call.1} parent=11 // pred_fallthru
          _
        // Predicated region
        $region29: #{tpu_custom_call.1} parent=11 // pred_check
          %p417 = pneg %p191
        $region30: #{tpu_custom_call.1} parent=11 // pred_check_branch
          %419 = sbr.rel (%p417) target = $region32
        $region31: #{tpu_custom_call.1} parent=11 // pred_region
          _
        $region32: #{tpu_custom_call.1} parent=11 // pred_fallthru
          _
        // Predicated region
        $region33: #{tpu_custom_call.1} parent=11 // pred_check
          %p420 = pneg %p212
        $region34: #{tpu_custom_call.1} parent=11 // pred_check_branch
          %422 = sbr.rel (%p420) target = $region36
        $region35: #{tpu_custom_call.1} parent=11 // pred_region
          _
        $region36: #{tpu_custom_call.1} parent=11 // pred_fallthru
          _
        // Predicated region
        $region37: #{tpu_custom_call.1} parent=11 // pred_check
          %p423 = pneg %p233
        $region38: #{tpu_custom_call.1} parent=11 // pred_check_branch
          %425 = sbr.rel (%p423) target = $region40
        $region39: #{tpu_custom_call.1} parent=11 // pred_region
          _
        $region40: #{tpu_custom_call.1} parent=11 // pred_fallthru
          _
        // Predicated region
        $region41: #{tpu_custom_call.1} parent=11 // pred_check
          %p426 = pneg %p254
        $region42: #{tpu_custom_call.1} parent=11 // pred_check_branch
          %428 = sbr.rel (%p426) target = $region44
        $region43: #{tpu_custom_call.1} parent=11 // pred_region
          _
        $region44: #{tpu_custom_call.1} parent=11 // pred_fallthru
          _
        // Predicated region
        $region45: #{tpu_custom_call.1} parent=11 // pred_check
          %p429 = pneg %p275
        $region46: #{tpu_custom_call.1} parent=11 // pred_check_branch
          %431 = sbr.rel (%p429) target = $region48
        $region47: #{tpu_custom_call.1} parent=11 // pred_region
          _
        $region48: #{tpu_custom_call.1} parent=11 // pred_fallthru
          _
        // Predicated region
        $region49: #{tpu_custom_call.1} parent=11 // pred_check
          %p432 = pneg %p296
        $region50: #{tpu_custom_call.1} parent=11 // pred_check_branch
          %434 = sbr.rel (%p432) target = $region52
        $region51: #{tpu_custom_call.1} parent=11 // pred_region
          _
        $region52: #{tpu_custom_call.1} parent=11 // pred_fallthru
          _
        // Predicated region
        $region53: #{tpu_custom_call.1} parent=11 // pred_check
          %p435 = pneg %p317
        $region54: #{tpu_custom_call.1} parent=11 // pred_check_branch
          %437 = sbr.rel (%p435) target = $region56
        $region55: #{tpu_custom_call.1} parent=11 // pred_region
          _
        $region56: #{tpu_custom_call.1} parent=11 // pred_fallthru
          _
        // Predicated region
        $region57: #{tpu_custom_call.1} parent=11 // pred_check
          %p438 = pneg %p338
        $region58: #{tpu_custom_call.1} parent=11 // pred_check_branch
          %440 = sbr.rel (%p438) target = $region60
        $region59: #{tpu_custom_call.1} parent=11 // pred_region
          _
        $region60: #{tpu_custom_call.1} parent=11 // pred_fallthru
          _
      $region12: #{tpu_custom_call.1} parent=5 // pred_fallthru
        _
      %p441 = scmp.lt.s32.totalorder %s34, 2
      // Predicated region
      $region61: #{tpu_custom_call.1} parent=5 // pred_check
        %p442 = pneg %p441
      $region62: #{tpu_custom_call.1} parent=5 // pred_check_branch
        %444 = sbr.rel (%p442) target = $region64
      $region63: #{tpu_custom_call.1} parent=5 // pred_region
        // Predicated region
        $region65: #{tpu_custom_call.1} parent=63 // pred_check
          %p445 = pneg %p54
        $region66: #{tpu_custom_call.1} parent=63 // pred_check_branch
          %447 = sbr.rel (%p445) target = $region68
        $region67: #{tpu_custom_call.1} parent=63 // pred_region
          %s448 = sand.u32 %s44, 1
          %s449 = scalar_lea.sflag [#allocation9], %s448
          %s450 = sand.u32 %s44, 1
          %s451 = smul.addr %s450, 32
          %s452 = scalar_lea.vmem [#allocation8], %s451
          %s453 = smul.u32 2, %s34
          %s455 = ssub.s32 512, 512
          %456 = vsyncadd %s449, %s455
          %s457 = smul.addr %s453, 2
          %s458 = smul.addr %s457, 128
          %s459 = scalar_lea.hbm %s0, %s458
          %s460 = sshll.u32 %s452, 4
          %s461 = int_to_ptr.vmem [resolvable:$true] %s460
          %466 = dma.hbm_to_vmem [thread:$0]  %s459, 512, %s461, %s449, 128, 128, 8
        $region68: #{tpu_custom_call.1} parent=63 // pred_fallthru
          _
        // Predicated region
        $region69: #{tpu_custom_call.1} parent=63 // pred_check
          %p467 = pneg %p80
        $region70: #{tpu_custom_call.1} parent=63 // pred_check_branch
          %469 = sbr.rel (%p467) target = $region72
        $region71: #{tpu_custom_call.1} parent=63 // pred_region
          %s470 = sand.u32 %s70, 1
          %s471 = scalar_lea.sflag [#allocation12], %s470
          %s472 = sand.u32 %s70, 1
          %s473 = smul.addr %s472, 32
          %s474 = scalar_lea.vmem [#allocation11], %s473
          %s475 = smul.u32 2, %s34
          %s477 = ssub.s32 512, 512
          %478 = vsyncadd %s471, %s477
          %s479 = smul.addr %s475, 2
          %s480 = smul.addr %s479, 128
          %s481 = scalar_lea.hbm %s1, %s480
          %s482 = sshll.u32 %s474, 4
          %s483 = int_to_ptr.vmem [resolvable:$true] %s482
          %488 = dma.hbm_to_vmem [thread:$0]  %s481, 512, %s483, %s471, 128, 128, 8
        $region72: #{tpu_custom_call.1} parent=63 // pred_fallthru
          _
      $region64: #{tpu_custom_call.1} parent=5 // pred_fallthru
        _
      %p489 = scmp.le.s32.totalorder 1, %s34
      %p490 = scmp.lt.s32.totalorder %s34, 3
      %p491 = pnand %p489, %p490
      %p492 = pneg %p491
      // Predicated region
      $region73: #{tpu_custom_call.1} parent=5 // pred_check
        _
      $region74: #{tpu_custom_call.1} parent=5 // pred_check_branch
        %494 = sbr.rel (%p491) target = $region76
      $region75: #{tpu_custom_call.1} parent=5 // pred_region
        %s495 = ssub.s32 %s34, 1
        %s496 = sand.u32 %s47, 1
        %s497 = scalar_lea.sflag [#allocation9], %s496
        %s498 = sand.u32 %s47, 1
        %s499 = smul.addr %s498, 32
        %s500 = scalar_lea.vmem [#allocation8], %s499
        // Predicated region
        $region77: #{tpu_custom_call.1} parent=75 // pred_check
          %p501 = pneg %p60
        $region78: #{tpu_custom_call.1} parent=75 // pred_check_branch
          %503 = sbr.rel (%p501) target = $region80
        $region79: #{tpu_custom_call.1} parent=75 // pred_region
          %504 = dma.done %s497, 512
        $region80: #{tpu_custom_call.1} parent=75 // pred_fallthru
          _
        %s505 = sand.u32 %s73, 1
        %s506 = scalar_lea.sflag [#allocation12], %s505
        %s507 = sand.u32 %s73, 1
        %s508 = smul.addr %s507, 32
        %s509 = scalar_lea.vmem [#allocation11], %s508
        // Predicated region
        $region81: #{tpu_custom_call.1} parent=75 // pred_check
          %p510 = pneg %p86
        $region82: #{tpu_custom_call.1} parent=75 // pred_check_branch
          %512 = sbr.rel (%p510) target = $region84
        $region83: #{tpu_custom_call.1} parent=75 // pred_region
          %513 = dma.done %s506, 512
        $region84: #{tpu_custom_call.1} parent=75 // pred_fallthru
          _
        %s514 = sand.u32 %s47, 1
        %s515 = scalar_lea.sflag [#allocation9], %s514
        %s516 = sand.u32 %s47, 1
        %s517 = smul.addr %s516, 32
        %s518 = scalar_lea.vmem [#allocation8], %s517
        %p519 = pneg %p60
        %p520 = pneg %p57
        %s521 = sand.u32 %s73, 1
        %s522 = scalar_lea.sflag [#allocation12], %s521
        %s523 = sand.u32 %s73, 1
        %s524 = smul.addr %s523, 32
        %s525 = scalar_lea.vmem [#allocation11], %s524
        %p526 = pneg %p86
        %p527 = pneg %p83
        %p528 = pneg %p107
        %p529 = pneg %p104
        %p530 = pneg %p128
        %p531 = pneg %p125
        %p532 = pneg %p149
        %p533 = pneg %p146
        %p534 = pneg %p170
        %p535 = pneg %p167
        %p536 = pneg %p191
        %p537 = pneg %p188
        %p538 = pneg %p212
        %p539 = pneg %p209
        %p540 = pneg %p233
        %p541 = pneg %p230
        %p542 = pneg %p254
        %p543 = pneg %p251
        %p544 = pneg %p275
        %p545 = pneg %p272
        %p546 = pneg %p296
        %p547 = pneg %p293
        %p548 = pneg %p317
        %p549 = pneg %p314
        %p550 = pneg %p338
        %p551 = pneg %p335
        %p552 = pneg %p364
        %p553 = pneg %p361
        %s554 = sand.u32 %s351, 1
        %s555 = scalar_lea.sflag [#allocation10], %s554
        %s556 = sand.u32 %s351, 1
        %s557 = smul.addr %s556, 32
        %s558 = scalar_lea.vmem [#allocation13], %s557
        %p559 = pneg %p390
        %p560 = pneg %p387
        %s561 = sand.u32 %s377, 1
        %s562 = scalar_lea.sflag [#allocation15], %s561
        %s563 = sand.u32 %s377, 1
        %s564 = smul.addr %s563, 32
        %s565 = scalar_lea.vmem [#allocation14], %s564
        %s566 = smul.u32 2, %s39
        %s567 = smul.u32 2, %s39
        %s568 = smul.u32 2, %s39
        %s569 = smul.u32 2, %s39
        %v571 = vld [vmem:[%s500] sm:$0xff]
        %v572 = vld [vmem:[%s500 + $0x8] sm:$0xff]
        %v573 = vld [vmem:[%s500 + $0x10] sm:$0xff]
        %v574 = vld [vmem:[%s500 + $0x18] sm:$0xff]
        %v575 = vld [vmem:[%s509] sm:$0xff]
        %v576 = vld [vmem:[%s509 + $0x8] sm:$0xff]
        %v577 = vld [vmem:[%s509 + $0x10] sm:$0xff]
        %v578 = vld [vmem:[%s509 + $0x18] sm:$0xff]
        %v579 = vadd.f32 %v571, %v575
        %v580 = vadd.f32 %v572, %v576
        %v581 = vadd.f32 %v573, %v577
        %v582 = vadd.f32 %v574, %v578
        %v583 = vmul.f32 %v579, %v579
        %v584 = vmul.f32 %v580, %v580
        %v585 = vmul.f32 %v581, %v581
        %v586 = vmul.f32 %v582, %v582
        %587 = vadd.xlane.f32.xlu0 %v583
        %v588 = vpop.xlane.xlu0 %587
        %589 = vadd.xlane.f32.xlu0 %v584
        %v590 = vpop.xlane.xlu0 %589
        %591 = vadd.xlane.f32.xlu0 %v585
        %v592 = vpop.xlane.xlu0 %591
        %593 = vadd.xlane.f32.xlu0 %v586
        %v594 = vpop.xlane.xlu0 %593
        %v595 = vrcp.pop 128.0
        %v596 = vmul.f32 %v588, %v595
        %v597 = vmul.f32 %v590, %v595
        %v598 = vmul.f32 %v592, %v595
        %v599 = vmul.f32 %v594, %v595
        %v600 = vadd.f32 %v596, 1e-05
        %v601 = vadd.f32 %v597, 1e-05
        %v602 = vadd.f32 %v598, 1e-05
        %v603 = vadd.f32 %v599, 1e-05
        %v604 = vrsqrt.pop %v600
        %v605 = vrsqrt.pop %v601
        %v606 = vrsqrt.pop %v602
        %v607 = vrsqrt.pop %v603
        %v608 = vmul.f32 %v579, %v604
        %v609 = vmul.f32 %v580, %v605
        %v610 = vmul.f32 %v581, %v606
        %v611 = vmul.f32 %v582, %v607
        %v612 = vld [vmem:[%s2] sm:$0x1]
        %v614 = vlaneseq
        %v615 = vshrl.u32 %v614, 7
        %v616 = vsub.s32 0, %v615
        %v617 = vrot.slane %v612, %v616
        %v619 = vmul.f32 %v608, %v617
        %v620 = vmul.f32 %v609, %v617
        %v621 = vmul.f32 %v610, %v617
        %v622 = vmul.f32 %v611, %v617
        %v623 = vpack.c.bf16 %v620, %v619
        %v624 = vpack.c.bf16 %v622, %v621
        %v625 = vld [vmem:[%s3] sm:$0xff]
        %v626 = vld [vmem:[%s3 + $0x8] sm:$0xff]
        %v627 = vld [vmem:[%s3 + $0x10] sm:$0xff]
        %v628 = vld [vmem:[%s3 + $0x18] sm:$0xff]
        %v629 = vld [vmem:[%s3 + $0x20] sm:$0xff]
        %v630 = vld [vmem:[%s3 + $0x28] sm:$0xff]
        %v631 = vld [vmem:[%s3 + $0x30] sm:$0xff]
        %v632 = vld [vmem:[%s3 + $0x38] sm:$0xff]
        %v633 = vld [vmem:[%s3 + $0x40] sm:$0xff]
        %v634 = vld [vmem:[%s3 + $0x48] sm:$0xff]
        %v635 = vld [vmem:[%s3 + $0x50] sm:$0xff]
        %v636 = vld [vmem:[%s3 + $0x58] sm:$0xff]
        %v637 = vld [vmem:[%s3 + $0x60] sm:$0xff]
        %v638 = vld [vmem:[%s3 + $0x68] sm:$0xff]
        %v639 = vld [vmem:[%s3 + $0x70] sm:$0xff]
        %v640 = vld [vmem:[%s3 + $0x78] sm:$0xff]
        %v641 = vld [vmem:[%s3 + $0x80] sm:$0xff]
        %v642 = vld [vmem:[%s3 + $0x88] sm:$0xff]
        %v643 = vld [vmem:[%s3 + $0x90] sm:$0xff]
        %v644 = vld [vmem:[%s3 + $0x98] sm:$0xff]
        %v645 = vld [vmem:[%s3 + $0xa0] sm:$0xff]
        %v646 = vld [vmem:[%s3 + $0xa8] sm:$0xff]
        %v647 = vld [vmem:[%s3 + $0xb0] sm:$0xff]
        %v648 = vld [vmem:[%s3 + $0xb8] sm:$0xff]
        %v649 = vld [vmem:[%s3 + $0xc0] sm:$0xff]
        %v650 = vld [vmem:[%s3 + $0xc8] sm:$0xff]
        %v651 = vld [vmem:[%s3 + $0xd0] sm:$0xff]
        %v652 = vld [vmem:[%s3 + $0xd8] sm:$0xff]
        %v653 = vld [vmem:[%s3 + $0xe0] sm:$0xff]
        %v654 = vld [vmem:[%s3 + $0xe8] sm:$0xff]
        %v655 = vld [vmem:[%s3 + $0xf0] sm:$0xff]
        %v656 = vld [vmem:[%s3 + $0xf8] sm:$0xff]
        %v689 = vunpack.c.l.b16 %v625
        %v690 = vunpack.c.h.b16 %v625
        %v691 = vunpack.c.l.b16 %v626
        %v692 = vunpack.c.h.b16 %v626
        %v693 = vunpack.c.l.b16 %v627
        %v694 = vunpack.c.h.b16 %v627
        %v695 = vunpack.c.l.b16 %v628
        %v696 = vunpack.c.h.b16 %v628
        %v697 = vunpack.c.l.b16 %v629
        %v698 = vunpack.c.h.b16 %v629
        %v699 = vunpack.c.l.b16 %v630
        %v700 = vunpack.c.h.b16 %v630
        %v701 = vunpack.c.l.b16 %v631
        %v702 = vunpack.c.h.b16 %v631
        %v703 = vunpack.c.l.b16 %v632
        %v704 = vunpack.c.h.b16 %v632
        %v705 = vunpack.c.l.b16 %v633
        %v706 = vunpack.c.h.b16 %v633
        %v707 = vunpack.c.l.b16 %v634
        %v708 = vunpack.c.h.b16 %v634
        %v709 = vunpack.c.l.b16 %v635
        %v710 = vunpack.c.h.b16 %v635
        %v711 = vunpack.c.l.b16 %v636
        %v712 = vunpack.c.h.b16 %v636
        %v713 = vunpack.c.l.b16 %v637
        %v714 = vunpack.c.h.b16 %v637
        %v715 = vunpack.c.l.b16 %v638
        %v716 = vunpack.c.h.b16 %v638
        %v717 = vunpack.c.l.b16 %v639
        %v718 = vunpack.c.h.b16 %v639
        %v719 = vunpack.c.l.b16 %v640
        %v720 = vunpack.c.h.b16 %v640
        %v721 = vunpack.c.l.b16 %v641
        %v722 = vunpack.c.h.b16 %v641
        %v723 = vunpack.c.l.b16 %v642
        %v724 = vunpack.c.h.b16 %v642
        %v725 = vunpack.c.l.b16 %v643
        %v726 = vunpack.c.h.b16 %v643
        %v727 = vunpack.c.l.b16 %v644
        %v728 = vunpack.c.h.b16 %v644
        %v729 = vunpack.c.l.b16 %v645
        %v730 = vunpack.c.h.b16 %v645
        %v731 = vunpack.c.l.b16 %v646
        %v732 = vunpack.c.h.b16 %v646
        %v733 = vunpack.c.l.b16 %v647
        %v734 = vunpack.c.h.b16 %v647
        %v735 = vunpack.c.l.b16 %v648
        %v736 = vunpack.c.h.b16 %v648
        %v737 = vunpack.c.l.b16 %v649
        %v738 = vunpack.c.h.b16 %v649
        %v739 = vunpack.c.l.b16 %v650
        %v740 = vunpack.c.h.b16 %v650
        %v741 = vunpack.c.l.b16 %v651
        %v742 = vunpack.c.h.b16 %v651
        %v743 = vunpack.c.l.b16 %v652
        %v744 = vunpack.c.h.b16 %v652
        %v745 = vunpack.c.l.b16 %v653
        %v746 = vunpack.c.h.b16 %v653
        %v747 = vunpack.c.l.b16 %v654
        %v748 = vunpack.c.h.b16 %v654
        %v749 = vunpack.c.l.b16 %v655
        %v750 = vunpack.c.h.b16 %v655
        %v751 = vunpack.c.l.b16 %v656
        %v752 = vunpack.c.h.b16 %v656
        %v753 = vpack.c.b16 %v693, %v689
        %v754 = vpack.c.b16 %v694, %v690
        %v755 = vpack.c.b16 %v695, %v691
        %v756 = vpack.c.b16 %v696, %v692
        %v757 = vpack.c.b16 %v701, %v697
        %v758 = vpack.c.b16 %v702, %v698
        %v759 = vpack.c.b16 %v703, %v699
        %v760 = vpack.c.b16 %v704, %v700
        %v761 = vpack.c.b16 %v709, %v705
        %v762 = vpack.c.b16 %v710, %v706
        %v763 = vpack.c.b16 %v711, %v707
        %v764 = vpack.c.b16 %v712, %v708
        %v765 = vpack.c.b16 %v717, %v713
        %v766 = vpack.c.b16 %v718, %v714
        %v767 = vpack.c.b16 %v719, %v715
        %v768 = vpack.c.b16 %v720, %v716
        %v769 = vpack.c.b16 %v725, %v721
        %v770 = vpack.c.b16 %v726, %v722
        %v771 = vpack.c.b16 %v727, %v723
        %v772 = vpack.c.b16 %v728, %v724
        %v773 = vpack.c.b16 %v733, %v729
        %v774 = vpack.c.b16 %v734, %v730
        %v775 = vpack.c.b16 %v735, %v731
        %v776 = vpack.c.b16 %v736, %v732
        %v777 = vpack.c.b16 %v741, %v737
        %v778 = vpack.c.b16 %v742, %v738
        %v779 = vpack.c.b16 %v743, %v739
        %v780 = vpack.c.b16 %v744, %v740
        %v781 = vpack.c.b16 %v749, %v745
        %v782 = vpack.c.b16 %v750, %v746
        %v783 = vpack.c.b16 %v751, %v747
        %v784 = vpack.c.b16 %v752, %v748
        %817 = vmatprep.subr.bf16.mxu0 %v754
        %818 = vmatpush1.bf16.msra.mxu0 %v753
        %819 = vmatprep.subr.bf16.mxu0 %v758
        %820 = vmatpush1.bf16.msra.mxu0 %v757
        %821 = vmatprep.subr.bf16.mxu0 %v762
        %822 = vmatpush1.bf16.msra.mxu0 %v761
        %823 = vmatprep.subr.bf16.mxu0 %v766
        %824 = vmatpush1.bf16.msra.mxu0 %v765
        %825 = vmatprep.subr.bf16.mxu0 %v770
        %826 = vmatpush1.bf16.msra.mxu0 %v769
        %827 = vmatprep.subr.bf16.mxu0 %v774
        %828 = vmatpush1.bf16.msra.mxu0 %v773
        %829 = vmatprep.subr.bf16.mxu0 %v778
        %830 = vmatpush1.bf16.msra.mxu0 %v777
        %831 = vmatprep.subr.bf16.mxu0 %v782
        %832 = vmatpush1.bf16.msra.mxu0 %v781
        %833 = vmatprep.subr.bf16.mxu0 0
        %834 = vmatpush1.bf16.msra.mxu0 0
        %835 = vmatprep.subr.bf16.mxu0 0
        %836 = vmatpush1.bf16.msra.mxu0 0
        %837 = vmatprep.subr.bf16.mxu0 0
        %838 = vmatpush1.bf16.msra.mxu0 0
        %839 = vmatprep.subr.bf16.mxu0 0
        %840 = vmatpush1.bf16.msra.mxu0 0
        %841 = vmatprep.subr.bf16.mxu0 0
        %842 = vmatpush1.bf16.msra.mxu0 0
        %843 = vmatprep.subr.bf16.mxu0 0
        %844 = vmatpush1.bf16.msra.mxu0 0
        %845 = vmatprep.subr.bf16.mxu0 0
        %846 = vmatpush1.bf16.msra.mxu0 0
        %847 = vmatprep.subr.bf16.mxu0 0
        %848 = vmatpush1.bf16.msra.mxu0 0
        %849 = vmatprep.mubr.bf16.mxu0 0
        %850 = vmatmul.mubr.bf16.gmra.mrb[0].mxu0 %v623
        %v851 = vpop.f32.mrb[0].mxu0
        %v852 = vadd.f32 0.0, %v851
        %v853 = vpop.f32.mrb[0].mxu0
        %v854 = vadd.f32 0.0, %v853
        %v855 = vpop.f32.mrb[0].mxu0
        %v856 = vadd.f32 0.0, %v855
        %v857 = vpop.f32.mrb[0].mxu0
        %v858 = vadd.f32 0.0, %v857
        %859 = vmatprep.mubr.bf16.mxu0 0
        %860 = vmatmul.mubr.bf16.gmra.mrb[0].mxu0 %v624
        %v861 = vpop.f32.mrb[0].mxu0
        %v862 = vadd.f32 0.0, %v861
        %v863 = vpop.f32.mrb[0].mxu0
        %v864 = vadd.f32 0.0, %v863
        %v865 = vpop.f32.mrb[0].mxu0
        %v866 = vadd.f32 0.0, %v865
        %v867 = vpop.f32.mrb[0].mxu0
        %v868 = vadd.f32 0.0, %v867
        %869 = vdwg.mxu0
        %870 = vmatprep.subr.bf16.mxu0 %v756
        %871 = vmatpush1.bf16.msra.mxu0 %v755
        %872 = vmatprep.subr.bf16.mxu0 %v760
        %873 = vmatpush1.bf16.msra.mxu0 %v759
        %874 = vmatprep.subr.bf16.mxu0 %v764
        %875 = vmatpush1.bf16.msra.mxu0 %v763
        %876 = vmatprep.subr.bf16.mxu0 %v768
        %877 = vmatpush1.bf16.msra.mxu0 %v767
        %878 = vmatprep.subr.bf16.mxu0 %v772
        %879 = vmatpush1.bf16.msra.mxu0 %v771
        %880 = vmatprep.subr.bf16.mxu0 %v776
        %881 = vmatpush1.bf16.msra.mxu0 %v775
        %882 = vmatprep.subr.bf16.mxu0 %v780
        %883 = vmatpush1.bf16.msra.mxu0 %v779
        %884 = vmatprep.subr.bf16.mxu0 %v784
        %885 = vmatpush1.bf16.msra.mxu0 %v783
        %886 = vmatprep.subr.bf16.mxu0 0
        %887 = vmatpush1.bf16.msra.mxu0 0
        %888 = vmatprep.subr.bf16.mxu0 0
        %889 = vmatpush1.bf16.msra.mxu0 0
        %890 = vmatprep.subr.bf16.mxu0 0
        %891 = vmatpush1.bf16.msra.mxu0 0
        %892 = vmatprep.subr.bf16.mxu0 0
        %893 = vmatpush1.bf16.msra.mxu0 0
        %894 = vmatprep.subr.bf16.mxu0 0
        %895 = vmatpush1.bf16.msra.mxu0 0
        %896 = vmatprep.subr.bf16.mxu0 0
        %897 = vmatpush1.bf16.msra.mxu0 0
        %898 = vmatprep.subr.bf16.mxu0 0
        %899 = vmatpush1.bf16.msra.mxu0 0
        %900 = vmatprep.subr.bf16.mxu0 0
        %901 = vmatpush1.bf16.msra.mxu0 0
        %902 = vmatprep.mubr.bf16.mxu0 0
        %903 = vmatmul.mubr.bf16.gmra.mrb[0].mxu0 %v623
        %v904 = vpop.f32.mrb[0].mxu0
        %v905 = vadd.f32 0.0, %v904
        %v906 = vpop.f32.mrb[0].mxu0
        %v907 = vadd.f32 0.0, %v906
        %v908 = vpop.f32.mrb[0].mxu0
        %v909 = vadd.f32 0.0, %v908
        %v910 = vpop.f32.mrb[0].mxu0
        %v911 = vadd.f32 0.0, %v910
        %912 = vmatprep.mubr.bf16.mxu0 0
        %913 = vmatmul.mubr.bf16.gmra.mrb[0].mxu0 %v624
        %v914 = vpop.f32.mrb[0].mxu0
        %v915 = vadd.f32 0.0, %v914
        %v916 = vpop.f32.mrb[0].mxu0
        %v917 = vadd.f32 0.0, %v916
        %v918 = vpop.f32.mrb[0].mxu0
        %v919 = vadd.f32 0.0, %v918
        %v920 = vpop.f32.mrb[0].mxu0
        %v921 = vadd.f32 0.0, %v920
        %922 = vdwg.mxu0
        %v923 = vlaneseq
        %v924 = vshrl.u32 %v923, 7
        %v925 = vadd.s32 %v924, 8
        %v926 = vld [vmem:[%s4] sm:$0xff]
        %v928 = vlaneseq
        %v929 = vshrl.u32 %v928, 7
        %v930 = vsub.s32 3, %v929
        %v931 = vrot.slane %v926, %v930
        %v932 = vlaneseq
        %v933 = vshrl.u32 %v932, 7
        %v934 = vsub.s32 7, %v933
        %v935 = vrot.slane %v926, %v934
        %v938 = vlaneseq
        %v939 = vshrl.u32 %v938, 7
        %v940 = vsub.s32 3, %v939
        %v941 = vrot.slane %v931, %v940
        %v942 = vlaneseq
        %v943 = vshrl.u32 %v942, 7
        %v944 = vsub.s32 3, %v943
        %v945 = vrot.slane %v935, %v944
        %v946 = vmul.f32 %v852, %v941
        %v947 = vmul.f32 %v854, %v945
        %v948 = vmul.f32 %v856, %v941
        %v949 = vmul.f32 %v858, %v945
        %v950 = vmul.f32 %v862, %v941
        %v951 = vmul.f32 %v864, %v945
        %v952 = vmul.f32 %v866, %v941
        %v953 = vmul.f32 %v868, %v945
        %vm954 = vcmp.ge.s32.totalorder %v924, 1
        %vm955 = vcmp.ge.s32.totalorder %v925, 1
        %v956 = vrot.slane %v852, 7
        %v957 = vrot.slane %v854, 7
        %v958 = vrot.slane %v856, 7
        %v959 = vrot.slane %v858, 7
        %v960 = vrot.slane %v862, 7
        %v961 = vrot.slane %v864, 7
        %v962 = vrot.slane %v866, 7
        %v963 = vrot.slane %v868, 7
        %vm964 = vcmp.lt.s32.totalorder %v924, 1
        %v965 = vsel %vm964, %v960, %v962
        %v966 = vsel %vm964, %v961, %v963
        %v967 = vsel %vm964, %v958, %v960
        %v968 = vsel %vm964, %v959, %v961
        %v969 = vsel %vm964, %v956, %v958
        %v970 = vsel %vm964, %v957, %v959
        %v971 = vsel %vm964, %v962, %v956
        %v972 = vsel %vm964, %v963, %v957
        %v973 = vsel %vm954, %v971, 0.0
        %v974 = vsel %vm954, %v972, 0.0
        %v975 = vsel %vm955, %v969, 0.0
        %v976 = vsel %vm955, %v970, 0.0
        %v977 = vsel %vm954, %v967, 0.0
        %v978 = vsel %vm954, %v968, 0.0
        %v979 = vsel %vm955, %v965, 0.0
        %v980 = vsel %vm955, %v966, 0.0
        %v981 = vlaneseq
        %v982 = vshrl.u32 %v981, 7
        %v983 = vsub.s32 2, %v982
        %v984 = vrot.slane %v926, %v983
        %v985 = vlaneseq
        %v986 = vshrl.u32 %v985, 7
        %v987 = vsub.s32 6, %v986
        %v988 = vrot.slane %v926, %v987
        %v991 = vlaneseq
        %v992 = vshrl.u32 %v991, 7
        %v993 = vsub.s32 2, %v992
        %v994 = vrot.slane %v984, %v993
        %v995 = vlaneseq
        %v996 = vshrl.u32 %v995, 7
        %v997 = vsub.s32 2, %v996
        %v998 = vrot.slane %v988, %v997
        %v999 = vmul.f32 %v973, %v994
        %v1000 = vmul.f32 %v974, %v998
        %v1001 = vmul.f32 %v975, %v994
        %v1002 = vmul.f32 %v976, %v998
        %v1003 = vmul.f32 %v977, %v994
        %v1004 = vmul.f32 %v978, %v998
        %v1005 = vmul.f32 %v979, %v994
        %v1006 = vmul.f32 %v980, %v998
        %v1007 = vadd.f32 %v946, %v999
        %v1008 = vadd.f32 %v947, %v1000
        %v1009 = vadd.f32 %v948, %v1001
        %v1010 = vadd.f32 %v949, %v1002
        %v1011 = vadd.f32 %v950, %v1003
        %v1012 = vadd.f32 %v951, %v1004
        %v1013 = vadd.f32 %v952, %v1005
        %v1014 = vadd.f32 %v953, %v1006
        %vm1015 = vcmp.ge.s32.totalorder %v924, 2
        %vm1016 = vcmp.ge.s32.totalorder %v925, 2
        %v1017 = vrot.slane %v852, 6
        %v1018 = vrot.slane %v854, 6
        %v1019 = vrot.slane %v856, 6
        %v1020 = vrot.slane %v858, 6
        %v1021 = vrot.slane %v862, 6
        %v1022 = vrot.slane %v864, 6
        %v1023 = vrot.slane %v866, 6
        %v1024 = vrot.slane %v868, 6
        %vm1025 = vcmp.lt.s32.totalorder %v924, 2
        %v1026 = vsel %vm1025, %v1021, %v1023
        %v1027 = vsel %vm1025, %v1022, %v1024
        %v1028 = vsel %vm1025, %v1019, %v1021
        %v1029 = vsel %vm1025, %v1020, %v1022
        %v1030 = vsel %vm1025, %v1017, %v1019
        %v1031 = vsel %vm1025, %v1018, %v1020
        %v1032 = vsel %vm1025, %v1023, %v1017
        %v1033 = vsel %vm1025, %v1024, %v1018
        %v1034 = vsel %vm1015, %v1032, 0.0
        %v1035 = vsel %vm1015, %v1033, 0.0
        %v1036 = vsel %vm1016, %v1030, 0.0
        %v1037 = vsel %vm1016, %v1031, 0.0
        %v1038 = vsel %vm1015, %v1028, 0.0
        %v1039 = vsel %vm1015, %v1029, 0.0
        %v1040 = vsel %vm1016, %v1026, 0.0
        %v1041 = vsel %vm1016, %v1027, 0.0
        %v1042 = vlaneseq
        %v1043 = vshrl.u32 %v1042, 7
        %v1044 = vsub.s32 1, %v1043
        %v1045 = vrot.slane %v926, %v1044
        %v1046 = vlaneseq
        %v1047 = vshrl.u32 %v1046, 7
        %v1048 = vsub.s32 5, %v1047
        %v1049 = vrot.slane %v926, %v1048
        %v1052 = vlaneseq
        %v1053 = vshrl.u32 %v1052, 7
        %v1054 = vsub.s32 1, %v1053
        %v1055 = vrot.slane %v1045, %v1054
        %v1056 = vlaneseq
        %v1057 = vshrl.u32 %v1056, 7
        %v1058 = vsub.s32 1, %v1057
        %v1059 = vrot.slane %v1049, %v1058
        %v1060 = vmul.f32 %v1034, %v1055
        %v1061 = vmul.f32 %v1035, %v1059
        %v1062 = vmul.f32 %v1036, %v1055
        %v1063 = vmul.f32 %v1037, %v1059
        %v1064 = vmul.f32 %v1038, %v1055
        %v1065 = vmul.f32 %v1039, %v1059
        %v1066 = vmul.f32 %v1040, %v1055
        %v1067 = vmul.f32 %v1041, %v1059
        %v1068 = vadd.f32 %v1007, %v1060
        %v1069 = vadd.f32 %v1008, %v1061
        %v1070 = vadd.f32 %v1009, %v1062
        %v1071 = vadd.f32 %v1010, %v1063
        %v1072 = vadd.f32 %v1011, %v1064
        %v1073 = vadd.f32 %v1012, %v1065
        %v1074 = vadd.f32 %v1013, %v1066
        %v1075 = vadd.f32 %v1014, %v1067
        %vm1076 = vcmp.ge.s32.totalorder %v924, 3
        %vm1077 = vcmp.ge.s32.totalorder %v925, 3
        %v1078 = vrot.slane %v852, 5
        %v1079 = vrot.slane %v854, 5
        %v1080 = vrot.slane %v856, 5
        %v1081 = vrot.slane %v858, 5
        %v1082 = vrot.slane %v862, 5
        %v1083 = vrot.slane %v864, 5
        %v1084 = vrot.slane %v866, 5
        %v1085 = vrot.slane %v868, 5
        %vm1086 = vcmp.lt.s32.totalorder %v924, 3
        %v1087 = vsel %vm1086, %v1082, %v1084
        %v1088 = vsel %vm1086, %v1083, %v1085
        %v1089 = vsel %vm1086, %v1080, %v1082
        %v1090 = vsel %vm1086, %v1081, %v1083
        %v1091 = vsel %vm1086, %v1078, %v1080
        %v1092 = vsel %vm1086, %v1079, %v1081
        %v1093 = vsel %vm1086, %v1084, %v1078
        %v1094 = vsel %vm1086, %v1085, %v1079
        %v1095 = vsel %vm1076, %v1093, 0.0
        %v1096 = vsel %vm1076, %v1094, 0.0
        %v1097 = vsel %vm1077, %v1091, 0.0
        %v1098 = vsel %vm1077, %v1092, 0.0
        %v1099 = vsel %vm1076, %v1089, 0.0
        %v1100 = vsel %vm1076, %v1090, 0.0
        %v1101 = vsel %vm1077, %v1087, 0.0
        %v1102 = vsel %vm1077, %v1088, 0.0
        %v1103 = vlaneseq
        %v1104 = vshrl.u32 %v1103, 7
        %v1105 = vsub.s32 0, %v1104
        %v1106 = vrot.slane %v926, %v1105
        %v1107 = vlaneseq
        %v1108 = vshrl.u32 %v1107, 7
        %v1109 = vsub.s32 4, %v1108
        %v1110 = vrot.slane %v926, %v1109
        %v1113 = vlaneseq
        %v1114 = vshrl.u32 %v1113, 7
        %v1115 = vsub.s32 0, %v1114
        %v1116 = vrot.slane %v1106, %v1115
        %v1117 = vlaneseq
        %v1118 = vshrl.u32 %v1117, 7
        %v1119 = vsub.s32 0, %v1118
        %v1120 = vrot.slane %v1110, %v1119
        %v1121 = vmul.f32 %v1095, %v1116
        %v1122 = vmul.f32 %v1096, %v1120
        %v1123 = vmul.f32 %v1097, %v1116
        %v1124 = vmul.f32 %v1098, %v1120
        %v1125 = vmul.f32 %v1099, %v1116
        %v1126 = vmul.f32 %v1100, %v1120
        %v1127 = vmul.f32 %v1101, %v1116
        %v1128 = vmul.f32 %v1102, %v1120
        %v1129 = vadd.f32 %v1068, %v1121
        %v1130 = vadd.f32 %v1069, %v1122
        %v1131 = vadd.f32 %v1070, %v1123
        %v1132 = vadd.f32 %v1071, %v1124
        %v1133 = vadd.f32 %v1072, %v1125
        %v1134 = vadd.f32 %v1073, %v1126
        %v1135 = vadd.f32 %v1074, %v1127
        %v1136 = vadd.f32 %v1075, %v1128
        %v1137 = vld [vmem:[%s5] sm:$0x3]
        %v1139 = vlaneseq
        %v1140 = vshrl.u32 %v1139, 7
        %v1141 = vsub.s32 0, %v1140
        %v1142 = vrot.slane %v1137, %v1141
        %v1143 = vlaneseq
        %v1144 = vshrl.u32 %v1143, 7
        %v1145 = vsub.s32 1, %v1144
        %v1146 = vrot.slane %v1137, %v1145
        %v1149 = vadd.f32 %v1129, %v1142
        %v1150 = vadd.f32 %v1130, %v1146
        %v1151 = vadd.f32 %v1131, %v1142
        %v1152 = vadd.f32 %v1132, %v1146
        %v1153 = vadd.f32 %v1133, %v1142
        %v1154 = vadd.f32 %v1134, %v1146
        %v1155 = vadd.f32 %v1135, %v1142
        %v1156 = vadd.f32 %v1136, %v1146
        %v1157 = vxor.u32 %v1149, 2147483648
        %v1158 = vxor.u32 %v1150, 2147483648
        %v1159 = vxor.u32 %v1151, 2147483648
        %v1160 = vxor.u32 %v1152, 2147483648
        %v1161 = vxor.u32 %v1153, 2147483648
        %v1162 = vxor.u32 %v1154, 2147483648
        %v1163 = vxor.u32 %v1155, 2147483648
        %v1164 = vxor.u32 %v1156, 2147483648
        %v1165 = vmul.f32 %v1157, 1.442695
        %v1166 = vpow.pop %v1165
        %v1167 = vmul.f32 %v1158, 1.442695
        %v1168 = vpow.pop %v1167
        %v1169 = vmul.f32 %v1159, 1.442695
        %v1170 = vpow.pop %v1169
        %v1171 = vmul.f32 %v1160, 1.442695
        %v1172 = vpow.pop %v1171
        %v1173 = vmul.f32 %v1161, 1.442695
        %v1174 = vpow.pop %v1173
        %v1175 = vmul.f32 %v1162, 1.442695
        %v1176 = vpow.pop %v1175
        %v1177 = vmul.f32 %v1163, 1.442695
        %v1178 = vpow.pop %v1177
        %v1179 = vmul.f32 %v1164, 1.442695
        %v1180 = vpow.pop %v1179
        %v1181 = vadd.f32 %v1166, 1.0
        %v1182 = vadd.f32 %v1168, 1.0
        %v1183 = vadd.f32 %v1170, 1.0
        %v1184 = vadd.f32 %v1172, 1.0
        %v1185 = vadd.f32 %v1174, 1.0
        %v1186 = vadd.f32 %v1176, 1.0
        %v1187 = vadd.f32 %v1178, 1.0
        %v1188 = vadd.f32 %v1180, 1.0
        %v1189 = vrcp.pop %v1181
        %v1190 = vmul.f32 1.0, %v1189
        %v1191 = vrcp.pop %v1182
        %v1192 = vmul.f32 1.0, %v1191
        %v1193 = vrcp.pop %v1183
        %v1194 = vmul.f32 1.0, %v1193
        %v1195 = vrcp.pop %v1184
        %v1196 = vmul.f32 1.0, %v1195
        %v1197 = vrcp.pop %v1185
        %v1198 = vmul.f32 1.0, %v1197
        %v1199 = vrcp.pop %v1186
        %v1200 = vmul.f32 1.0, %v1199
        %v1201 = vrcp.pop %v1187
        %v1202 = vmul.f32 1.0, %v1201
        %v1203 = vrcp.pop %v1188
        %v1204 = vmul.f32 1.0, %v1203
        %v1205 = vmul.f32 %v1149, %v1190
        %v1206 = vmul.f32 %v1150, %v1192
        %v1207 = vmul.f32 %v1151, %v1194
        %v1208 = vmul.f32 %v1152, %v1196
        %v1209 = vmul.f32 %v1153, %v1198
        %v1210 = vmul.f32 %v1154, %v1200
        %v1211 = vmul.f32 %v1155, %v1202
        %v1212 = vmul.f32 %v1156, %v1204
        %v1213 = vpack.c.bf16 %v1207, %v1205
        %v1214 = vpack.c.bf16 %v1208, %v1206
        %v1215 = vpack.c.bf16 %v1211, %v1209
        %v1216 = vpack.c.bf16 %v1212, %v1210
        %v1217 = vld [vmem:[%s6] sm:$0xf]
        %v1218 = vld [vmem:[%s6 + $0x4] sm:$0xf]
        %v1219 = vld [vmem:[%s6 + $0x8] sm:$0xf]
        %v1220 = vld [vmem:[%s6 + $0xc] sm:$0xf]
        %v1221 = vld [vmem:[%s6 + $0x10] sm:$0xf]
        %v1222 = vld [vmem:[%s6 + $0x14] sm:$0xf]
        %v1223 = vld [vmem:[%s6 + $0x18] sm:$0xf]
        %v1224 = vld [vmem:[%s6 + $0x1c] sm:$0xf]
        %v1225 = vld [vmem:[%s6 + $0x20] sm:$0xf]
        %v1226 = vld [vmem:[%s6 + $0x24] sm:$0xf]
        %v1227 = vld [vmem:[%s6 + $0x28] sm:$0xf]
        %v1228 = vld [vmem:[%s6 + $0x2c] sm:$0xf]
        %v1229 = vld [vmem:[%s6 + $0x30] sm:$0xf]
        %v1230 = vld [vmem:[%s6 + $0x34] sm:$0xf]
        %v1231 = vld [vmem:[%s6 + $0x38] sm:$0xf]
        %v1232 = vld [vmem:[%s6 + $0x3c] sm:$0xf]
        %v1233 = vld [vmem:[%s6 + $0x40] sm:$0xf]
        %v1234 = vld [vmem:[%s6 + $0x44] sm:$0xf]
        %v1235 = vld [vmem:[%s6 + $0x48] sm:$0xf]
        %v1236 = vld [vmem:[%s6 + $0x4c] sm:$0xf]
        %v1237 = vld [vmem:[%s6 + $0x50] sm:$0xf]
        %v1238 = vld [vmem:[%s6 + $0x54] sm:$0xf]
        %v1239 = vld [vmem:[%s6 + $0x58] sm:$0xf]
        %v1240 = vld [vmem:[%s6 + $0x5c] sm:$0xf]
        %v1241 = vld [vmem:[%s6 + $0x60] sm:$0xf]
        %v1242 = vld [vmem:[%s6 + $0x64] sm:$0xf]
        %v1243 = vld [vmem:[%s6 + $0x68] sm:$0xf]
        %v1244 = vld [vmem:[%s6 + $0x6c] sm:$0xf]
        %v1245 = vld [vmem:[%s6 + $0x70] sm:$0xf]
        %v1246 = vld [vmem:[%s6 + $0x74] sm:$0xf]
        %v1247 = vld [vmem:[%s6 + $0x78] sm:$0xf]
        %v1248 = vld [vmem:[%s6 + $0x7c] sm:$0xf]
        %v1281 = vunpack.c.l.b16 %v1217
        %v1282 = vunpack.c.l.b16 %v1218
        %v1283 = vunpack.c.l.b16 %v1219
        %v1284 = vunpack.c.l.b16 %v1220
        %v1285 = vunpack.c.l.b16 %v1221
        %v1286 = vunpack.c.l.b16 %v1222
        %v1287 = vunpack.c.l.b16 %v1223
        %v1288 = vunpack.c.l.b16 %v1224
        %v1289 = vunpack.c.l.b16 %v1225
        %v1290 = vunpack.c.l.b16 %v1226
        %v1291 = vunpack.c.l.b16 %v1227
        %v1292 = vunpack.c.l.b16 %v1228
        %v1293 = vunpack.c.l.b16 %v1229
        %v1294 = vunpack.c.l.b16 %v1230
        %v1295 = vunpack.c.l.b16 %v1231
        %v1296 = vunpack.c.l.b16 %v1232
        %v1297 = vunpack.c.l.b16 %v1233
        %v1298 = vunpack.c.l.b16 %v1234
        %v1299 = vunpack.c.l.b16 %v1235
        %v1300 = vunpack.c.l.b16 %v1236
        %v1301 = vunpack.c.l.b16 %v1237
        %v1302 = vunpack.c.l.b16 %v1238
        %v1303 = vunpack.c.l.b16 %v1239
        %v1304 = vunpack.c.l.b16 %v1240
        %v1305 = vunpack.c.l.b16 %v1241
        %v1306 = vunpack.c.l.b16 %v1242
        %v1307 = vunpack.c.l.b16 %v1243
        %v1308 = vunpack.c.l.b16 %v1244
        %v1309 = vunpack.c.l.b16 %v1245
        %v1310 = vunpack.c.l.b16 %v1246
        %v1311 = vunpack.c.l.b16 %v1247
        %v1312 = vunpack.c.l.b16 %v1248
        %v1313 = vpack.c.b16 %v1282, %v1281
        %v1314 = vpack.c.b16 %v1284, %v1283
        %v1315 = vpack.c.b16 %v1286, %v1285
        %v1316 = vpack.c.b16 %v1288, %v1287
        %v1317 = vpack.c.b16 %v1290, %v1289
        %v1318 = vpack.c.b16 %v1292, %v1291
        %v1319 = vpack.c.b16 %v1294, %v1293
        %v1320 = vpack.c.b16 %v1296, %v1295
        %v1321 = vpack.c.b16 %v1298, %v1297
        %v1322 = vpack.c.b16 %v1300, %v1299
        %v1323 = vpack.c.b16 %v1302, %v1301
        %v1324 = vpack.c.b16 %v1304, %v1303
        %v1325 = vpack.c.b16 %v1306, %v1305
        %v1326 = vpack.c.b16 %v1308, %v1307
        %v1327 = vpack.c.b16 %v1310, %v1309
        %v1328 = vpack.c.b16 %v1312, %v1311
        %1345 = vmatprep.subr.bf16.mxu0 0
        %1346 = vmatpush1.bf16.msra.mxu0 %v1313
        %1347 = vmatprep.subr.bf16.mxu0 0
        %1348 = vmatpush1.bf16.msra.mxu0 %v1314
        %1349 = vmatprep.subr.bf16.mxu0 0
        %1350 = vmatpush1.bf16.msra.mxu0 %v1315
        %1351 = vmatprep.subr.bf16.mxu0 0
        %1352 = vmatpush1.bf16.msra.mxu0 %v1316
        %1353 = vmatprep.subr.bf16.mxu0 0
        %1354 = vmatpush1.bf16.msra.mxu0 %v1317
        %1355 = vmatprep.subr.bf16.mxu0 0
        %1356 = vmatpush1.bf16.msra.mxu0 %v1318
        %1357 = vmatprep.subr.bf16.mxu0 0
        %1358 = vmatpush1.bf16.msra.mxu0 %v1319
        %1359 = vmatprep.subr.bf16.mxu0 0
        %1360 = vmatpush1.bf16.msra.mxu0 %v1320
        %1361 = vmatprep.subr.bf16.mxu0 0
        %1362 = vmatpush1.bf16.msra.mxu0 %v1321
        %1363 = vmatprep.subr.bf16.mxu0 0
        %1364 = vmatpush1.bf16.msra.mxu0 %v1322
        %1365 = vmatprep.subr.bf16.mxu0 0
        %1366 = vmatpush1.bf16.msra.mxu0 %v1323
        %1367 = vmatprep.subr.bf16.mxu0 0
        %1368 = vmatpush1.bf16.msra.mxu0 %v1324
        %1369 = vmatprep.subr.bf16.mxu0 0
        %1370 = vmatpush1.bf16.msra.mxu0 %v1325
        %1371 = vmatprep.subr.bf16.mxu0 0
        %1372 = vmatpush1.bf16.msra.mxu0 %v1326
        %1373 = vmatprep.subr.bf16.mxu0 0
        %1374 = vmatpush1.bf16.msra.mxu0 %v1327
        %1375 = vmatprep.subr.bf16.mxu0 0
        %1376 = vmatpush1.bf16.msra.mxu0 %v1328
        %1377 = vmatprep.mubr.bf16.mxu0 %v1214
        %1378 = vmatmul.mubr.bf16.gmra.mrb[0].mxu0 %v1213
        %v1379 = vpop.f32.mrb[0].mxu0
        %v1380 = vadd.f32 0.0, %v1379
        %v1381 = vpop.f32.mrb[0].mxu0
        %v1382 = vpop.f32.mrb[0].mxu0
        %v1383 = vadd.f32 0.0, %v1382
        %v1384 = vpop.f32.mrb[0].mxu0
        %1385 = vmatprep.mubr.bf16.mxu0 %v1216
        %1386 = vmatmul.mubr.bf16.gmra.mrb[0].mxu0 %v1215
        %v1387 = vpop.f32.mrb[0].mxu0
        %v1388 = vadd.f32 0.0, %v1387
        %v1389 = vpop.f32.mrb[0].mxu0
        %v1390 = vpop.f32.mrb[0].mxu0
        %v1391 = vadd.f32 0.0, %v1390
        %v1392 = vpop.f32.mrb[0].mxu0
        %1393 = vdwg.mxu0
        %v1394 = vld [vmem:[%s7] sm:$0xf]
        %v1395 = vld [vmem:[%s7 + $0x4] sm:$0xf]
        %v1396 = vld [vmem:[%s7 + $0x8] sm:$0xf]
        %v1397 = vld [vmem:[%s7 + $0xc] sm:$0xf]
        %v1398 = vld [vmem:[%s7 + $0x10] sm:$0xf]
        %v1399 = vld [vmem:[%s7 + $0x14] sm:$0xf]
        %v1400 = vld [vmem:[%s7 + $0x18] sm:$0xf]
        %v1401 = vld [vmem:[%s7 + $0x1c] sm:$0xf]
        %v1402 = vld [vmem:[%s7 + $0x20] sm:$0xf]
        %v1403 = vld [vmem:[%s7 + $0x24] sm:$0xf]
        %v1404 = vld [vmem:[%s7 + $0x28] sm:$0xf]
        %v1405 = vld [vmem:[%s7 + $0x2c] sm:$0xf]
        %v1406 = vld [vmem:[%s7 + $0x30] sm:$0xf]
        %v1407 = vld [vmem:[%s7 + $0x34] sm:$0xf]
        %v1408 = vld [vmem:[%s7 + $0x38] sm:$0xf]
        %v1409 = vld [vmem:[%s7 + $0x3c] sm:$0xf]
        %v1410 = vld [vmem:[%s7 + $0x40] sm:$0xf]
        %v1411 = vld [vmem:[%s7 + $0x44] sm:$0xf]
        %v1412 = vld [vmem:[%s7 + $0x48] sm:$0xf]
        %v1413 = vld [vmem:[%s7 + $0x4c] sm:$0xf]
        %v1414 = vld [vmem:[%s7 + $0x50] sm:$0xf]
        %v1415 = vld [vmem:[%s7 + $0x54] sm:$0xf]
        %v1416 = vld [vmem:[%s7 + $0x58] sm:$0xf]
        %v1417 = vld [vmem:[%s7 + $0x5c] sm:$0xf]
        %v1418 = vld [vmem:[%s7 + $0x60] sm:$0xf]
        %v1419 = vld [vmem:[%s7 + $0x64] sm:$0xf]
        %v1420 = vld [vmem:[%s7 + $0x68] sm:$0xf]
        %v1421 = vld [vmem:[%s7 + $0x6c] sm:$0xf]
        %v1422 = vld [vmem:[%s7 + $0x70] sm:$0xf]
        %v1423 = vld [vmem:[%s7 + $0x74] sm:$0xf]
        %v1424 = vld [vmem:[%s7 + $0x78] sm:$0xf]
        %v1425 = vld [vmem:[%s7 + $0x7c] sm:$0xf]
        %v1458 = vunpack.c.l.b16 %v1394
        %v1459 = vunpack.c.l.b16 %v1395
        %v1460 = vunpack.c.l.b16 %v1396
        %v1461 = vunpack.c.l.b16 %v1397
        %v1462 = vunpack.c.l.b16 %v1398
        %v1463 = vunpack.c.l.b16 %v1399
        %v1464 = vunpack.c.l.b16 %v1400
        %v1465 = vunpack.c.l.b16 %v1401
        %v1466 = vunpack.c.l.b16 %v1402
        %v1467 = vunpack.c.l.b16 %v1403
        %v1468 = vunpack.c.l.b16 %v1404
        %v1469 = vunpack.c.l.b16 %v1405
        %v1470 = vunpack.c.l.b16 %v1406
        %v1471 = vunpack.c.l.b16 %v1407
        %v1472 = vunpack.c.l.b16 %v1408
        %v1473 = vunpack.c.l.b16 %v1409
        %v1474 = vunpack.c.l.b16 %v1410
        %v1475 = vunpack.c.l.b16 %v1411
        %v1476 = vunpack.c.l.b16 %v1412
        %v1477 = vunpack.c.l.b16 %v1413
        %v1478 = vunpack.c.l.b16 %v1414
        %v1479 = vunpack.c.l.b16 %v1415
        %v1480 = vunpack.c.l.b16 %v1416
        %v1481 = vunpack.c.l.b16 %v1417
        %v1482 = vunpack.c.l.b16 %v1418
        %v1483 = vunpack.c.l.b16 %v1419
        %v1484 = vunpack.c.l.b16 %v1420
        %v1485 = vunpack.c.l.b16 %v1421
        %v1486 = vunpack.c.l.b16 %v1422
        %v1487 = vunpack.c.l.b16 %v1423
        %v1488 = vunpack.c.l.b16 %v1424
        %v1489 = vunpack.c.l.b16 %v1425
        %v1490 = vpack.c.b16 %v1459, %v1458
        %v1491 = vpack.c.b16 %v1461, %v1460
        %v1492 = vpack.c.b16 %v1463, %v1462
        %v1493 = vpack.c.b16 %v1465, %v1464
        %v1494 = vpack.c.b16 %v1467, %v1466
        %v1495 = vpack.c.b16 %v1469, %v1468
        %v1496 = vpack.c.b16 %v1471, %v1470
        %v1497 = vpack.c.b16 %v1473, %v1472
        %v1498 = vpack.c.b16 %v1475, %v1474
        %v1499 = vpack.c.b16 %v1477, %v1476
        %v1500 = vpack.c.b16 %v1479, %v1478
        %v1501 = vpack.c.b16 %v1481, %v1480
        %v1502 = vpack.c.b16 %v1483, %v1482
        %v1503 = vpack.c.b16 %v1485, %v1484
        %v1504 = vpack.c.b16 %v1487, %v1486
        %v1505 = vpack.c.b16 %v1489, %v1488
        %1522 = vmatprep.subr.bf16.mxu0 0
        %1523 = vmatpush1.bf16.msra.mxu0 %v1490
        %1524 = vmatprep.subr.bf16.mxu0 0
        %1525 = vmatpush1.bf16.msra.mxu0 %v1491
        %1526 = vmatprep.subr.bf16.mxu0 0
        %1527 = vmatpush1.bf16.msra.mxu0 %v1492
        %1528 = vmatprep.subr.bf16.mxu0 0
        %1529 = vmatpush1.bf16.msra.mxu0 %v1493
        %1530 = vmatprep.subr.bf16.mxu0 0
        %1531 = vmatpush1.bf16.msra.mxu0 %v1494
        %1532 = vmatprep.subr.bf16.mxu0 0
        %1533 = vmatpush1.bf16.msra.mxu0 %v1495
        %1534 = vmatprep.subr.bf16.mxu0 0
        %1535 = vmatpush1.bf16.msra.mxu0 %v1496
        %1536 = vmatprep.subr.bf16.mxu0 0
        %1537 = vmatpush1.bf16.msra.mxu0 %v1497
        %1538 = vmatprep.subr.bf16.mxu0 0
        %1539 = vmatpush1.bf16.msra.mxu0 %v1498
        %1540 = vmatprep.subr.bf16.mxu0 0
        %1541 = vmatpush1.bf16.msra.mxu0 %v1499
        %1542 = vmatprep.subr.bf16.mxu0 0
        %1543 = vmatpush1.bf16.msra.mxu0 %v1500
        %1544 = vmatprep.subr.bf16.mxu0 0
        %1545 = vmatpush1.bf16.msra.mxu0 %v1501
        %1546 = vmatprep.subr.bf16.mxu0 0
        %1547 = vmatpush1.bf16.msra.mxu0 %v1502
        %1548 = vmatprep.subr.bf16.mxu0 0
        %1549 = vmatpush1.bf16.msra.mxu0 %v1503
        %1550 = vmatprep.subr.bf16.mxu0 0
        %1551 = vmatpush1.bf16.msra.mxu0 %v1504
        %1552 = vmatprep.subr.bf16.mxu0 0
        %1553 = vmatpush1.bf16.msra.mxu0 %v1505
        %1554 = vmatprep.mubr.bf16.mxu0 %v1214
        %1555 = vmatmul.mubr.bf16.gmra.mrb[0].mxu0 %v1213
        %v1556 = vpop.f32.mrb[0].mxu0
        %v1557 = vadd.f32 0.0, %v1556
        %v1558 = vpop.f32.mrb[0].mxu0
        %v1559 = vpop.f32.mrb[0].mxu0
        %v1560 = vadd.f32 0.0, %v1559
        %v1561 = vpop.f32.mrb[0].mxu0
        %1562 = vmatprep.mubr.bf16.mxu0 %v1216
        %1563 = vmatmul.mubr.bf16.gmra.mrb[0].mxu0 %v1215
        %v1564 = vpop.f32.mrb[0].mxu0
        %v1565 = vadd.f32 0.0, %v1564
        %v1566 = vpop.f32.mrb[0].mxu0
        %v1567 = vpop.f32.mrb[0].mxu0
        %v1568 = vadd.f32 0.0, %v1567
        %v1569 = vpop.f32.mrb[0].mxu0
        %1570 = vdwg.mxu0
        %v1571 = vld [vmem:[%s8] sm:$0xf]
        %v1572 = vld [vmem:[%s8 + $0x4] sm:$0xf]
        %v1573 = vld [vmem:[%s8 + $0x8] sm:$0xf]
        %v1574 = vld [vmem:[%s8 + $0xc] sm:$0xf]
        %v1575 = vld [vmem:[%s8 + $0x10] sm:$0xf]
        %v1576 = vld [vmem:[%s8 + $0x14] sm:$0xf]
        %v1577 = vld [vmem:[%s8 + $0x18] sm:$0xf]
        %v1578 = vld [vmem:[%s8 + $0x1c] sm:$0xf]
        %v1579 = vld [vmem:[%s8 + $0x20] sm:$0xf]
        %v1580 = vld [vmem:[%s8 + $0x24] sm:$0xf]
        %v1581 = vld [vmem:[%s8 + $0x28] sm:$0xf]
        %v1582 = vld [vmem:[%s8 + $0x2c] sm:$0xf]
        %v1583 = vld [vmem:[%s8 + $0x30] sm:$0xf]
        %v1584 = vld [vmem:[%s8 + $0x34] sm:$0xf]
        %v1585 = vld [vmem:[%s8 + $0x38] sm:$0xf]
        %v1586 = vld [vmem:[%s8 + $0x3c] sm:$0xf]
        %v1587 = vld [vmem:[%s8 + $0x40] sm:$0xf]
        %v1588 = vld [vmem:[%s8 + $0x44] sm:$0xf]
        %v1589 = vld [vmem:[%s8 + $0x48] sm:$0xf]
        %v1590 = vld [vmem:[%s8 + $0x4c] sm:$0xf]
        %v1591 = vld [vmem:[%s8 + $0x50] sm:$0xf]
        %v1592 = vld [vmem:[%s8 + $0x54] sm:$0xf]
        %v1593 = vld [vmem:[%s8 + $0x58] sm:$0xf]
        %v1594 = vld [vmem:[%s8 + $0x5c] sm:$0xf]
        %v1595 = vld [vmem:[%s8 + $0x60] sm:$0xf]
        %v1596 = vld [vmem:[%s8 + $0x64] sm:$0xf]
        %v1597 = vld [vmem:[%s8 + $0x68] sm:$0xf]
        %v1598 = vld [vmem:[%s8 + $0x6c] sm:$0xf]
        %v1599 = vld [vmem:[%s8 + $0x70] sm:$0xf]
        %v1600 = vld [vmem:[%s8 + $0x74] sm:$0xf]
        %v1601 = vld [vmem:[%s8 + $0x78] sm:$0xf]
        %v1602 = vld [vmem:[%s8 + $0x7c] sm:$0xf]
        %v1635 = vunpack.c.l.b16 %v1571
        %v1636 = vunpack.c.l.b16 %v1572
        %v1637 = vunpack.c.l.b16 %v1573
        %v1638 = vunpack.c.l.b16 %v1574
        %v1639 = vunpack.c.l.b16 %v1575
        %v1640 = vunpack.c.l.b16 %v1576
        %v1641 = vunpack.c.l.b16 %v1577
        %v1642 = vunpack.c.l.b16 %v1578
        %v1643 = vunpack.c.l.b16 %v1579
        %v1644 = vunpack.c.l.b16 %v1580
        %v1645 = vunpack.c.l.b16 %v1581
        %v1646 = vunpack.c.l.b16 %v1582
        %v1647 = vunpack.c.l.b16 %v1583
        %v1648 = vunpack.c.l.b16 %v1584
        %v1649 = vunpack.c.l.b16 %v1585
        %v1650 = vunpack.c.l.b16 %v1586
        %v1651 = vunpack.c.l.b16 %v1587
        %v1652 = vunpack.c.l.b16 %v1588
        %v1653 = vunpack.c.l.b16 %v1589
        %v1654 = vunpack.c.l.b16 %v1590
        %v1655 = vunpack.c.l.b16 %v1591
        %v1656 = vunpack.c.l.b16 %v1592
        %v1657 = vunpack.c.l.b16 %v1593
        %v1658 = vunpack.c.l.b16 %v1594
        %v1659 = vunpack.c.l.b16 %v1595
        %v1660 = vunpack.c.l.b16 %v1596
        %v1661 = vunpack.c.l.b16 %v1597
        %v1662 = vunpack.c.l.b16 %v1598
        %v1663 = vunpack.c.l.b16 %v1599
        %v1664 = vunpack.c.l.b16 %v1600
        %v1665 = vunpack.c.l.b16 %v1601
        %v1666 = vunpack.c.l.b16 %v1602
        %v1667 = vpack.c.b16 %v1636, %v1635
        %v1668 = vpack.c.b16 %v1638, %v1637
        %v1669 = vpack.c.b16 %v1640, %v1639
        %v1670 = vpack.c.b16 %v1642, %v1641
        %v1671 = vpack.c.b16 %v1644, %v1643
        %v1672 = vpack.c.b16 %v1646, %v1645
        %v1673 = vpack.c.b16 %v1648, %v1647
        %v1674 = vpack.c.b16 %v1650, %v1649
        %v1675 = vpack.c.b16 %v1652, %v1651
        %v1676 = vpack.c.b16 %v1654, %v1653
        %v1677 = vpack.c.b16 %v1656, %v1655
        %v1678 = vpack.c.b16 %v1658, %v1657
        %v1679 = vpack.c.b16 %v1660, %v1659
        %v1680 = vpack.c.b16 %v1662, %v1661
        %v1681 = vpack.c.b16 %v1664, %v1663
        %v1682 = vpack.c.b16 %v1666, %v1665
        %1699 = vmatprep.subr.bf16.mxu0 0
        %1700 = vmatpush1.bf16.msra.mxu0 %v1667
        %1701 = vmatprep.subr.bf16.mxu0 0
        %1702 = vmatpush1.bf16.msra.mxu0 %v1668
        %1703 = vmatprep.subr.bf16.mxu0 0
        %1704 = vmatpush1.bf16.msra.mxu0 %v1669
        %1705 = vmatprep.subr.bf16.mxu0 0
        %1706 = vmatpush1.bf16.msra.mxu0 %v1670
        %1707 = vmatprep.subr.bf16.mxu0 0
        %1708 = vmatpush1.bf16.msra.mxu0 %v1671
        %1709 = vmatprep.subr.bf16.mxu0 0
        %1710 = vmatpush1.bf16.msra.mxu0 %v1672
        %1711 = vmatprep.subr.bf16.mxu0 0
        %1712 = vmatpush1.bf16.msra.mxu0 %v1673
        %1713 = vmatprep.subr.bf16.mxu0 0
        %1714 = vmatpush1.bf16.msra.mxu0 %v1674
        %1715 = vmatprep.subr.bf16.mxu0 0
        %1716 = vmatpush1.bf16.msra.mxu0 %v1675
        %1717 = vmatprep.subr.bf16.mxu0 0
        %1718 = vmatpush1.bf16.msra.mxu0 %v1676
        %1719 = vmatprep.subr.bf16.mxu0 0
        %1720 = vmatpush1.bf16.msra.mxu0 %v1677
        %1721 = vmatprep.subr.bf16.mxu0 0
        %1722 = vmatpush1.bf16.msra.mxu0 %v1678
        %1723 = vmatprep.subr.bf16.mxu0 0
        %1724 = vmatpush1.bf16.msra.mxu0 %v1679
        %1725 = vmatprep.subr.bf16.mxu0 0
        %1726 = vmatpush1.bf16.msra.mxu0 %v1680
        %1727 = vmatprep.subr.bf16.mxu0 0
        %1728 = vmatpush1.bf16.msra.mxu0 %v1681
        %1729 = vmatprep.subr.bf16.mxu0 0
        %1730 = vmatpush1.bf16.msra.mxu0 %v1682
        %1731 = vmatprep.mubr.bf16.mxu0 %v1214
        %1732 = vmatmul.mubr.bf16.gmra.mrb[0].mxu0 %v1213
        %v1733 = vpop.f32.mrb[0].mxu0
        %v1734 = vadd.f32 0.0, %v1733
        %v1735 = vpop.f32.mrb[0].mxu0
        %v1736 = vpop.f32.mrb[0].mxu0
        %v1737 = vadd.f32 0.0, %v1736
        %v1738 = vpop.f32.mrb[0].mxu0
        %1739 = vmatprep.mubr.bf16.mxu0 %v1216
        %1740 = vmatmul.mubr.bf16.gmra.mrb[0].mxu0 %v1215
        %v1741 = vpop.f32.mrb[0].mxu0
        %v1742 = vadd.f32 0.0, %v1741
        %v1743 = vpop.f32.mrb[0].mxu0
        %v1744 = vpop.f32.mrb[0].mxu0
        %v1745 = vadd.f32 0.0, %v1744
        %v1746 = vpop.f32.mrb[0].mxu0
        %1747 = vdwg.mxu0
        %v1748 = vpack.c.bf16 %v1383, %v1380
        %v1749 = vpack.c.bf16 %v1391, %v1388
        %v1750 = vld [vmem:[%s9] sm:$0xff]
        %v1751 = vld [vmem:[%s10] sm:$0x3]
        %v1753 = vlaneseq
        %v1754 = vshrl.u32 %v1753, 7
        %v1755 = vsub.s32 0, %v1754
        %v1756 = vrot.slane %v1751, %v1755
        %v1757 = vlaneseq
        %v1758 = vshrl.u32 %v1757, 7
        %v1759 = vsub.s32 1, %v1758
        %v1760 = vrot.slane %v1751, %v1759
        %v1764 = vunpack.c.l.b16 %v1750
        %v1765 = vunpack.c.h.b16 %v1750
        %v1766 = vpack.c.b16 %v1764, %v1764
        %v1767 = vpack.c.b16 %v1765, %v1765
        %vm1768 = vcmask 64512
        %v1770 = vsel %vm1768, %v1748, 0
        %v1773 = vsel %vm1768, %v1749, 0
        %vm1775 = vcmask 1043456
        %v1777 = vsel %vm1775, %v1766, 0
        %v1780 = vsel %vm1775, %v1767, 0
        %1782 = vmatprep.subr.bf16.mxu0 %v1780
        %1783 = vmatpush1.bf16.msra.mxu0 %v1777
        %1784 = vmatprep.subr.bf16.mxu0 0
        %1785 = vmatpush1.bf16.msra.mxu0 0
        %1786 = vmatprep.subr.bf16.mxu0 0
        %1787 = vmatpush1.bf16.msra.mxu0 0
        %1788 = vmatprep.subr.bf16.mxu0 0
        %1789 = vmatpush1.bf16.msra.mxu0 0
        %1790 = vmatprep.subr.bf16.mxu0 0
        %1791 = vmatpush1.bf16.msra.mxu0 0
        %1792 = vmatprep.subr.bf16.mxu0 0
        %1793 = vmatpush1.bf16.msra.mxu0 0
        %1794 = vmatprep.subr.bf16.mxu0 0
        %1795 = vmatpush1.bf16.msra.mxu0 0
        %1796 = vmatprep.subr.bf16.mxu0 0
        %1797 = vmatpush1.bf16.msra.mxu0 0
        %1798 = vmatprep.subr.bf16.mxu0 0
        %1799 = vmatpush1.bf16.msra.mxu0 0
        %1800 = vmatprep.subr.bf16.mxu0 0
        %1801 = vmatpush1.bf16.msra.mxu0 0
        %1802 = vmatprep.subr.bf16.mxu0 0
        %1803 = vmatpush1.bf16.msra.mxu0 0
        %1804 = vmatprep.subr.bf16.mxu0 0
        %1805 = vmatpush1.bf16.msra.mxu0 0
        %1806 = vmatprep.subr.bf16.mxu0 0
        %1807 = vmatpush1.bf16.msra.mxu0 0
        %1808 = vmatprep.subr.bf16.mxu0 0
        %1809 = vmatpush1.bf16.msra.mxu0 0
        %1810 = vmatprep.subr.bf16.mxu0 0
        %1811 = vmatpush1.bf16.msra.mxu0 0
        %1812 = vmatprep.subr.bf16.mxu0 0
        %1813 = vmatpush1.bf16.msra.mxu0 0
        %1814 = vmatprep.mubr.bf16.mxu0 0
        %1815 = vmatmul.mubr.bf16.gmra.mrb[0].mxu0 %v1770
        %v1816 = vpop.f32.mrb[0].mxu0
        %v1817 = vadd.f32 %v1756, %v1816
        %v1818 = vpop.f32.mrb[0].mxu0
        %v1819 = vadd.f32 %v1760, %v1818
        %v1820 = vpop.f32.mrb[0].mxu0
        %v1821 = vadd.f32 %v1756, %v1820
        %v1822 = vpop.f32.mrb[0].mxu0
        %v1823 = vadd.f32 %v1760, %v1822
        %1824 = vmatprep.mubr.bf16.mxu0 0
        %1825 = vmatmul.mubr.bf16.gmra.mrb[0].mxu0 %v1773
        %v1826 = vpop.f32.mrb[0].mxu0
        %v1827 = vadd.f32 %v1756, %v1826
        %v1828 = vpop.f32.mrb[0].mxu0
        %v1829 = vadd.f32 %v1760, %v1828
        %v1830 = vpop.f32.mrb[0].mxu0
        %v1831 = vadd.f32 %v1756, %v1830
        %v1832 = vpop.f32.mrb[0].mxu0
        %v1833 = vadd.f32 %v1760, %v1832
        %1834 = vdwg.mxu0
        %v1835 = vmax.f32 %v1817, 0.0
        %v1836 = vmax.f32 %v1819, 0.0
        %v1837 = vmax.f32 %v1821, 0.0
        %v1838 = vmax.f32 %v1823, 0.0
        %v1839 = vmax.f32 %v1827, 0.0
        %v1840 = vmax.f32 %v1829, 0.0
        %v1841 = vmax.f32 %v1831, 0.0
        %v1842 = vmax.f32 %v1833, 0.0
        %vm1843 = vcmp.ne.f32.partialorder %v1817, %v1817
        %vm1844 = vcmp.ne.f32.partialorder %v1819, %v1819
        %vm1845 = vcmp.ne.f32.partialorder %v1821, %v1821
        %vm1846 = vcmp.ne.f32.partialorder %v1823, %v1823
        %vm1847 = vcmp.ne.f32.partialorder %v1827, %v1827
        %vm1848 = vcmp.ne.f32.partialorder %v1829, %v1829
        %vm1849 = vcmp.ne.f32.partialorder %v1831, %v1831
        %vm1850 = vcmp.ne.f32.partialorder %v1833, %v1833
        %v1851 = vadd.f32 %v1817, 0.0
        %v1852 = vadd.f32 %v1819, 0.0
        %v1853 = vadd.f32 %v1821, 0.0
        %v1854 = vadd.f32 %v1823, 0.0
        %v1855 = vadd.f32 %v1827, 0.0
        %v1856 = vadd.f32 %v1829, 0.0
        %v1857 = vadd.f32 %v1831, 0.0
        %v1858 = vadd.f32 %v1833, 0.0
        %v1859 = vand.u32 2147483647, %v1817
        %v1860 = vand.u32 2147483647, %v1819
        %v1861 = vand.u32 2147483647, %v1821
        %v1862 = vand.u32 2147483647, %v1823
        %v1863 = vand.u32 2147483647, %v1827
        %v1864 = vand.u32 2147483647, %v1829
        %v1865 = vand.u32 2147483647, %v1831
        %v1866 = vand.u32 2147483647, %v1833
        %v1867 = vsub.f32 0.0, %v1859
        %v1868 = vsub.f32 0.0, %v1860
        %v1869 = vsub.f32 0.0, %v1861
        %v1870 = vsub.f32 0.0, %v1862
        %v1871 = vsub.f32 0.0, %v1863
        %v1872 = vsub.f32 0.0, %v1864
        %v1873 = vsub.f32 0.0, %v1865
        %v1874 = vsub.f32 0.0, %v1866
        %v1875 = vmul.f32 %v1867, 1.442695
        %v1876 = vpow.pop %v1875
        %v1877 = vmul.f32 %v1868, 1.442695
        %v1878 = vpow.pop %v1877
        %v1879 = vmul.f32 %v1869, 1.442695
        %v1880 = vpow.pop %v1879
        %v1881 = vmul.f32 %v1870, 1.442695
        %v1882 = vpow.pop %v1881
        %v1883 = vmul.f32 %v1871, 1.442695
        %v1884 = vpow.pop %v1883
        %v1885 = vmul.f32 %v1872, 1.442695
        %v1886 = vpow.pop %v1885
        %v1887 = vmul.f32 %v1873, 1.442695
        %v1888 = vpow.pop %v1887
        %v1889 = vmul.f32 %v1874, 1.442695
        %v1890 = vpow.pop %v1889
        %v1891 = vadd.f32 %v1876, 1.0
        %v1892 = vlog2.pop %v1891
        %v1893 = vmul.f32 %v1892, 0.6931472
        %v1894 = vmul.f32 -0.5, %v1876
        %v1895 = vadd.f32 %v1894, 1.0
        %v1896 = vmul.f32 %v1895, %v1876
        %v1897 = vand.u32 2147483647, %v1876
        %vm1898 = vcmp.lt.f32.partialorder %v1897, 0.0004427343
        %v1899 = vsel %vm1898, %v1896, %v1893
        %v1900 = vadd.f32 %v1878, 1.0
        %v1901 = vlog2.pop %v1900
        %v1902 = vmul.f32 %v1901, 0.6931472
        %v1903 = vmul.f32 -0.5, %v1878
        %v1904 = vadd.f32 %v1903, 1.0
        %v1905 = vmul.f32 %v1904, %v1878
        %v1906 = vand.u32 2147483647, %v1878
        %vm1907 = vcmp.lt.f32.partialorder %v1906, 0.0004427343
        %v1908 = vsel %vm1907, %v1905, %v1902
        %v1909 = vadd.f32 %v1880, 1.0
        %v1910 = vlog2.pop %v1909
        %v1911 = vmul.f32 %v1910, 0.6931472
        %v1912 = vmul.f32 -0.5, %v1880
        %v1913 = vadd.f32 %v1912, 1.0
        %v1914 = vmul.f32 %v1913, %v1880
        %v1915 = vand.u32 2147483647, %v1880
        %vm1916 = vcmp.lt.f32.partialorder %v1915, 0.0004427343
        %v1917 = vsel %vm1916, %v1914, %v1911
        %v1918 = vadd.f32 %v1882, 1.0
        %v1919 = vlog2.pop %v1918
        %v1920 = vmul.f32 %v1919, 0.6931472
        %v1921 = vmul.f32 -0.5, %v1882
        %v1922 = vadd.f32 %v1921, 1.0
        %v1923 = vmul.f32 %v1922, %v1882
        %v1924 = vand.u32 2147483647, %v1882
        %vm1925 = vcmp.lt.f32.partialorder %v1924, 0.0004427343
        %v1926 = vsel %vm1925, %v1923, %v1920
        %v1927 = vadd.f32 %v1884, 1.0
        %v1928 = vlog2.pop %v1927
        %v1929 = vmul.f32 %v1928, 0.6931472
        %v1930 = vmul.f32 -0.5, %v1884
        %v1931 = vadd.f32 %v1930, 1.0
        %v1932 = vmul.f32 %v1931, %v1884
        %v1933 = vand.u32 2147483647, %v1884
        %vm1934 = vcmp.lt.f32.partialorder %v1933, 0.0004427343
        %v1935 = vsel %vm1934, %v1932, %v1929
        %v1936 = vadd.f32 %v1886, 1.0
        %v1937 = vlog2.pop %v1936
        %v1938 = vmul.f32 %v1937, 0.6931472
        %v1939 = vmul.f32 -0.5, %v1886
        %v1940 = vadd.f32 %v1939, 1.0
        %v1941 = vmul.f32 %v1940, %v1886
        %v1942 = vand.u32 2147483647, %v1886
        %vm1943 = vcmp.lt.f32.partialorder %v1942, 0.0004427343
        %v1944 = vsel %vm1943, %v1941, %v1938
        %v1945 = vadd.f32 %v1888, 1.0
        %v1946 = vlog2.pop %v1945
        %v1947 = vmul.f32 %v1946, 0.6931472
        %v1948 = vmul.f32 -0.5, %v1888
        %v1949 = vadd.f32 %v1948, 1.0
        %v1950 = vmul.f32 %v1949, %v1888
        %v1951 = vand.u32 2147483647, %v1888
        %vm1952 = vcmp.lt.f32.partialorder %v1951, 0.0004427343
        %v1953 = vsel %vm1952, %v1950, %v1947
        %v1954 = vadd.f32 %v1890, 1.0
        %v1955 = vlog2.pop %v1954
        %v1956 = vmul.f32 %v1955, 0.6931472
        %v1957 = vmul.f32 -0.5, %v1890
        %v1958 = vadd.f32 %v1957, 1.0
        %v1959 = vmul.f32 %v1958, %v1890
        %v1960 = vand.u32 2147483647, %v1890
        %vm1961 = vcmp.lt.f32.partialorder %v1960, 0.0004427343
        %v1962 = vsel %vm1961, %v1959, %v1956
        %v1963 = vadd.f32 %v1835, %v1899
        %v1964 = vadd.f32 %v1836, %v1908
        %v1965 = vadd.f32 %v1837, %v1917
        %v1966 = vadd.f32 %v1838, %v1926
        %v1967 = vadd.f32 %v1839, %v1935
        %v1968 = vadd.f32 %v1840, %v1944
        %v1969 = vadd.f32 %v1841, %v1953
        %v1970 = vadd.f32 %v1842, %v1962
        %v1971 = vsel %vm1843, %v1851, %v1963
        %v1972 = vsel %vm1844, %v1852, %v1964
        %v1973 = vsel %vm1845, %v1853, %v1965
        %v1974 = vsel %vm1846, %v1854, %v1966
        %v1975 = vsel %vm1847, %v1855, %v1967
        %v1976 = vsel %vm1848, %v1856, %v1968
        %v1977 = vsel %vm1849, %v1857, %v1969
        %v1978 = vsel %vm1850, %v1858, %v1970
        %1979 = vst [vmem:[#allocation2] sm:$0xff] %v1971
        %1980 = vst [vmem:[#allocation2 + $0x8] sm:$0xff] %v1972
        %1981 = vst [vmem:[#allocation2 + $0x10] sm:$0xff] %v1973
        %1982 = vst [vmem:[#allocation2 + $0x18] sm:$0xff] %v1974
        %1983 = vst [vmem:[#allocation2 + $0x20] sm:$0xff] %v1975
        %1984 = vst [vmem:[#allocation2 + $0x28] sm:$0xff] %v1976
        %1985 = vst [vmem:[#allocation2 + $0x30] sm:$0xff] %v1977
        %1986 = vst [vmem:[#allocation2 + $0x38] sm:$0xff] %v1978
        %v1987 = vmul.f32 %v1971, %v1205
        %v1988 = vmul.f32 %v1972, %v1206
        %v1989 = vmul.f32 %v1973, %v1207
        %v1990 = vmul.f32 %v1974, %v1208
        %v1991 = vmul.f32 %v1975, %v1209
        %v1992 = vmul.f32 %v1976, %v1210
        %v1993 = vmul.f32 %v1977, %v1211
        %v1994 = vmul.f32 %v1978, %v1212
        %1995 = vst [vmem:[#allocation3] sm:$0xff] %v1987
        %1996 = vst [vmem:[#allocation3 + $0x8] sm:$0xff] %v1988
        %1997 = vst [vmem:[#allocation3 + $0x10] sm:$0xff] %v1989
        %1998 = vst [vmem:[#allocation3 + $0x18] sm:$0xff] %v1990
        %1999 = vst [vmem:[#allocation3 + $0x20] sm:$0xff] %v1991
        %2000 = vst [vmem:[#allocation3 + $0x28] sm:$0xff] %v1992
        %2001 = vst [vmem:[#allocation3 + $0x30] sm:$0xff] %v1993
        %2002 = vst [vmem:[#allocation3 + $0x38] sm:$0xff] %v1994
        %vm2003 = vcmask 130048
        %2004 = vst.msk [vmem:[#allocation4] sm:$0xff] %vm2003, %v1557
        %2005 = vst.msk [vmem:[#allocation4 + $0x8] sm:$0xff] %vm2003, %v1560
        %2006 = vst.msk [vmem:[#allocation4 + $0x10] sm:$0xff] %vm2003, %v1565
        %2007 = vst.msk [vmem:[#allocation4 + $0x18] sm:$0xff] %vm2003, %v1568
        %2008 = vst.msk [vmem:[#allocation5] sm:$0xff] %vm2003, %v1734
        %2009 = vst.msk [vmem:[#allocation5 + $0x8] sm:$0xff] %vm2003, %v1737
        %2010 = vst.msk [vmem:[#allocation5 + $0x10] sm:$0xff] %vm2003, %v1742
        %2011 = vst.msk [vmem:[#allocation5 + $0x18] sm:$0xff] %vm2003, %v1745
        %v2012 = vld [vmem:[%s11] sm:$0xff]
        %v2013 = vld [vmem:[%s11 + $0x8] sm:$0xff]
        %v2014 = vld [vmem:[%s11 + $0x10] sm:$0xff]
        %v2015 = vld [vmem:[%s11 + $0x18] sm:$0xff]
        loop: start=0, step=1, limit=2
        $region85: #{tpu_custom_call.1} parent=75 // loop_pre_header
          _
        $region86: #{tpu_custom_call.1} parent=75 // loop_header
          %s2017 = sphi 0, %s2021
          %p2018 = scmp.ge.s32.totalorder %s2017, 2
          %v2022 = vphi 0.0, %v2616
          %v2023 = vphi 0.0, %v2617
          %v2024 = vphi 0.0, %v2618
          %v2025 = vphi 0.0, %v2619
        $region87: #{tpu_custom_call.1} parent=75 // loop_header_branch
          %2020 = sbr.rel (%p2018) target = $region91
        $region88: #{tpu_custom_call.1} parent=75 // loop_body
          %s2026 = smul.u32 %s2017, 8
          %s2027 = sshra.s32 %s2026, 3
          %s2028 = sand.u32 %s2026, 7
          %s2029 = smul.u32 %s2027, 2
          %s2030 = smul.addr %s2029, 8
          %s2031 = scalar_lea.vmem [#allocation2], %s2030
          %v2032 = vld [vmem:[%s2031] sm:$0xff]
          %v2033 = vld [vmem:[%s2031 + $0x8] sm:$0xff]
          %s2034 = smul.addr %s2029, 8
          %s2035 = scalar_lea.vmem [#allocation3], %s2034
          %v2036 = vld [vmem:[%s2035] sm:$0xff]
          %v2037 = vld [vmem:[%s2035 + $0x8] sm:$0xff]
          %s2038 = scalar_lea.vmem [#allocation4], %s2026
          %v2039 = vld [vmem:[%s2038] sm:$0xff]
          %s2040 = scalar_lea.vmem [#allocation5], %s2026
          %v2041 = vld [vmem:[%s2040] sm:$0xff]
          %v2044 = vcombine.low %v2032, %v2033
          %v2045 = vcombine.high %v2032, %v2033
          %v2047 = vunpack.c.l.s4 1966171168
          %v2048 = vunpack.c.0.s8 %v2047
          %v2049 = vlaneseq
          %v2050 = vshrl.u32 %v2049, 7
          %v2051 = vsub.s32 %v2048, %v2050
          %v2052 = vrot.slane %v2044, %v2051
          %v2054 = vunpack.c.l.s4 1966171168
          %v2055 = vunpack.c.0.s8 %v2054
          %v2056 = vlaneseq
          %v2057 = vshrl.u32 %v2056, 7
          %v2058 = vsub.s32 %v2055, %v2057
          %v2059 = vrot.slane %v2045, %v2058
          %v2060 = vcombine.high %v2052, %v2052
          %v2061 = vcombine.high %v2059, %v2059
          %v2063 = vunpack.c.l.s4 1966171168
          %v2064 = vunpack.c.0.s8 %v2063
          %v2065 = vlaneseq
          %v2066 = vshrl.u32 %v2065, 7
          %v2067 = vsub.s32 %v2064, %v2066
          %v2068 = vrot.slane %v2052, %v2067
          %v2070 = vunpack.c.l.s4 1966171168
          %v2071 = vunpack.c.0.s8 %v2070
          %v2072 = vlaneseq
          %v2073 = vshrl.u32 %v2072, 7
          %v2074 = vsub.s32 %v2071, %v2073
          %v2075 = vrot.slane %v2059, %v2074
          %v2077 = vunpack.c.l.s4 1966171168
          %v2078 = vunpack.c.0.s8 %v2077
          %v2079 = vlaneseq
          %v2080 = vshrl.u32 %v2079, 7
          %v2081 = vsub.s32 %v2078, %v2080
          %v2082 = vrot.slane %v2060, %v2081
          %v2084 = vunpack.c.l.s4 1966171168
          %v2085 = vunpack.c.0.s8 %v2084
          %v2086 = vlaneseq
          %v2087 = vshrl.u32 %v2086, 7
          %v2088 = vsub.s32 %v2085, %v2087
          %v2089 = vrot.slane %v2061, %v2088
          %v2090 = vcombine.high %v2068, %v2068
          %v2091 = vcombine.high %v2075, %v2075
          %v2092 = vcombine.high %v2082, %v2082
          %v2093 = vcombine.high %v2089, %v2089
          %v2094 = vlaneseq
          %v2095 = vshrl.u32 %v2094, 7
          %v2096 = vsub.s32 0, %v2095
          %v2097 = vrot.slane %v2068, %v2096
          %v2098 = vlaneseq
          %v2099 = vshrl.u32 %v2098, 7
          %v2100 = vsub.s32 1, %v2099
          %v2101 = vrot.slane %v2068, %v2100
          %v2102 = vlaneseq
          %v2103 = vshrl.u32 %v2102, 7
          %v2104 = vsub.s32 0, %v2103
          %v2105 = vrot.slane %v2082, %v2104
          %v2106 = vlaneseq
          %v2107 = vshrl.u32 %v2106, 7
          %v2108 = vsub.s32 1, %v2107
          %v2109 = vrot.slane %v2082, %v2108
          %v2110 = vlaneseq
          %v2111 = vshrl.u32 %v2110, 7
          %v2112 = vsub.s32 0, %v2111
          %v2113 = vrot.slane %v2090, %v2112
          %v2114 = vlaneseq
          %v2115 = vshrl.u32 %v2114, 7
          %v2116 = vsub.s32 1, %v2115
          %v2117 = vrot.slane %v2090, %v2116
          %v2118 = vlaneseq
          %v2119 = vshrl.u32 %v2118, 7
          %v2120 = vsub.s32 0, %v2119
          %v2121 = vrot.slane %v2092, %v2120
          %v2122 = vlaneseq
          %v2123 = vshrl.u32 %v2122, 7
          %v2124 = vsub.s32 1, %v2123
          %v2125 = vrot.slane %v2092, %v2124
          %v2126 = vlaneseq
          %v2127 = vshrl.u32 %v2126, 7
          %v2128 = vsub.s32 0, %v2127
          %v2129 = vrot.slane %v2075, %v2128
          %v2130 = vlaneseq
          %v2131 = vshrl.u32 %v2130, 7
          %v2132 = vsub.s32 1, %v2131
          %v2133 = vrot.slane %v2075, %v2132
          %v2134 = vlaneseq
          %v2135 = vshrl.u32 %v2134, 7
          %v2136 = vsub.s32 0, %v2135
          %v2137 = vrot.slane %v2089, %v2136
          %v2138 = vlaneseq
          %v2139 = vshrl.u32 %v2138, 7
          %v2140 = vsub.s32 1, %v2139
          %v2141 = vrot.slane %v2089, %v2140
          %v2142 = vlaneseq
          %v2143 = vshrl.u32 %v2142, 7
          %v2144 = vsub.s32 0, %v2143
          %v2145 = vrot.slane %v2091, %v2144
          %v2146 = vlaneseq
          %v2147 = vshrl.u32 %v2146, 7
          %v2148 = vsub.s32 1, %v2147
          %v2149 = vrot.slane %v2091, %v2148
          %v2150 = vlaneseq
          %v2151 = vshrl.u32 %v2150, 7
          %v2152 = vsub.s32 0, %v2151
          %v2153 = vrot.slane %v2093, %v2152
          %v2154 = vlaneseq
          %v2155 = vshrl.u32 %v2154, 7
          %v2156 = vsub.s32 1, %v2155
          %v2157 = vrot.slane %v2093, %v2156
          %v2174 = vmul.f32 %v2097, %v2012
          %v2175 = vmul.f32 %v2101, %v2013
          %v2176 = vmul.f32 %v2097, %v2014
          %v2177 = vmul.f32 %v2101, %v2015
          %v2178 = vmul.f32 %v2105, %v2012
          %v2179 = vmul.f32 %v2109, %v2013
          %v2180 = vmul.f32 %v2105, %v2014
          %v2181 = vmul.f32 %v2109, %v2015
          %v2182 = vmul.f32 %v2113, %v2012
          %v2183 = vmul.f32 %v2117, %v2013
          %v2184 = vmul.f32 %v2113, %v2014
          %v2185 = vmul.f32 %v2117, %v2015
          %v2186 = vmul.f32 %v2121, %v2012
          %v2187 = vmul.f32 %v2125, %v2013
          %v2188 = vmul.f32 %v2121, %v2014
          %v2189 = vmul.f32 %v2125, %v2015
          %v2190 = vmul.f32 %v2129, %v2012
          %v2191 = vmul.f32 %v2133, %v2013
          %v2192 = vmul.f32 %v2129, %v2014
          %v2193 = vmul.f32 %v2133, %v2015
          %v2194 = vmul.f32 %v2137, %v2012
          %v2195 = vmul.f32 %v2141, %v2013
          %v2196 = vmul.f32 %v2137, %v2014
          %v2197 = vmul.f32 %v2141, %v2015
          %v2198 = vmul.f32 %v2145, %v2012
          %v2199 = vmul.f32 %v2149, %v2013
          %v2200 = vmul.f32 %v2145, %v2014
          %v2201 = vmul.f32 %v2149, %v2015
          %v2202 = vmul.f32 %v2153, %v2012
          %v2203 = vmul.f32 %v2157, %v2013
          %v2204 = vmul.f32 %v2153, %v2014
          %v2205 = vmul.f32 %v2157, %v2015
          %v2206 = vmul.f32 %v2174, 1.442695
          %v2207 = vpow.pop %v2206
          %v2208 = vmul.f32 %v2175, 1.442695
          %v2209 = vpow.pop %v2208
          %v2210 = vmul.f32 %v2176, 1.442695
          %v2211 = vpow.pop %v2210
          %v2212 = vmul.f32 %v2177, 1.442695
          %v2213 = vpow.pop %v2212
          %v2214 = vmul.f32 %v2178, 1.442695
          %v2215 = vpow.pop %v2214
          %v2216 = vmul.f32 %v2179, 1.442695
          %v2217 = vpow.pop %v2216
          %v2218 = vmul.f32 %v2180, 1.442695
          %v2219 = vpow.pop %v2218
          %v2220 = vmul.f32 %v2181, 1.442695
          %v2221 = vpow.pop %v2220
          %v2222 = vmul.f32 %v2182, 1.442695
          %v2223 = vpow.pop %v2222
          %v2224 = vmul.f32 %v2183, 1.442695
          %v2225 = vpow.pop %v2224
          %v2226 = vmul.f32 %v2184, 1.442695
          %v2227 = vpow.pop %v2226
          %v2228 = vmul.f32 %v2185, 1.442695
          %v2229 = vpow.pop %v2228
          %v2230 = vmul.f32 %v2186, 1.442695
          %v2231 = vpow.pop %v2230
          %v2232 = vmul.f32 %v2187, 1.442695
          %v2233 = vpow.pop %v2232
          %v2234 = vmul.f32 %v2188, 1.442695
          %v2235 = vpow.pop %v2234
          %v2236 = vmul.f32 %v2189, 1.442695
          %v2237 = vpow.pop %v2236
          %v2238 = vmul.f32 %v2190, 1.442695
          %v2239 = vpow.pop %v2238
          %v2240 = vmul.f32 %v2191, 1.442695
          %v2241 = vpow.pop %v2240
          %v2242 = vmul.f32 %v2192, 1.442695
          %v2243 = vpow.pop %v2242
          %v2244 = vmul.f32 %v2193, 1.442695
          %v2245 = vpow.pop %v2244
          %v2246 = vmul.f32 %v2194, 1.442695
          %v2247 = vpow.pop %v2246
          %v2248 = vmul.f32 %v2195, 1.442695
          %v2249 = vpow.pop %v2248
          %v2250 = vmul.f32 %v2196, 1.442695
          %v2251 = vpow.pop %v2250
          %v2252 = vmul.f32 %v2197, 1.442695
          %v2253 = vpow.pop %v2252
          %v2254 = vmul.f32 %v2198, 1.442695
          %v2255 = vpow.pop %v2254
          %v2256 = vmul.f32 %v2199, 1.442695
          %v2257 = vpow.pop %v2256
          %v2258 = vmul.f32 %v2200, 1.442695
          %v2259 = vpow.pop %v2258
          %v2260 = vmul.f32 %v2201, 1.442695
          %v2261 = vpow.pop %v2260
          %v2262 = vmul.f32 %v2202, 1.442695
          %v2263 = vpow.pop %v2262
          %v2264 = vmul.f32 %v2203, 1.442695
          %v2265 = vpow.pop %v2264
          %v2266 = vmul.f32 %v2204, 1.442695
          %v2267 = vpow.pop %v2266
          %v2268 = vmul.f32 %v2205, 1.442695
          %v2269 = vpow.pop %v2268
          %v2272 = vcombine.low %v2036, %v2037
          %v2273 = vcombine.high %v2036, %v2037
          %v2275 = vunpack.c.l.s4 1966171168
          %v2276 = vunpack.c.0.s8 %v2275
          %v2277 = vlaneseq
          %v2278 = vshrl.u32 %v2277, 7
          %v2279 = vsub.s32 %v2276, %v2278
          %v2280 = vrot.slane %v2272, %v2279
          %v2282 = vunpack.c.l.s4 1966171168
          %v2283 = vunpack.c.0.s8 %v2282
          %v2284 = vlaneseq
          %v2285 = vshrl.u32 %v2284, 7
          %v2286 = vsub.s32 %v2283, %v2285
          %v2287 = vrot.slane %v2273, %v2286
          %v2288 = vcombine.high %v2280, %v2280
          %v2289 = vcombine.high %v2287, %v2287
          %v2291 = vunpack.c.l.s4 1966171168
          %v2292 = vunpack.c.0.s8 %v2291
          %v2293 = vlaneseq
          %v2294 = vshrl.u32 %v2293, 7
          %v2295 = vsub.s32 %v2292, %v2294
          %v2296 = vrot.slane %v2280, %v2295
          %v2298 = vunpack.c.l.s4 1966171168
          %v2299 = vunpack.c.0.s8 %v2298
          %v2300 = vlaneseq
          %v2301 = vshrl.u32 %v2300, 7
          %v2302 = vsub.s32 %v2299, %v2301
          %v2303 = vrot.slane %v2287, %v2302
          %v2305 = vunpack.c.l.s4 1966171168
          %v2306 = vunpack.c.0.s8 %v2305
          %v2307 = vlaneseq
          %v2308 = vshrl.u32 %v2307, 7
          %v2309 = vsub.s32 %v2306, %v2308
          %v2310 = vrot.slane %v2288, %v2309
          %v2312 = vunpack.c.l.s4 1966171168
          %v2313 = vunpack.c.0.s8 %v2312
          %v2314 = vlaneseq
          %v2315 = vshrl.u32 %v2314, 7
          %v2316 = vsub.s32 %v2313, %v2315
          %v2317 = vrot.slane %v2289, %v2316
          %v2318 = vcombine.high %v2296, %v2296
          %v2319 = vcombine.high %v2303, %v2303
          %v2320 = vcombine.high %v2310, %v2310
          %v2321 = vcombine.high %v2317, %v2317
          %v2322 = vlaneseq
          %v2323 = vshrl.u32 %v2322, 7
          %v2324 = vsub.s32 0, %v2323
          %v2325 = vrot.slane %v2039, %v2324
          %2327 = vbcast.lane.b32.xlu0 %v2325, 256
          %v2328 = vpop.permute.xlu0 %2327
          %s2330 = sor.u32 256, 8
          %2331 = vbcast.lane.b32.xlu0 %v2325, %s2330
          %v2332 = vpop.permute.xlu0 %2331
          %v2333 = vlaneseq
          %v2334 = vshrl.u32 %v2333, 7
          %v2335 = vsub.s32 1, %v2334
          %v2336 = vrot.slane %v2039, %v2335
          %2338 = vbcast.lane.b32.xlu0 %v2336, 256
          %v2339 = vpop.permute.xlu0 %2338
          %s2341 = sor.u32 256, 8
          %2342 = vbcast.lane.b32.xlu0 %v2336, %s2341
          %v2343 = vpop.permute.xlu0 %2342
          %v2344 = vlaneseq
          %v2345 = vshrl.u32 %v2344, 7
          %v2346 = vsub.s32 2, %v2345
          %v2347 = vrot.slane %v2039, %v2346
          %2349 = vbcast.lane.b32.xlu0 %v2347, 256
          %v2350 = vpop.permute.xlu0 %2349
          %s2352 = sor.u32 256, 8
          %2353 = vbcast.lane.b32.xlu0 %v2347, %s2352
          %v2354 = vpop.permute.xlu0 %2353
          %v2355 = vlaneseq
          %v2356 = vshrl.u32 %v2355, 7
          %v2357 = vsub.s32 3, %v2356
          %v2358 = vrot.slane %v2039, %v2357
          %2360 = vbcast.lane.b32.xlu0 %v2358, 256
          %v2361 = vpop.permute.xlu0 %2360
          %s2363 = sor.u32 256, 8
          %2364 = vbcast.lane.b32.xlu0 %v2358, %s2363
          %v2365 = vpop.permute.xlu0 %2364
          %v2366 = vlaneseq
          %v2367 = vshrl.u32 %v2366, 7
          %v2368 = vsub.s32 4, %v2367
          %v2369 = vrot.slane %v2039, %v2368
          %2371 = vbcast.lane.b32.xlu0 %v2369, 256
          %v2372 = vpop.permute.xlu0 %2371
          %s2374 = sor.u32 256, 8
          %2375 = vbcast.lane.b32.xlu0 %v2369, %s2374
          %v2376 = vpop.permute.xlu0 %2375
          %v2377 = vlaneseq
          %v2378 = vshrl.u32 %v2377, 7
          %v2379 = vsub.s32 5, %v2378
          %v2380 = vrot.slane %v2039, %v2379
          %2382 = vbcast.lane.b32.xlu0 %v2380, 256
          %v2383 = vpop.permute.xlu0 %2382
          %s2385 = sor.u32 256, 8
          %2386 = vbcast.lane.b32.xlu0 %v2380, %s2385
          %v2387 = vpop.permute.xlu0 %2386
          %v2388 = vlaneseq
          %v2389 = vshrl.u32 %v2388, 7
          %v2390 = vsub.s32 6, %v2389
          %v2391 = vrot.slane %v2039, %v2390
          %2393 = vbcast.lane.b32.xlu0 %v2391, 256
          %v2394 = vpop.permute.xlu0 %2393
          %s2396 = sor.u32 256, 8
          %2397 = vbcast.lane.b32.xlu0 %v2391, %s2396
          %v2398 = vpop.permute.xlu0 %2397
          %v2399 = vlaneseq
          %v2400 = vshrl.u32 %v2399, 7
          %v2401 = vsub.s32 7, %v2400
          %v2402 = vrot.slane %v2039, %v2401
          %2404 = vbcast.lane.b32.xlu0 %v2402, 256
          %v2405 = vpop.permute.xlu0 %2404
          %s2407 = sor.u32 256, 8
          %2408 = vbcast.lane.b32.xlu0 %v2402, %s2407
          %v2409 = vpop.permute.xlu0 %2408
          %v2410 = vlaneseq
          %v2411 = vshrl.u32 %v2410, 7
          %v2412 = vsub.s32 0, %v2411
          %v2413 = vrot.slane %v2296, %v2412
          %v2414 = vlaneseq
          %v2415 = vshrl.u32 %v2414, 7
          %v2416 = vsub.s32 1, %v2415
          %v2417 = vrot.slane %v2296, %v2416
          %v2418 = vlaneseq
          %v2419 = vshrl.u32 %v2418, 7
          %v2420 = vsub.s32 0, %v2419
          %v2421 = vrot.slane %v2310, %v2420
          %v2422 = vlaneseq
          %v2423 = vshrl.u32 %v2422, 7
          %v2424 = vsub.s32 1, %v2423
          %v2425 = vrot.slane %v2310, %v2424
          %v2426 = vlaneseq
          %v2427 = vshrl.u32 %v2426, 7
          %v2428 = vsub.s32 0, %v2427
          %v2429 = vrot.slane %v2318, %v2428
          %v2430 = vlaneseq
          %v2431 = vshrl.u32 %v2430, 7
          %v2432 = vsub.s32 1, %v2431
          %v2433 = vrot.slane %v2318, %v2432
          %v2434 = vlaneseq
          %v2435 = vshrl.u32 %v2434, 7
          %v2436 = vsub.s32 0, %v2435
          %v2437 = vrot.slane %v2320, %v2436
          %v2438 = vlaneseq
          %v2439 = vshrl.u32 %v2438, 7
          %v2440 = vsub.s32 1, %v2439
          %v2441 = vrot.slane %v2320, %v2440
          %v2442 = vlaneseq
          %v2443 = vshrl.u32 %v2442, 7
          %v2444 = vsub.s32 0, %v2443
          %v2445 = vrot.slane %v2303, %v2444
          %v2446 = vlaneseq
          %v2447 = vshrl.u32 %v2446, 7
          %v2448 = vsub.s32 1, %v2447
          %v2449 = vrot.slane %v2303, %v2448
          %v2450 = vlaneseq
          %v2451 = vshrl.u32 %v2450, 7
          %v2452 = vsub.s32 0, %v2451
          %v2453 = vrot.slane %v2317, %v2452
          %v2454 = vlaneseq
          %v2455 = vshrl.u32 %v2454, 7
          %v2456 = vsub.s32 1, %v2455
          %v2457 = vrot.slane %v2317, %v2456
          %v2458 = vlaneseq
          %v2459 = vshrl.u32 %v2458, 7
          %v2460 = vsub.s32 0, %v2459
          %v2461 = vrot.slane %v2319, %v2460
          %v2462 = vlaneseq
          %v2463 = vshrl.u32 %v2462, 7
          %v2464 = vsub.s32 1, %v2463
          %v2465 = vrot.slane %v2319, %v2464
          %v2466 = vlaneseq
          %v2467 = vshrl.u32 %v2466, 7
          %v2468 = vsub.s32 0, %v2467
          %v2469 = vrot.slane %v2321, %v2468
          %v2470 = vlaneseq
          %v2471 = vshrl.u32 %v2470, 7
          %v2472 = vsub.s32 1, %v2471
          %v2473 = vrot.slane %v2321, %v2472
          %v2490 = vmul.f32 %v2413, %v2328
          %v2491 = vmul.f32 %v2417, %v2328
          %v2492 = vmul.f32 %v2413, %v2332
          %v2493 = vmul.f32 %v2417, %v2332
          %v2494 = vmul.f32 %v2421, %v2339
          %v2495 = vmul.f32 %v2425, %v2339
          %v2496 = vmul.f32 %v2421, %v2343
          %v2497 = vmul.f32 %v2425, %v2343
          %v2498 = vmul.f32 %v2429, %v2350
          %v2499 = vmul.f32 %v2433, %v2350
          %v2500 = vmul.f32 %v2429, %v2354
          %v2501 = vmul.f32 %v2433, %v2354
          %v2502 = vmul.f32 %v2437, %v2361
          %v2503 = vmul.f32 %v2441, %v2361
          %v2504 = vmul.f32 %v2437, %v2365
          %v2505 = vmul.f32 %v2441, %v2365
          %v2506 = vmul.f32 %v2445, %v2372
          %v2507 = vmul.f32 %v2449, %v2372
          %v2508 = vmul.f32 %v2445, %v2376
          %v2509 = vmul.f32 %v2449, %v2376
          %v2510 = vmul.f32 %v2453, %v2383
          %v2511 = vmul.f32 %v2457, %v2383
          %v2512 = vmul.f32 %v2453, %v2387
          %v2513 = vmul.f32 %v2457, %v2387
          %v2514 = vmul.f32 %v2461, %v2394
          %v2515 = vmul.f32 %v2465, %v2394
          %v2516 = vmul.f32 %v2461, %v2398
          %v2517 = vmul.f32 %v2465, %v2398
          %v2518 = vmul.f32 %v2469, %v2405
          %v2519 = vmul.f32 %v2473, %v2405
          %v2520 = vmul.f32 %v2469, %v2409
          %v2521 = vmul.f32 %v2473, %v2409
          %v2522 = vmul.f32 %v2207, %v2022
          %v2523 = vmul.f32 %v2209, %v2023
          %v2524 = vmul.f32 %v2211, %v2024
          %v2525 = vmul.f32 %v2213, %v2025
          %v2526 = vadd.f32 %v2522, %v2490
          %v2527 = vadd.f32 %v2523, %v2491
          %v2528 = vadd.f32 %v2524, %v2492
          %v2529 = vadd.f32 %v2525, %v2493
          %2530 = vst [vmem:[#allocation6] sm:$0xff] %v2526
          %2531 = vst [vmem:[#allocation6 + $0x8] sm:$0xff] %v2527
          %2532 = vst [vmem:[#allocation6 + $0x10] sm:$0xff] %v2528
          %2533 = vst [vmem:[#allocation6 + $0x18] sm:$0xff] %v2529
          %v2534 = vmul.f32 %v2215, %v2526
          %v2535 = vmul.f32 %v2217, %v2527
          %v2536 = vmul.f32 %v2219, %v2528
          %v2537 = vmul.f32 %v2221, %v2529
          %v2538 = vadd.f32 %v2534, %v2494
          %v2539 = vadd.f32 %v2535, %v2495
          %v2540 = vadd.f32 %v2536, %v2496
          %v2541 = vadd.f32 %v2537, %v2497
          %s2542 = scalar_lea.vmem [#allocation6], 32
          %2543 = vst [vmem:[%s2542] sm:$0xff] %v2538
          %2544 = vst [vmem:[%s2542 + $0x8] sm:$0xff] %v2539
          %2545 = vst [vmem:[%s2542 + $0x10] sm:$0xff] %v2540
          %2546 = vst [vmem:[%s2542 + $0x18] sm:$0xff] %v2541
          %v2547 = vmul.f32 %v2223, %v2538
          %v2548 = vmul.f32 %v2225, %v2539
          %v2549 = vmul.f32 %v2227, %v2540
          %v2550 = vmul.f32 %v2229, %v2541
          %v2551 = vadd.f32 %v2547, %v2498
          %v2552 = vadd.f32 %v2548, %v2499
          %v2553 = vadd.f32 %v2549, %v2500
          %v2554 = vadd.f32 %v2550, %v2501
          %s2555 = scalar_lea.vmem [#allocation6], 64
          %2556 = vst [vmem:[%s2555] sm:$0xff] %v2551
          %2557 = vst [vmem:[%s2555 + $0x8] sm:$0xff] %v2552
          %2558 = vst [vmem:[%s2555 + $0x10] sm:$0xff] %v2553
          %2559 = vst [vmem:[%s2555 + $0x18] sm:$0xff] %v2554
          %v2560 = vmul.f32 %v2231, %v2551
          %v2561 = vmul.f32 %v2233, %v2552
          %v2562 = vmul.f32 %v2235, %v2553
          %v2563 = vmul.f32 %v2237, %v2554
          %v2564 = vadd.f32 %v2560, %v2502
          %v2565 = vadd.f32 %v2561, %v2503
          %v2566 = vadd.f32 %v2562, %v2504
          %v2567 = vadd.f32 %v2563, %v2505
          %s2568 = scalar_lea.vmem [#allocation6], 96
          %2569 = vst [vmem:[%s2568] sm:$0xff] %v2564
          %2570 = vst [vmem:[%s2568 + $0x8] sm:$0xff] %v2565
          %2571 = vst [vmem:[%s2568 + $0x10] sm:$0xff] %v2566
          %2572 = vst [vmem:[%s2568 + $0x18] sm:$0xff] %v2567
          %v2573 = vmul.f32 %v2239, %v2564
          %v2574 = vmul.f32 %v2241, %v2565
          %v2575 = vmul.f32 %v2243, %v2566
          %v2576 = vmul.f32 %v2245, %v2567
          %v2577 = vadd.f32 %v2573, %v2506
          %v2578 = vadd.f32 %v2574, %v2507
          %v2579 = vadd.f32 %v2575, %v2508
          %v2580 = vadd.f32 %v2576, %v2509
          %s2581 = scalar_lea.vmem [#allocation6], 128
          %2582 = vst [vmem:[%s2581] sm:$0xff] %v2577
          %2583 = vst [vmem:[%s2581 + $0x8] sm:$0xff] %v2578
          %2584 = vst [vmem:[%s2581 + $0x10] sm:$0xff] %v2579
          %2585 = vst [vmem:[%s2581 + $0x18] sm:$0xff] %v2580
          %v2586 = vmul.f32 %v2247, %v2577
          %v2587 = vmul.f32 %v2249, %v2578
          %v2588 = vmul.f32 %v2251, %v2579
          %v2589 = vmul.f32 %v2253, %v2580
          %v2590 = vadd.f32 %v2586, %v2510
          %v2591 = vadd.f32 %v2587, %v2511
          %v2592 = vadd.f32 %v2588, %v2512
          %v2593 = vadd.f32 %v2589, %v2513
          %s2594 = scalar_lea.vmem [#allocation6], 160
          %2595 = vst [vmem:[%s2594] sm:$0xff] %v2590
          %2596 = vst [vmem:[%s2594 + $0x8] sm:$0xff] %v2591
          %2597 = vst [vmem:[%s2594 + $0x10] sm:$0xff] %v2592
          %2598 = vst [vmem:[%s2594 + $0x18] sm:$0xff] %v2593
          %v2599 = vmul.f32 %v2255, %v2590
          %v2600 = vmul.f32 %v2257, %v2591
          %v2601 = vmul.f32 %v2259, %v2592
          %v2602 = vmul.f32 %v2261, %v2593
          %v2603 = vadd.f32 %v2599, %v2514
          %v2604 = vadd.f32 %v2600, %v2515
          %v2605 = vadd.f32 %v2601, %v2516
          %v2606 = vadd.f32 %v2602, %v2517
          %s2607 = scalar_lea.vmem [#allocation6], 192
          %2608 = vst [vmem:[%s2607] sm:$0xff] %v2603
          %2609 = vst [vmem:[%s2607 + $0x8] sm:$0xff] %v2604
          %2610 = vst [vmem:[%s2607 + $0x10] sm:$0xff] %v2605
          %2611 = vst [vmem:[%s2607 + $0x18] sm:$0xff] %v2606
          %v2612 = vmul.f32 %v2263, %v2603
          %v2613 = vmul.f32 %v2265, %v2604
          %v2614 = vmul.f32 %v2267, %v2605
          %v2615 = vmul.f32 %v2269, %v2606
          %v2616 = vadd.f32 %v2612, %v2518
          %v2617 = vadd.f32 %v2613, %v2519
          %v2618 = vadd.f32 %v2614, %v2520
          %v2619 = vadd.f32 %v2615, %v2521
          %s2620 = scalar_lea.vmem [#allocation6], 224
          %2621 = vst [vmem:[%s2620] sm:$0xff] %v2616
          %2622 = vst [vmem:[%s2620 + $0x8] sm:$0xff] %v2617
          %2623 = vst [vmem:[%s2620 + $0x10] sm:$0xff] %v2618
          %2624 = vst [vmem:[%s2620 + $0x18] sm:$0xff] %v2619
          %v2625 = vld [vmem:[#allocation6] sm:$0xff]
          %v2626 = vld [vmem:[#allocation6 + $0x8] sm:$0xff]
          %v2627 = vld [vmem:[#allocation6 + $0x10] sm:$0xff]
          %v2628 = vld [vmem:[#allocation6 + $0x18] sm:$0xff]
          %v2629 = vld [vmem:[#allocation6 + $0x20] sm:$0xff]
          %v2630 = vld [vmem:[#allocation6 + $0x28] sm:$0xff]
          %v2631 = vld [vmem:[#allocation6 + $0x30] sm:$0xff]
          %v2632 = vld [vmem:[#allocation6 + $0x38] sm:$0xff]
          %v2633 = vld [vmem:[#allocation6 + $0x40] sm:$0xff]
          %v2634 = vld [vmem:[#allocation6 + $0x48] sm:$0xff]
          %v2635 = vld [vmem:[#allocation6 + $0x50] sm:$0xff]
          %v2636 = vld [vmem:[#allocation6 + $0x58] sm:$0xff]
          %v2637 = vld [vmem:[#allocation6 + $0x60] sm:$0xff]
          %v2638 = vld [vmem:[#allocation6 + $0x68] sm:$0xff]
          %v2639 = vld [vmem:[#allocation6 + $0x70] sm:$0xff]
          %v2640 = vld [vmem:[#allocation6 + $0x78] sm:$0xff]
          %v2641 = vld [vmem:[#allocation6 + $0x80] sm:$0xff]
          %v2642 = vld [vmem:[#allocation6 + $0x88] sm:$0xff]
          %v2643 = vld [vmem:[#allocation6 + $0x90] sm:$0xff]
          %v2644 = vld [vmem:[#allocation6 + $0x98] sm:$0xff]
          %v2645 = vld [vmem:[#allocation6 + $0xa0] sm:$0xff]
          %v2646 = vld [vmem:[#allocation6 + $0xa8] sm:$0xff]
          %v2647 = vld [vmem:[#allocation6 + $0xb0] sm:$0xff]
          %v2648 = vld [vmem:[#allocation6 + $0xb8] sm:$0xff]
          %v2649 = vld [vmem:[#allocation6 + $0xc0] sm:$0xff]
          %v2650 = vld [vmem:[#allocation6 + $0xc8] sm:$0xff]
          %v2651 = vld [vmem:[#allocation6 + $0xd0] sm:$0xff]
          %v2652 = vld [vmem:[#allocation6 + $0xd8] sm:$0xff]
          %v2653 = vld [vmem:[#allocation6 + $0xe0] sm:$0xff]
          %v2654 = vld [vmem:[#allocation6 + $0xe8] sm:$0xff]
          %v2655 = vld [vmem:[#allocation6 + $0xf0] sm:$0xff]
          %v2656 = vld [vmem:[#allocation6 + $0xf8] sm:$0xff]
          %v2657 = vlaneseq
          %v2658 = vshrl.u32 %v2657, 7
          %v2659 = vsub.s32 0, %v2658
          %v2660 = vrot.slane %v2041, %v2659
          %2662 = vbcast.lane.b32.xlu0 %v2660, 256
          %v2663 = vpop.permute.xlu0 %2662
          %s2665 = sor.u32 256, 8
          %2666 = vbcast.lane.b32.xlu0 %v2660, %s2665
          %v2667 = vpop.permute.xlu0 %2666
          %v2668 = vlaneseq
          %v2669 = vshrl.u32 %v2668, 7
          %v2670 = vsub.s32 1, %v2669
          %v2671 = vrot.slane %v2041, %v2670
          %2673 = vbcast.lane.b32.xlu0 %v2671, 256
          %v2674 = vpop.permute.xlu0 %2673
          %s2676 = sor.u32 256, 8
          %2677 = vbcast.lane.b32.xlu0 %v2671, %s2676
          %v2678 = vpop.permute.xlu0 %2677
          %v2679 = vlaneseq
          %v2680 = vshrl.u32 %v2679, 7
          %v2681 = vsub.s32 2, %v2680
          %v2682 = vrot.slane %v2041, %v2681
          %2684 = vbcast.lane.b32.xlu0 %v2682, 256
          %v2685 = vpop.permute.xlu0 %2684
          %s2687 = sor.u32 256, 8
          %2688 = vbcast.lane.b32.xlu0 %v2682, %s2687
          %v2689 = vpop.permute.xlu0 %2688
          %v2690 = vlaneseq
          %v2691 = vshrl.u32 %v2690, 7
          %v2692 = vsub.s32 3, %v2691
          %v2693 = vrot.slane %v2041, %v2692
          %2695 = vbcast.lane.b32.xlu0 %v2693, 256
          %v2696 = vpop.permute.xlu0 %2695
          %s2698 = sor.u32 256, 8
          %2699 = vbcast.lane.b32.xlu0 %v2693, %s2698
          %v2700 = vpop.permute.xlu0 %2699
          %v2701 = vlaneseq
          %v2702 = vshrl.u32 %v2701, 7
          %v2703 = vsub.s32 4, %v2702
          %v2704 = vrot.slane %v2041, %v2703
          %2706 = vbcast.lane.b32.xlu0 %v2704, 256
          %v2707 = vpop.permute.xlu0 %2706
          %s2709 = sor.u32 256, 8
          %2710 = vbcast.lane.b32.xlu0 %v2704, %s2709
          %v2711 = vpop.permute.xlu0 %2710
          %v2712 = vlaneseq
          %v2713 = vshrl.u32 %v2712, 7
          %v2714 = vsub.s32 5, %v2713
          %v2715 = vrot.slane %v2041, %v2714
          %2717 = vbcast.lane.b32.xlu0 %v2715, 256
          %v2718 = vpop.permute.xlu0 %2717
          %s2720 = sor.u32 256, 8
          %2721 = vbcast.lane.b32.xlu0 %v2715, %s2720
          %v2722 = vpop.permute.xlu0 %2721
          %v2723 = vlaneseq
          %v2724 = vshrl.u32 %v2723, 7
          %v2725 = vsub.s32 6, %v2724
          %v2726 = vrot.slane %v2041, %v2725
          %2728 = vbcast.lane.b32.xlu0 %v2726, 256
          %v2729 = vpop.permute.xlu0 %2728
          %s2731 = sor.u32 256, 8
          %2732 = vbcast.lane.b32.xlu0 %v2726, %s2731
          %v2733 = vpop.permute.xlu0 %2732
          %v2734 = vlaneseq
          %v2735 = vshrl.u32 %v2734, 7
          %v2736 = vsub.s32 7, %v2735
          %v2737 = vrot.slane %v2041, %v2736
          %2739 = vbcast.lane.b32.xlu0 %v2737, 256
          %v2740 = vpop.permute.xlu0 %2739
          %s2742 = sor.u32 256, 8
          %2743 = vbcast.lane.b32.xlu0 %v2737, %s2742
          %v2744 = vpop.permute.xlu0 %2743
          %v2745 = vmul.f32 %v2625, %v2663
          %v2746 = vmul.f32 %v2626, %v2663
          %v2747 = vmul.f32 %v2627, %v2667
          %v2748 = vmul.f32 %v2628, %v2667
          %v2749 = vmul.f32 %v2629, %v2674
          %v2750 = vmul.f32 %v2630, %v2674
          %v2751 = vmul.f32 %v2631, %v2678
          %v2752 = vmul.f32 %v2632, %v2678
          %v2753 = vmul.f32 %v2633, %v2685
          %v2754 = vmul.f32 %v2634, %v2685
          %v2755 = vmul.f32 %v2635, %v2689
          %v2756 = vmul.f32 %v2636, %v2689
          %v2757 = vmul.f32 %v2637, %v2696
          %v2758 = vmul.f32 %v2638, %v2696
          %v2759 = vmul.f32 %v2639, %v2700
          %v2760 = vmul.f32 %v2640, %v2700
          %v2761 = vmul.f32 %v2641, %v2707
          %v2762 = vmul.f32 %v2642, %v2707
          %v2763 = vmul.f32 %v2643, %v2711
          %v2764 = vmul.f32 %v2644, %v2711
          %v2765 = vmul.f32 %v2645, %v2718
          %v2766 = vmul.f32 %v2646, %v2718
          %v2767 = vmul.f32 %v2647, %v2722
          %v2768 = vmul.f32 %v2648, %v2722
          %v2769 = vmul.f32 %v2649, %v2729
          %v2770 = vmul.f32 %v2650, %v2729
          %v2771 = vmul.f32 %v2651, %v2733
          %v2772 = vmul.f32 %v2652, %v2733
          %v2773 = vmul.f32 %v2653, %v2740
          %v2774 = vmul.f32 %v2654, %v2740
          %v2775 = vmul.f32 %v2655, %v2744
          %v2776 = vmul.f32 %v2656, %v2744
          %v2777 = vadd.f32 %v2745, %v2747
          %v2778 = vrot.slane %v2777, 4
          %v2779 = vadd.f32 %v2777, %v2778
          %v2780 = vrot.slane %v2779, 2
          %v2781 = vadd.f32 %v2779, %v2780
          %v2782 = vrot.slane %v2781, 1
          %v2783 = vadd.f32 %v2781, %v2782
          %v2784 = vadd.f32 %v2746, %v2748
          %v2785 = vrot.slane %v2784, 4
          %v2786 = vadd.f32 %v2784, %v2785
          %v2787 = vrot.slane %v2786, 2
          %v2788 = vadd.f32 %v2786, %v2787
          %v2789 = vrot.slane %v2788, 1
          %v2790 = vadd.f32 %v2788, %v2789
          %v2791 = vadd.f32 %v2749, %v2751
          %v2792 = vrot.slane %v2791, 4
          %v2793 = vadd.f32 %v2791, %v2792
          %v2794 = vrot.slane %v2793, 2
          %v2795 = vadd.f32 %v2793, %v2794
          %v2796 = vrot.slane %v2795, 1
          %v2797 = vadd.f32 %v2795, %v2796
          %v2798 = vadd.f32 %v2750, %v2752
          %v2799 = vrot.slane %v2798, 4
          %v2800 = vadd.f32 %v2798, %v2799
          %v2801 = vrot.slane %v2800, 2
          %v2802 = vadd.f32 %v2800, %v2801
          %v2803 = vrot.slane %v2802, 1
          %v2804 = vadd.f32 %v2802, %v2803
          %v2805 = vadd.f32 %v2753, %v2755
          %v2806 = vrot.slane %v2805, 4
          %v2807 = vadd.f32 %v2805, %v2806
          %v2808 = vrot.slane %v2807, 2
          %v2809 = vadd.f32 %v2807, %v2808
          %v2810 = vrot.slane %v2809, 1
          %v2811 = vadd.f32 %v2809, %v2810
          %v2812 = vadd.f32 %v2754, %v2756
          %v2813 = vrot.slane %v2812, 4
          %v2814 = vadd.f32 %v2812, %v2813
          %v2815 = vrot.slane %v2814, 2
          %v2816 = vadd.f32 %v2814, %v2815
          %v2817 = vrot.slane %v2816, 1
          %v2818 = vadd.f32 %v2816, %v2817
          %v2819 = vadd.f32 %v2757, %v2759
          %v2820 = vrot.slane %v2819, 4
          %v2821 = vadd.f32 %v2819, %v2820
          %v2822 = vrot.slane %v2821, 2
          %v2823 = vadd.f32 %v2821, %v2822
          %v2824 = vrot.slane %v2823, 1
          %v2825 = vadd.f32 %v2823, %v2824
          %v2826 = vadd.f32 %v2758, %v2760
          %v2827 = vrot.slane %v2826, 4
          %v2828 = vadd.f32 %v2826, %v2827
          %v2829 = vrot.slane %v2828, 2
          %v2830 = vadd.f32 %v2828, %v2829
          %v2831 = vrot.slane %v2830, 1
          %v2832 = vadd.f32 %v2830, %v2831
          %v2833 = vadd.f32 %v2761, %v2763
          %v2834 = vrot.slane %v2833, 4
          %v2835 = vadd.f32 %v2833, %v2834
          %v2836 = vrot.slane %v2835, 2
          %v2837 = vadd.f32 %v2835, %v2836
          %v2838 = vrot.slane %v2837, 1
          %v2839 = vadd.f32 %v2837, %v2838
          %v2840 = vadd.f32 %v2762, %v2764
          %v2841 = vrot.slane %v2840, 4
          %v2842 = vadd.f32 %v2840, %v2841
          %v2843 = vrot.slane %v2842, 2
          %v2844 = vadd.f32 %v2842, %v2843
          %v2845 = vrot.slane %v2844, 1
          %v2846 = vadd.f32 %v2844, %v2845
          %v2847 = vadd.f32 %v2765, %v2767
          %v2848 = vrot.slane %v2847, 4
          %v2849 = vadd.f32 %v2847, %v2848
          %v2850 = vrot.slane %v2849, 2
          %v2851 = vadd.f32 %v2849, %v2850
          %v2852 = vrot.slane %v2851, 1
          %v2853 = vadd.f32 %v2851, %v2852
          %v2854 = vadd.f32 %v2766, %v2768
          %v2855 = vrot.slane %v2854, 4
          %v2856 = vadd.f32 %v2854, %v2855
          %v2857 = vrot.slane %v2856, 2
          %v2858 = vadd.f32 %v2856, %v2857
          %v2859 = vrot.slane %v2858, 1
          %v2860 = vadd.f32 %v2858, %v2859
          %v2861 = vadd.f32 %v2769, %v2771
          %v2862 = vrot.slane %v2861, 4
          %v2863 = vadd.f32 %v2861, %v2862
          %v2864 = vrot.slane %v2863, 2
          %v2865 = vadd.f32 %v2863, %v2864
          %v2866 = vrot.slane %v2865, 1
          %v2867 = vadd.f32 %v2865, %v2866
          %v2868 = vadd.f32 %v2770, %v2772
          %v2869 = vrot.slane %v2868, 4
          %v2870 = vadd.f32 %v2868, %v2869
          %v2871 = vrot.slane %v2870, 2
          %v2872 = vadd.f32 %v2870, %v2871
          %v2873 = vrot.slane %v2872, 1
          %v2874 = vadd.f32 %v2872, %v2873
          %v2875 = vadd.f32 %v2773, %v2775
          %v2876 = vrot.slane %v2875, 4
          %v2877 = vadd.f32 %v2875, %v2876
          %v2878 = vrot.slane %v2877, 2
          %v2879 = vadd.f32 %v2877, %v2878
          %v2880 = vrot.slane %v2879, 1
          %v2881 = vadd.f32 %v2879, %v2880
          %v2882 = vadd.f32 %v2774, %v2776
          %v2883 = vrot.slane %v2882, 4
          %v2884 = vadd.f32 %v2882, %v2883
          %v2885 = vrot.slane %v2884, 2
          %v2886 = vadd.f32 %v2884, %v2885
          %v2887 = vrot.slane %v2886, 1
          %v2888 = vadd.f32 %v2886, %v2887
          %vm2905 = vcmask 1041409
          %v2906 = vsel %vm2905, %v2797, %v2783
          %vm2907 = vcmask 1042434
          %v2908 = vsel %vm2907, %v2811, %v2906
          %vm2909 = vcmask 1043459
          %v2910 = vsel %vm2909, %v2825, %v2908
          %vm2911 = vcmask 1044484
          %v2912 = vsel %vm2911, %v2839, %v2910
          %vm2913 = vcmask 1045509
          %v2914 = vsel %vm2913, %v2853, %v2912
          %vm2915 = vcmask 1046534
          %v2916 = vsel %vm2915, %v2867, %v2914
          %vm2917 = vcmask 1047559
          %v2918 = vsel %vm2917, %v2881, %v2916
          %v2919 = vsel %vm2905, %v2804, %v2790
          %v2920 = vsel %vm2907, %v2818, %v2919
          %v2921 = vsel %vm2909, %v2832, %v2920
          %v2922 = vsel %vm2911, %v2846, %v2921
          %v2923 = vsel %vm2913, %v2860, %v2922
          %v2924 = vsel %vm2915, %v2874, %v2923
          %v2925 = vsel %vm2917, %v2888, %v2924
          %s2928 = smul.addr %s2029, 8
          %s2929 = scalar_lea.vmem [#allocation7], %s2928
          %2930 = vst [vmem:[%s2929] sm:$0xff] %v2918
          %2931 = vst [vmem:[%s2929 + $0x8] sm:$0xff] %v2925
        $region89: #{tpu_custom_call.1} parent=75 // loop_footer
          %s2021 = sadd.s32 1, %s2017
        $region90: #{tpu_custom_call.1} parent=75 // loop_footer_branch
          %2016 = sbr.rel target = $region86
        $region91: #{tpu_custom_call.1} parent=75 // loop_exit
          _
        loop: start=0, step=1, limit=2
        $region92: #{tpu_custom_call.1} parent=75 // loop_pre_header
          _
        $region93: #{tpu_custom_call.1} parent=75 // loop_header
          %s2933 = sphi 0, %s2937
          %p2934 = scmp.ge.s32.totalorder %s2933, 2
          %v2938 = vphi 0.0, %v3533
          %v2939 = vphi 0.0, %v3534
          %v2940 = vphi 0.0, %v3535
          %v2941 = vphi 0.0, %v3536
        $region94: #{tpu_custom_call.1} parent=75 // loop_header_branch
          %2936 = sbr.rel (%p2934) target = $region98
        $region95: #{tpu_custom_call.1} parent=75 // loop_body
          %s2942 = smul.u32 %s2933, 8
          %s2943 = sadd.s32 %s2942, 16
          %s2944 = sshra.s32 %s2943, 3
          %s2945 = sand.u32 %s2943, 7
          %s2946 = smul.u32 %s2944, 2
          %s2947 = smul.addr %s2946, 8
          %s2948 = scalar_lea.vmem [#allocation2], %s2947
          %v2949 = vld [vmem:[%s2948] sm:$0xff]
          %v2950 = vld [vmem:[%s2948 + $0x8] sm:$0xff]
          %s2951 = smul.addr %s2946, 8
          %s2952 = scalar_lea.vmem [#allocation3], %s2951
          %v2953 = vld [vmem:[%s2952] sm:$0xff]
          %v2954 = vld [vmem:[%s2952 + $0x8] sm:$0xff]
          %s2955 = scalar_lea.vmem [#allocation4], %s2943
          %v2956 = vld [vmem:[%s2955] sm:$0xff]
          %s2957 = scalar_lea.vmem [#allocation5], %s2943
          %v2958 = vld [vmem:[%s2957] sm:$0xff]
          %v2961 = vcombine.low %v2949, %v2950
          %v2962 = vcombine.high %v2949, %v2950
          %v2964 = vunpack.c.l.s4 1966171168
          %v2965 = vunpack.c.0.s8 %v2964
          %v2966 = vlaneseq
          %v2967 = vshrl.u32 %v2966, 7
          %v2968 = vsub.s32 %v2965, %v2967
          %v2969 = vrot.slane %v2961, %v2968
          %v2971 = vunpack.c.l.s4 1966171168
          %v2972 = vunpack.c.0.s8 %v2971
          %v2973 = vlaneseq
          %v2974 = vshrl.u32 %v2973, 7
          %v2975 = vsub.s32 %v2972, %v2974
          %v2976 = vrot.slane %v2962, %v2975
          %v2977 = vcombine.high %v2969, %v2969
          %v2978 = vcombine.high %v2976, %v2976
          %v2980 = vunpack.c.l.s4 1966171168
          %v2981 = vunpack.c.0.s8 %v2980
          %v2982 = vlaneseq
          %v2983 = vshrl.u32 %v2982, 7
          %v2984 = vsub.s32 %v2981, %v2983
          %v2985 = vrot.slane %v2969, %v2984
          %v2987 = vunpack.c.l.s4 1966171168
          %v2988 = vunpack.c.0.s8 %v2987
          %v2989 = vlaneseq
          %v2990 = vshrl.u32 %v2989, 7
          %v2991 = vsub.s32 %v2988, %v2990
          %v2992 = vrot.slane %v2976, %v2991
          %v2994 = vunpack.c.l.s4 1966171168
          %v2995 = vunpack.c.0.s8 %v2994
          %v2996 = vlaneseq
          %v2997 = vshrl.u32 %v2996, 7
          %v2998 = vsub.s32 %v2995, %v2997
          %v2999 = vrot.slane %v2977, %v2998
          %v3001 = vunpack.c.l.s4 1966171168
          %v3002 = vunpack.c.0.s8 %v3001
          %v3003 = vlaneseq
          %v3004 = vshrl.u32 %v3003, 7
          %v3005 = vsub.s32 %v3002, %v3004
          %v3006 = vrot.slane %v2978, %v3005
          %v3007 = vcombine.high %v2985, %v2985
          %v3008 = vcombine.high %v2992, %v2992
          %v3009 = vcombine.high %v2999, %v2999
          %v3010 = vcombine.high %v3006, %v3006
          %v3011 = vlaneseq
          %v3012 = vshrl.u32 %v3011, 7
          %v3013 = vsub.s32 0, %v3012
          %v3014 = vrot.slane %v2985, %v3013
          %v3015 = vlaneseq
          %v3016 = vshrl.u32 %v3015, 7
          %v3017 = vsub.s32 1, %v3016
          %v3018 = vrot.slane %v2985, %v3017
          %v3019 = vlaneseq
          %v3020 = vshrl.u32 %v3019, 7
          %v3021 = vsub.s32 0, %v3020
          %v3022 = vrot.slane %v2999, %v3021
          %v3023 = vlaneseq
          %v3024 = vshrl.u32 %v3023, 7
          %v3025 = vsub.s32 1, %v3024
          %v3026 = vrot.slane %v2999, %v3025
          %v3027 = vlaneseq
          %v3028 = vshrl.u32 %v3027, 7
          %v3029 = vsub.s32 0, %v3028
          %v3030 = vrot.slane %v3007, %v3029
          %v3031 = vlaneseq
          %v3032 = vshrl.u32 %v3031, 7
          %v3033 = vsub.s32 1, %v3032
          %v3034 = vrot.slane %v3007, %v3033
          %v3035 = vlaneseq
          %v3036 = vshrl.u32 %v3035, 7
          %v3037 = vsub.s32 0, %v3036
          %v3038 = vrot.slane %v3009, %v3037
          %v3039 = vlaneseq
          %v3040 = vshrl.u32 %v3039, 7
          %v3041 = vsub.s32 1, %v3040
          %v3042 = vrot.slane %v3009, %v3041
          %v3043 = vlaneseq
          %v3044 = vshrl.u32 %v3043, 7
          %v3045 = vsub.s32 0, %v3044
          %v3046 = vrot.slane %v2992, %v3045
          %v3047 = vlaneseq
          %v3048 = vshrl.u32 %v3047, 7
          %v3049 = vsub.s32 1, %v3048
          %v3050 = vrot.slane %v2992, %v3049
          %v3051 = vlaneseq
          %v3052 = vshrl.u32 %v3051, 7
          %v3053 = vsub.s32 0, %v3052
          %v3054 = vrot.slane %v3006, %v3053
          %v3055 = vlaneseq
          %v3056 = vshrl.u32 %v3055, 7
          %v3057 = vsub.s32 1, %v3056
          %v3058 = vrot.slane %v3006, %v3057
          %v3059 = vlaneseq
          %v3060 = vshrl.u32 %v3059, 7
          %v3061 = vsub.s32 0, %v3060
          %v3062 = vrot.slane %v3008, %v3061
          %v3063 = vlaneseq
          %v3064 = vshrl.u32 %v3063, 7
          %v3065 = vsub.s32 1, %v3064
          %v3066 = vrot.slane %v3008, %v3065
          %v3067 = vlaneseq
          %v3068 = vshrl.u32 %v3067, 7
          %v3069 = vsub.s32 0, %v3068
          %v3070 = vrot.slane %v3010, %v3069
          %v3071 = vlaneseq
          %v3072 = vshrl.u32 %v3071, 7
          %v3073 = vsub.s32 1, %v3072
          %v3074 = vrot.slane %v3010, %v3073
          %v3091 = vmul.f32 %v3014, %v2012
          %v3092 = vmul.f32 %v3018, %v2013
          %v3093 = vmul.f32 %v3014, %v2014
          %v3094 = vmul.f32 %v3018, %v2015
          %v3095 = vmul.f32 %v3022, %v2012
          %v3096 = vmul.f32 %v3026, %v2013
          %v3097 = vmul.f32 %v3022, %v2014
          %v3098 = vmul.f32 %v3026, %v2015
          %v3099 = vmul.f32 %v3030, %v2012
          %v3100 = vmul.f32 %v3034, %v2013
          %v3101 = vmul.f32 %v3030, %v2014
          %v3102 = vmul.f32 %v3034, %v2015
          %v3103 = vmul.f32 %v3038, %v2012
          %v3104 = vmul.f32 %v3042, %v2013
          %v3105 = vmul.f32 %v3038, %v2014
          %v3106 = vmul.f32 %v3042, %v2015
          %v3107 = vmul.f32 %v3046, %v2012
          %v3108 = vmul.f32 %v3050, %v2013
          %v3109 = vmul.f32 %v3046, %v2014
          %v3110 = vmul.f32 %v3050, %v2015
          %v3111 = vmul.f32 %v3054, %v2012
          %v3112 = vmul.f32 %v3058, %v2013
          %v3113 = vmul.f32 %v3054, %v2014
          %v3114 = vmul.f32 %v3058, %v2015
          %v3115 = vmul.f32 %v3062, %v2012
          %v3116 = vmul.f32 %v3066, %v2013
          %v3117 = vmul.f32 %v3062, %v2014
          %v3118 = vmul.f32 %v3066, %v2015
          %v3119 = vmul.f32 %v3070, %v2012
          %v3120 = vmul.f32 %v3074, %v2013
          %v3121 = vmul.f32 %v3070, %v2014
          %v3122 = vmul.f32 %v3074, %v2015
          %v3123 = vmul.f32 %v3091, 1.442695
          %v3124 = vpow.pop %v3123
          %v3125 = vmul.f32 %v3092, 1.442695
          %v3126 = vpow.pop %v3125
          %v3127 = vmul.f32 %v3093, 1.442695
          %v3128 = vpow.pop %v3127
          %v3129 = vmul.f32 %v3094, 1.442695
          %v3130 = vpow.pop %v3129
          %v3131 = vmul.f32 %v3095, 1.442695
          %v3132 = vpow.pop %v3131
          %v3133 = vmul.f32 %v3096, 1.442695
          %v3134 = vpow.pop %v3133
          %v3135 = vmul.f32 %v3097, 1.442695
          %v3136 = vpow.pop %v3135
          %v3137 = vmul.f32 %v3098, 1.442695
          %v3138 = vpow.pop %v3137
          %v3139 = vmul.f32 %v3099, 1.442695
          %v3140 = vpow.pop %v3139
          %v3141 = vmul.f32 %v3100, 1.442695
          %v3142 = vpow.pop %v3141
          %v3143 = vmul.f32 %v3101, 1.442695
          %v3144 = vpow.pop %v3143
          %v3145 = vmul.f32 %v3102, 1.442695
          %v3146 = vpow.pop %v3145
          %v3147 = vmul.f32 %v3103, 1.442695
          %v3148 = vpow.pop %v3147
          %v3149 = vmul.f32 %v3104, 1.442695
          %v3150 = vpow.pop %v3149
          %v3151 = vmul.f32 %v3105, 1.442695
          %v3152 = vpow.pop %v3151
          %v3153 = vmul.f32 %v3106, 1.442695
          %v3154 = vpow.pop %v3153
          %v3155 = vmul.f32 %v3107, 1.442695
          %v3156 = vpow.pop %v3155
          %v3157 = vmul.f32 %v3108, 1.442695
          %v3158 = vpow.pop %v3157
          %v3159 = vmul.f32 %v3109, 1.442695
          %v3160 = vpow.pop %v3159
          %v3161 = vmul.f32 %v3110, 1.442695
          %v3162 = vpow.pop %v3161
          %v3163 = vmul.f32 %v3111, 1.442695
          %v3164 = vpow.pop %v3163
          %v3165 = vmul.f32 %v3112, 1.442695
          %v3166 = vpow.pop %v3165
          %v3167 = vmul.f32 %v3113, 1.442695
          %v3168 = vpow.pop %v3167
          %v3169 = vmul.f32 %v3114, 1.442695
          %v3170 = vpow.pop %v3169
          %v3171 = vmul.f32 %v3115, 1.442695
          %v3172 = vpow.pop %v3171
          %v3173 = vmul.f32 %v3116, 1.442695
          %v3174 = vpow.pop %v3173
          %v3175 = vmul.f32 %v3117, 1.442695
          %v3176 = vpow.pop %v3175
          %v3177 = vmul.f32 %v3118, 1.442695
          %v3178 = vpow.pop %v3177
          %v3179 = vmul.f32 %v3119, 1.442695
          %v3180 = vpow.pop %v3179
          %v3181 = vmul.f32 %v3120, 1.442695
          %v3182 = vpow.pop %v3181
          %v3183 = vmul.f32 %v3121, 1.442695
          %v3184 = vpow.pop %v3183
          %v3185 = vmul.f32 %v3122, 1.442695
          %v3186 = vpow.pop %v3185
          %v3189 = vcombine.low %v2953, %v2954
          %v3190 = vcombine.high %v2953, %v2954
          %v3192 = vunpack.c.l.s4 1966171168
          %v3193 = vunpack.c.0.s8 %v3192
          %v3194 = vlaneseq
          %v3195 = vshrl.u32 %v3194, 7
          %v3196 = vsub.s32 %v3193, %v3195
          %v3197 = vrot.slane %v3189, %v3196
          %v3199 = vunpack.c.l.s4 1966171168
          %v3200 = vunpack.c.0.s8 %v3199
          %v3201 = vlaneseq
          %v3202 = vshrl.u32 %v3201, 7
          %v3203 = vsub.s32 %v3200, %v3202
          %v3204 = vrot.slane %v3190, %v3203
          %v3205 = vcombine.high %v3197, %v3197
          %v3206 = vcombine.high %v3204, %v3204
          %v3208 = vunpack.c.l.s4 1966171168
          %v3209 = vunpack.c.0.s8 %v3208
          %v3210 = vlaneseq
          %v3211 = vshrl.u32 %v3210, 7
          %v3212 = vsub.s32 %v3209, %v3211
          %v3213 = vrot.slane %v3197, %v3212
          %v3215 = vunpack.c.l.s4 1966171168
          %v3216 = vunpack.c.0.s8 %v3215
          %v3217 = vlaneseq
          %v3218 = vshrl.u32 %v3217, 7
          %v3219 = vsub.s32 %v3216, %v3218
          %v3220 = vrot.slane %v3204, %v3219
          %v3222 = vunpack.c.l.s4 1966171168
          %v3223 = vunpack.c.0.s8 %v3222
          %v3224 = vlaneseq
          %v3225 = vshrl.u32 %v3224, 7
          %v3226 = vsub.s32 %v3223, %v3225
          %v3227 = vrot.slane %v3205, %v3226
          %v3229 = vunpack.c.l.s4 1966171168
          %v3230 = vunpack.c.0.s8 %v3229
          %v3231 = vlaneseq
          %v3232 = vshrl.u32 %v3231, 7
          %v3233 = vsub.s32 %v3230, %v3232
          %v3234 = vrot.slane %v3206, %v3233
          %v3235 = vcombine.high %v3213, %v3213
          %v3236 = vcombine.high %v3220, %v3220
          %v3237 = vcombine.high %v3227, %v3227
          %v3238 = vcombine.high %v3234, %v3234
          %v3239 = vlaneseq
          %v3240 = vshrl.u32 %v3239, 7
          %v3241 = vsub.s32 0, %v3240
          %v3242 = vrot.slane %v2956, %v3241
          %3244 = vbcast.lane.b32.xlu0 %v3242, 256
          %v3245 = vpop.permute.xlu0 %3244
          %s3247 = sor.u32 256, 8
          %3248 = vbcast.lane.b32.xlu0 %v3242, %s3247
          %v3249 = vpop.permute.xlu0 %3248
          %v3250 = vlaneseq
          %v3251 = vshrl.u32 %v3250, 7
          %v3252 = vsub.s32 1, %v3251
          %v3253 = vrot.slane %v2956, %v3252
          %3255 = vbcast.lane.b32.xlu0 %v3253, 256
          %v3256 = vpop.permute.xlu0 %3255
          %s3258 = sor.u32 256, 8
          %3259 = vbcast.lane.b32.xlu0 %v3253, %s3258
          %v3260 = vpop.permute.xlu0 %3259
          %v3261 = vlaneseq
          %v3262 = vshrl.u32 %v3261, 7
          %v3263 = vsub.s32 2, %v3262
          %v3264 = vrot.slane %v2956, %v3263
          %3266 = vbcast.lane.b32.xlu0 %v3264, 256
          %v3267 = vpop.permute.xlu0 %3266
          %s3269 = sor.u32 256, 8
          %3270 = vbcast.lane.b32.xlu0 %v3264, %s3269
          %v3271 = vpop.permute.xlu0 %3270
          %v3272 = vlaneseq
          %v3273 = vshrl.u32 %v3272, 7
          %v3274 = vsub.s32 3, %v3273
          %v3275 = vrot.slane %v2956, %v3274
          %3277 = vbcast.lane.b32.xlu0 %v3275, 256
          %v3278 = vpop.permute.xlu0 %3277
          %s3280 = sor.u32 256, 8
          %3281 = vbcast.lane.b32.xlu0 %v3275, %s3280
          %v3282 = vpop.permute.xlu0 %3281
          %v3283 = vlaneseq
          %v3284 = vshrl.u32 %v3283, 7
          %v3285 = vsub.s32 4, %v3284
          %v3286 = vrot.slane %v2956, %v3285
          %3288 = vbcast.lane.b32.xlu0 %v3286, 256
          %v3289 = vpop.permute.xlu0 %3288
          %s3291 = sor.u32 256, 8
          %3292 = vbcast.lane.b32.xlu0 %v3286, %s3291
          %v3293 = vpop.permute.xlu0 %3292
          %v3294 = vlaneseq
          %v3295 = vshrl.u32 %v3294, 7
          %v3296 = vsub.s32 5, %v3295
          %v3297 = vrot.slane %v2956, %v3296
          %3299 = vbcast.lane.b32.xlu0 %v3297, 256
          %v3300 = vpop.permute.xlu0 %3299
          %s3302 = sor.u32 256, 8
          %3303 = vbcast.lane.b32.xlu0 %v3297, %s3302
          %v3304 = vpop.permute.xlu0 %3303
          %v3305 = vlaneseq
          %v3306 = vshrl.u32 %v3305, 7
          %v3307 = vsub.s32 6, %v3306
          %v3308 = vrot.slane %v2956, %v3307
          %3310 = vbcast.lane.b32.xlu0 %v3308, 256
          %v3311 = vpop.permute.xlu0 %3310
          %s3313 = sor.u32 256, 8
          %3314 = vbcast.lane.b32.xlu0 %v3308, %s3313
          %v3315 = vpop.permute.xlu0 %3314
          %v3316 = vlaneseq
          %v3317 = vshrl.u32 %v3316, 7
          %v3318 = vsub.s32 7, %v3317
          %v3319 = vrot.slane %v2956, %v3318
          %3321 = vbcast.lane.b32.xlu0 %v3319, 256
          %v3322 = vpop.permute.xlu0 %3321
          %s3324 = sor.u32 256, 8
          %3325 = vbcast.lane.b32.xlu0 %v3319, %s3324
          %v3326 = vpop.permute.xlu0 %3325
          %v3327 = vlaneseq
          %v3328 = vshrl.u32 %v3327, 7
          %v3329 = vsub.s32 0, %v3328
          %v3330 = vrot.slane %v3213, %v3329
          %v3331 = vlaneseq
          %v3332 = vshrl.u32 %v3331, 7
          %v3333 = vsub.s32 1, %v3332
          %v3334 = vrot.slane %v3213, %v3333
          %v3335 = vlaneseq
          %v3336 = vshrl.u32 %v3335, 7
          %v3337 = vsub.s32 0, %v3336
          %v3338 = vrot.slane %v3227, %v3337
          %v3339 = vlaneseq
          %v3340 = vshrl.u32 %v3339, 7
          %v3341 = vsub.s32 1, %v3340
          %v3342 = vrot.slane %v3227, %v3341
          %v3343 = vlaneseq
          %v3344 = vshrl.u32 %v3343, 7
          %v3345 = vsub.s32 0, %v3344
          %v3346 = vrot.slane %v3235, %v3345
          %v3347 = vlaneseq
          %v3348 = vshrl.u32 %v3347, 7
          %v3349 = vsub.s32 1, %v3348
          %v3350 = vrot.slane %v3235, %v3349
          %v3351 = vlaneseq
          %v3352 = vshrl.u32 %v3351, 7
          %v3353 = vsub.s32 0, %v3352
          %v3354 = vrot.slane %v3237, %v3353
          %v3355 = vlaneseq
          %v3356 = vshrl.u32 %v3355, 7
          %v3357 = vsub.s32 1, %v3356
          %v3358 = vrot.slane %v3237, %v3357
          %v3359 = vlaneseq
          %v3360 = vshrl.u32 %v3359, 7
          %v3361 = vsub.s32 0, %v3360
          %v3362 = vrot.slane %v3220, %v3361
          %v3363 = vlaneseq
          %v3364 = vshrl.u32 %v3363, 7
          %v3365 = vsub.s32 1, %v3364
          %v3366 = vrot.slane %v3220, %v3365
          %v3367 = vlaneseq
          %v3368 = vshrl.u32 %v3367, 7
          %v3369 = vsub.s32 0, %v3368
          %v3370 = vrot.slane %v3234, %v3369
          %v3371 = vlaneseq
          %v3372 = vshrl.u32 %v3371, 7
          %v3373 = vsub.s32 1, %v3372
          %v3374 = vrot.slane %v3234, %v3373
          %v3375 = vlaneseq
          %v3376 = vshrl.u32 %v3375, 7
          %v3377 = vsub.s32 0, %v3376
          %v3378 = vrot.slane %v3236, %v3377
          %v3379 = vlaneseq
          %v3380 = vshrl.u32 %v3379, 7
          %v3381 = vsub.s32 1, %v3380
          %v3382 = vrot.slane %v3236, %v3381
          %v3383 = vlaneseq
          %v3384 = vshrl.u32 %v3383, 7
          %v3385 = vsub.s32 0, %v3384
          %v3386 = vrot.slane %v3238, %v3385
          %v3387 = vlaneseq
          %v3388 = vshrl.u32 %v3387, 7
          %v3389 = vsub.s32 1, %v3388
          %v3390 = vrot.slane %v3238, %v3389
          %v3407 = vmul.f32 %v3330, %v3245
          %v3408 = vmul.f32 %v3334, %v3245
          %v3409 = vmul.f32 %v3330, %v3249
          %v3410 = vmul.f32 %v3334, %v3249
          %v3411 = vmul.f32 %v3338, %v3256
          %v3412 = vmul.f32 %v3342, %v3256
          %v3413 = vmul.f32 %v3338, %v3260
          %v3414 = vmul.f32 %v3342, %v3260
          %v3415 = vmul.f32 %v3346, %v3267
          %v3416 = vmul.f32 %v3350, %v3267
          %v3417 = vmul.f32 %v3346, %v3271
          %v3418 = vmul.f32 %v3350, %v3271
          %v3419 = vmul.f32 %v3354, %v3278
          %v3420 = vmul.f32 %v3358, %v3278
          %v3421 = vmul.f32 %v3354, %v3282
          %v3422 = vmul.f32 %v3358, %v3282
          %v3423 = vmul.f32 %v3362, %v3289
          %v3424 = vmul.f32 %v3366, %v3289
          %v3425 = vmul.f32 %v3362, %v3293
          %v3426 = vmul.f32 %v3366, %v3293
          %v3427 = vmul.f32 %v3370, %v3300
          %v3428 = vmul.f32 %v3374, %v3300
          %v3429 = vmul.f32 %v3370, %v3304
          %v3430 = vmul.f32 %v3374, %v3304
          %v3431 = vmul.f32 %v3378, %v3311
          %v3432 = vmul.f32 %v3382, %v3311
          %v3433 = vmul.f32 %v3378, %v3315
          %v3434 = vmul.f32 %v3382, %v3315
          %v3435 = vmul.f32 %v3386, %v3322
          %v3436 = vmul.f32 %v3390, %v3322
          %v3437 = vmul.f32 %v3386, %v3326
          %v3438 = vmul.f32 %v3390, %v3326
          %v3439 = vmul.f32 %v3124, %v2938
          %v3440 = vmul.f32 %v3126, %v2939
          %v3441 = vmul.f32 %v3128, %v2940
          %v3442 = vmul.f32 %v3130, %v2941
          %v3443 = vadd.f32 %v3439, %v3407
          %v3444 = vadd.f32 %v3440, %v3408
          %v3445 = vadd.f32 %v3441, %v3409
          %v3446 = vadd.f32 %v3442, %v3410
          %3447 = vst [vmem:[#allocation6] sm:$0xff] %v3443
          %3448 = vst [vmem:[#allocation6 + $0x8] sm:$0xff] %v3444
          %3449 = vst [vmem:[#allocation6 + $0x10] sm:$0xff] %v3445
          %3450 = vst [vmem:[#allocation6 + $0x18] sm:$0xff] %v3446
          %v3451 = vmul.f32 %v3132, %v3443
          %v3452 = vmul.f32 %v3134, %v3444
          %v3453 = vmul.f32 %v3136, %v3445
          %v3454 = vmul.f32 %v3138, %v3446
          %v3455 = vadd.f32 %v3451, %v3411
          %v3456 = vadd.f32 %v3452, %v3412
          %v3457 = vadd.f32 %v3453, %v3413
          %v3458 = vadd.f32 %v3454, %v3414
          %s3459 = scalar_lea.vmem [#allocation6], 32
          %3460 = vst [vmem:[%s3459] sm:$0xff] %v3455
          %3461 = vst [vmem:[%s3459 + $0x8] sm:$0xff] %v3456
          %3462 = vst [vmem:[%s3459 + $0x10] sm:$0xff] %v3457
          %3463 = vst [vmem:[%s3459 + $0x18] sm:$0xff] %v3458
          %v3464 = vmul.f32 %v3140, %v3455
          %v3465 = vmul.f32 %v3142, %v3456
          %v3466 = vmul.f32 %v3144, %v3457
          %v3467 = vmul.f32 %v3146, %v3458
          %v3468 = vadd.f32 %v3464, %v3415
          %v3469 = vadd.f32 %v3465, %v3416
          %v3470 = vadd.f32 %v3466, %v3417
          %v3471 = vadd.f32 %v3467, %v3418
          %s3472 = scalar_lea.vmem [#allocation6], 64
          %3473 = vst [vmem:[%s3472] sm:$0xff] %v3468
          %3474 = vst [vmem:[%s3472 + $0x8] sm:$0xff] %v3469
          %3475 = vst [vmem:[%s3472 + $0x10] sm:$0xff] %v3470
          %3476 = vst [vmem:[%s3472 + $0x18] sm:$0xff] %v3471
          %v3477 = vmul.f32 %v3148, %v3468
          %v3478 = vmul.f32 %v3150, %v3469
          %v3479 = vmul.f32 %v3152, %v3470
          %v3480 = vmul.f32 %v3154, %v3471
          %v3481 = vadd.f32 %v3477, %v3419
          %v3482 = vadd.f32 %v3478, %v3420
          %v3483 = vadd.f32 %v3479, %v3421
          %v3484 = vadd.f32 %v3480, %v3422
          %s3485 = scalar_lea.vmem [#allocation6], 96
          %3486 = vst [vmem:[%s3485] sm:$0xff] %v3481
          %3487 = vst [vmem:[%s3485 + $0x8] sm:$0xff] %v3482
          %3488 = vst [vmem:[%s3485 + $0x10] sm:$0xff] %v3483
          %3489 = vst [vmem:[%s3485 + $0x18] sm:$0xff] %v3484
          %v3490 = vmul.f32 %v3156, %v3481
          %v3491 = vmul.f32 %v3158, %v3482
          %v3492 = vmul.f32 %v3160, %v3483
          %v3493 = vmul.f32 %v3162, %v3484
          %v3494 = vadd.f32 %v3490, %v3423
          %v3495 = vadd.f32 %v3491, %v3424
          %v3496 = vadd.f32 %v3492, %v3425
          %v3497 = vadd.f32 %v3493, %v3426
          %s3498 = scalar_lea.vmem [#allocation6], 128
          %3499 = vst [vmem:[%s3498] sm:$0xff] %v3494
          %3500 = vst [vmem:[%s3498 + $0x8] sm:$0xff] %v3495
          %3501 = vst [vmem:[%s3498 + $0x10] sm:$0xff] %v3496
          %3502 = vst [vmem:[%s3498 + $0x18] sm:$0xff] %v3497
          %v3503 = vmul.f32 %v3164, %v3494
          %v3504 = vmul.f32 %v3166, %v3495
          %v3505 = vmul.f32 %v3168, %v3496
          %v3506 = vmul.f32 %v3170, %v3497
          %v3507 = vadd.f32 %v3503, %v3427
          %v3508 = vadd.f32 %v3504, %v3428
          %v3509 = vadd.f32 %v3505, %v3429
          %v3510 = vadd.f32 %v3506, %v3430
          %s3511 = scalar_lea.vmem [#allocation6], 160
          %3512 = vst [vmem:[%s3511] sm:$0xff] %v3507
          %3513 = vst [vmem:[%s3511 + $0x8] sm:$0xff] %v3508
          %3514 = vst [vmem:[%s3511 + $0x10] sm:$0xff] %v3509
          %3515 = vst [vmem:[%s3511 + $0x18] sm:$0xff] %v3510
          %v3516 = vmul.f32 %v3172, %v3507
          %v3517 = vmul.f32 %v3174, %v3508
          %v3518 = vmul.f32 %v3176, %v3509
          %v3519 = vmul.f32 %v3178, %v3510
          %v3520 = vadd.f32 %v3516, %v3431
          %v3521 = vadd.f32 %v3517, %v3432
          %v3522 = vadd.f32 %v3518, %v3433
          %v3523 = vadd.f32 %v3519, %v3434
          %s3524 = scalar_lea.vmem [#allocation6], 192
          %3525 = vst [vmem:[%s3524] sm:$0xff] %v3520
          %3526 = vst [vmem:[%s3524 + $0x8] sm:$0xff] %v3521
          %3527 = vst [vmem:[%s3524 + $0x10] sm:$0xff] %v3522
          %3528 = vst [vmem:[%s3524 + $0x18] sm:$0xff] %v3523
          %v3529 = vmul.f32 %v3180, %v3520
          %v3530 = vmul.f32 %v3182, %v3521
          %v3531 = vmul.f32 %v3184, %v3522
          %v3532 = vmul.f32 %v3186, %v3523
          %v3533 = vadd.f32 %v3529, %v3435
          %v3534 = vadd.f32 %v3530, %v3436
          %v3535 = vadd.f32 %v3531, %v3437
          %v3536 = vadd.f32 %v3532, %v3438
          %s3537 = scalar_lea.vmem [#allocation6], 224
          %3538 = vst [vmem:[%s3537] sm:$0xff] %v3533
          %3539 = vst [vmem:[%s3537 + $0x8] sm:$0xff] %v3534
          %3540 = vst [vmem:[%s3537 + $0x10] sm:$0xff] %v3535
          %3541 = vst [vmem:[%s3537 + $0x18] sm:$0xff] %v3536
          %v3542 = vld [vmem:[#allocation6] sm:$0xff]
          %v3543 = vld [vmem:[#allocation6 + $0x8] sm:$0xff]
          %v3544 = vld [vmem:[#allocation6 + $0x10] sm:$0xff]
          %v3545 = vld [vmem:[#allocation6 + $0x18] sm:$0xff]
          %v3546 = vld [vmem:[#allocation6 + $0x20] sm:$0xff]
          %v3547 = vld [vmem:[#allocation6 + $0x28] sm:$0xff]
          %v3548 = vld [vmem:[#allocation6 + $0x30] sm:$0xff]
          %v3549 = vld [vmem:[#allocation6 + $0x38] sm:$0xff]
          %v3550 = vld [vmem:[#allocation6 + $0x40] sm:$0xff]
          %v3551 = vld [vmem:[#allocation6 + $0x48] sm:$0xff]
          %v3552 = vld [vmem:[#allocation6 + $0x50] sm:$0xff]
          %v3553 = vld [vmem:[#allocation6 + $0x58] sm:$0xff]
          %v3554 = vld [vmem:[#allocation6 + $0x60] sm:$0xff]
          %v3555 = vld [vmem:[#allocation6 + $0x68] sm:$0xff]
          %v3556 = vld [vmem:[#allocation6 + $0x70] sm:$0xff]
          %v3557 = vld [vmem:[#allocation6 + $0x78] sm:$0xff]
          %v3558 = vld [vmem:[#allocation6 + $0x80] sm:$0xff]
          %v3559 = vld [vmem:[#allocation6 + $0x88] sm:$0xff]
          %v3560 = vld [vmem:[#allocation6 + $0x90] sm:$0xff]
          %v3561 = vld [vmem:[#allocation6 + $0x98] sm:$0xff]
          %v3562 = vld [vmem:[#allocation6 + $0xa0] sm:$0xff]
          %v3563 = vld [vmem:[#allocation6 + $0xa8] sm:$0xff]
          %v3564 = vld [vmem:[#allocation6 + $0xb0] sm:$0xff]
          %v3565 = vld [vmem:[#allocation6 + $0xb8] sm:$0xff]
          %v3566 = vld [vmem:[#allocation6 + $0xc0] sm:$0xff]
          %v3567 = vld [vmem:[#allocation6 + $0xc8] sm:$0xff]
          %v3568 = vld [vmem:[#allocation6 + $0xd0] sm:$0xff]
          %v3569 = vld [vmem:[#allocation6 + $0xd8] sm:$0xff]
          %v3570 = vld [vmem:[#allocation6 + $0xe0] sm:$0xff]
          %v3571 = vld [vmem:[#allocation6 + $0xe8] sm:$0xff]
          %v3572 = vld [vmem:[#allocation6 + $0xf0] sm:$0xff]
          %v3573 = vld [vmem:[#allocation6 + $0xf8] sm:$0xff]
          %v3574 = vlaneseq
          %v3575 = vshrl.u32 %v3574, 7
          %v3576 = vsub.s32 0, %v3575
          %v3577 = vrot.slane %v2958, %v3576
          %3579 = vbcast.lane.b32.xlu0 %v3577, 256
          %v3580 = vpop.permute.xlu0 %3579
          %s3582 = sor.u32 256, 8
          %3583 = vbcast.lane.b32.xlu0 %v3577, %s3582
          %v3584 = vpop.permute.xlu0 %3583
          %v3585 = vlaneseq
          %v3586 = vshrl.u32 %v3585, 7
          %v3587 = vsub.s32 1, %v3586
          %v3588 = vrot.slane %v2958, %v3587
          %3590 = vbcast.lane.b32.xlu0 %v3588, 256
          %v3591 = vpop.permute.xlu0 %3590
          %s3593 = sor.u32 256, 8
          %3594 = vbcast.lane.b32.xlu0 %v3588, %s3593
          %v3595 = vpop.permute.xlu0 %3594
          %v3596 = vlaneseq
          %v3597 = vshrl.u32 %v3596, 7
          %v3598 = vsub.s32 2, %v3597
          %v3599 = vrot.slane %v2958, %v3598
          %3601 = vbcast.lane.b32.xlu0 %v3599, 256
          %v3602 = vpop.permute.xlu0 %3601
          %s3604 = sor.u32 256, 8
          %3605 = vbcast.lane.b32.xlu0 %v3599, %s3604
          %v3606 = vpop.permute.xlu0 %3605
          %v3607 = vlaneseq
          %v3608 = vshrl.u32 %v3607, 7
          %v3609 = vsub.s32 3, %v3608
          %v3610 = vrot.slane %v2958, %v3609
          %3612 = vbcast.lane.b32.xlu0 %v3610, 256
          %v3613 = vpop.permute.xlu0 %3612
          %s3615 = sor.u32 256, 8
          %3616 = vbcast.lane.b32.xlu0 %v3610, %s3615
          %v3617 = vpop.permute.xlu0 %3616
          %v3618 = vlaneseq
          %v3619 = vshrl.u32 %v3618, 7
          %v3620 = vsub.s32 4, %v3619
          %v3621 = vrot.slane %v2958, %v3620
          %3623 = vbcast.lane.b32.xlu0 %v3621, 256
          %v3624 = vpop.permute.xlu0 %3623
          %s3626 = sor.u32 256, 8
          %3627 = vbcast.lane.b32.xlu0 %v3621, %s3626
          %v3628 = vpop.permute.xlu0 %3627
          %v3629 = vlaneseq
          %v3630 = vshrl.u32 %v3629, 7
          %v3631 = vsub.s32 5, %v3630
          %v3632 = vrot.slane %v2958, %v3631
          %3634 = vbcast.lane.b32.xlu0 %v3632, 256
          %v3635 = vpop.permute.xlu0 %3634
          %s3637 = sor.u32 256, 8
          %3638 = vbcast.lane.b32.xlu0 %v3632, %s3637
          %v3639 = vpop.permute.xlu0 %3638
          %v3640 = vlaneseq
          %v3641 = vshrl.u32 %v3640, 7
          %v3642 = vsub.s32 6, %v3641
          %v3643 = vrot.slane %v2958, %v3642
          %3645 = vbcast.lane.b32.xlu0 %v3643, 256
          %v3646 = vpop.permute.xlu0 %3645
          %s3648 = sor.u32 256, 8
          %3649 = vbcast.lane.b32.xlu0 %v3643, %s3648
          %v3650 = vpop.permute.xlu0 %3649
          %v3651 = vlaneseq
          %v3652 = vshrl.u32 %v3651, 7
          %v3653 = vsub.s32 7, %v3652
          %v3654 = vrot.slane %v2958, %v3653
          %3656 = vbcast.lane.b32.xlu0 %v3654, 256
          %v3657 = vpop.permute.xlu0 %3656
          %s3659 = sor.u32 256, 8
          %3660 = vbcast.lane.b32.xlu0 %v3654, %s3659
          %v3661 = vpop.permute.xlu0 %3660
          %v3662 = vmul.f32 %v3542, %v3580
          %v3663 = vmul.f32 %v3543, %v3580
          %v3664 = vmul.f32 %v3544, %v3584
          %v3665 = vmul.f32 %v3545, %v3584
          %v3666 = vmul.f32 %v3546, %v3591
          %v3667 = vmul.f32 %v3547, %v3591
          %v3668 = vmul.f32 %v3548, %v3595
          %v3669 = vmul.f32 %v3549, %v3595
          %v3670 = vmul.f32 %v3550, %v3602
          %v3671 = vmul.f32 %v3551, %v3602
          %v3672 = vmul.f32 %v3552, %v3606
          %v3673 = vmul.f32 %v3553, %v3606
          %v3674 = vmul.f32 %v3554, %v3613
          %v3675 = vmul.f32 %v3555, %v3613
          %v3676 = vmul.f32 %v3556, %v3617
          %v3677 = vmul.f32 %v3557, %v3617
          %v3678 = vmul.f32 %v3558, %v3624
          %v3679 = vmul.f32 %v3559, %v3624
          %v3680 = vmul.f32 %v3560, %v3628
          %v3681 = vmul.f32 %v3561, %v3628
          %v3682 = vmul.f32 %v3562, %v3635
          %v3683 = vmul.f32 %v3563, %v3635
          %v3684 = vmul.f32 %v3564, %v3639
          %v3685 = vmul.f32 %v3565, %v3639
          %v3686 = vmul.f32 %v3566, %v3646
          %v3687 = vmul.f32 %v3567, %v3646
          %v3688 = vmul.f32 %v3568, %v3650
          %v3689 = vmul.f32 %v3569, %v3650
          %v3690 = vmul.f32 %v3570, %v3657
          %v3691 = vmul.f32 %v3571, %v3657
          %v3692 = vmul.f32 %v3572, %v3661
          %v3693 = vmul.f32 %v3573, %v3661
          %v3694 = vadd.f32 %v3662, %v3664
          %v3695 = vrot.slane %v3694, 4
          %v3696 = vadd.f32 %v3694, %v3695
          %v3697 = vrot.slane %v3696, 2
          %v3698 = vadd.f32 %v3696, %v3697
          %v3699 = vrot.slane %v3698, 1
          %v3700 = vadd.f32 %v3698, %v3699
          %v3701 = vadd.f32 %v3663, %v3665
          %v3702 = vrot.slane %v3701, 4
          %v3703 = vadd.f32 %v3701, %v3702
          %v3704 = vrot.slane %v3703, 2
          %v3705 = vadd.f32 %v3703, %v3704
          %v3706 = vrot.slane %v3705, 1
          %v3707 = vadd.f32 %v3705, %v3706
          %v3708 = vadd.f32 %v3666, %v3668
          %v3709 = vrot.slane %v3708, 4
          %v3710 = vadd.f32 %v3708, %v3709
          %v3711 = vrot.slane %v3710, 2
          %v3712 = vadd.f32 %v3710, %v3711
          %v3713 = vrot.slane %v3712, 1
          %v3714 = vadd.f32 %v3712, %v3713
          %v3715 = vadd.f32 %v3667, %v3669
          %v3716 = vrot.slane %v3715, 4
          %v3717 = vadd.f32 %v3715, %v3716
          %v3718 = vrot.slane %v3717, 2
          %v3719 = vadd.f32 %v3717, %v3718
          %v3720 = vrot.slane %v3719, 1
          %v3721 = vadd.f32 %v3719, %v3720
          %v3722 = vadd.f32 %v3670, %v3672
          %v3723 = vrot.slane %v3722, 4
          %v3724 = vadd.f32 %v3722, %v3723
          %v3725 = vrot.slane %v3724, 2
          %v3726 = vadd.f32 %v3724, %v3725
          %v3727 = vrot.slane %v3726, 1
          %v3728 = vadd.f32 %v3726, %v3727
          %v3729 = vadd.f32 %v3671, %v3673
          %v3730 = vrot.slane %v3729, 4
          %v3731 = vadd.f32 %v3729, %v3730
          %v3732 = vrot.slane %v3731, 2
          %v3733 = vadd.f32 %v3731, %v3732
          %v3734 = vrot.slane %v3733, 1
          %v3735 = vadd.f32 %v3733, %v3734
          %v3736 = vadd.f32 %v3674, %v3676
          %v3737 = vrot.slane %v3736, 4
          %v3738 = vadd.f32 %v3736, %v3737
          %v3739 = vrot.slane %v3738, 2
          %v3740 = vadd.f32 %v3738, %v3739
          %v3741 = vrot.slane %v3740, 1
          %v3742 = vadd.f32 %v3740, %v3741
          %v3743 = vadd.f32 %v3675, %v3677
          %v3744 = vrot.slane %v3743, 4
          %v3745 = vadd.f32 %v3743, %v3744
          %v3746 = vrot.slane %v3745, 2
          %v3747 = vadd.f32 %v3745, %v3746
          %v3748 = vrot.slane %v3747, 1
          %v3749 = vadd.f32 %v3747, %v3748
          %v3750 = vadd.f32 %v3678, %v3680
          %v3751 = vrot.slane %v3750, 4
          %v3752 = vadd.f32 %v3750, %v3751
          %v3753 = vrot.slane %v3752, 2
          %v3754 = vadd.f32 %v3752, %v3753
          %v3755 = vrot.slane %v3754, 1
          %v3756 = vadd.f32 %v3754, %v3755
          %v3757 = vadd.f32 %v3679, %v3681
          %v3758 = vrot.slane %v3757, 4
          %v3759 = vadd.f32 %v3757, %v3758
          %v3760 = vrot.slane %v3759, 2
          %v3761 = vadd.f32 %v3759, %v3760
          %v3762 = vrot.slane %v3761, 1
          %v3763 = vadd.f32 %v3761, %v3762
          %v3764 = vadd.f32 %v3682, %v3684
          %v3765 = vrot.slane %v3764, 4
          %v3766 = vadd.f32 %v3764, %v3765
          %v3767 = vrot.slane %v3766, 2
          %v3768 = vadd.f32 %v3766, %v3767
          %v3769 = vrot.slane %v3768, 1
          %v3770 = vadd.f32 %v3768, %v3769
          %v3771 = vadd.f32 %v3683, %v3685
          %v3772 = vrot.slane %v3771, 4
          %v3773 = vadd.f32 %v3771, %v3772
          %v3774 = vrot.slane %v3773, 2
          %v3775 = vadd.f32 %v3773, %v3774
          %v3776 = vrot.slane %v3775, 1
          %v3777 = vadd.f32 %v3775, %v3776
          %v3778 = vadd.f32 %v3686, %v3688
          %v3779 = vrot.slane %v3778, 4
          %v3780 = vadd.f32 %v3778, %v3779
          %v3781 = vrot.slane %v3780, 2
          %v3782 = vadd.f32 %v3780, %v3781
          %v3783 = vrot.slane %v3782, 1
          %v3784 = vadd.f32 %v3782, %v3783
          %v3785 = vadd.f32 %v3687, %v3689
          %v3786 = vrot.slane %v3785, 4
          %v3787 = vadd.f32 %v3785, %v3786
          %v3788 = vrot.slane %v3787, 2
          %v3789 = vadd.f32 %v3787, %v3788
          %v3790 = vrot.slane %v3789, 1
          %v3791 = vadd.f32 %v3789, %v3790
          %v3792 = vadd.f32 %v3690, %v3692
          %v3793 = vrot.slane %v3792, 4
          %v3794 = vadd.f32 %v3792, %v3793
          %v3795 = vrot.slane %v3794, 2
          %v3796 = vadd.f32 %v3794, %v3795
          %v3797 = vrot.slane %v3796, 1
          %v3798 = vadd.f32 %v3796, %v3797
          %v3799 = vadd.f32 %v3691, %v3693
          %v3800 = vrot.slane %v3799, 4
          %v3801 = vadd.f32 %v3799, %v3800
          %v3802 = vrot.slane %v3801, 2
          %v3803 = vadd.f32 %v3801, %v3802
          %v3804 = vrot.slane %v3803, 1
          %v3805 = vadd.f32 %v3803, %v3804
          %vm3822 = vcmask 1041409
          %v3823 = vsel %vm3822, %v3714, %v3700
          %vm3824 = vcmask 1042434
          %v3825 = vsel %vm3824, %v3728, %v3823
          %vm3826 = vcmask 1043459
          %v3827 = vsel %vm3826, %v3742, %v3825
          %vm3828 = vcmask 1044484
          %v3829 = vsel %vm3828, %v3756, %v3827
          %vm3830 = vcmask 1045509
          %v3831 = vsel %vm3830, %v3770, %v3829
          %vm3832 = vcmask 1046534
          %v3833 = vsel %vm3832, %v3784, %v3831
          %vm3834 = vcmask 1047559
          %v3835 = vsel %vm3834, %v3798, %v3833
          %v3836 = vsel %vm3822, %v3721, %v3707
          %v3837 = vsel %vm3824, %v3735, %v3836
          %v3838 = vsel %vm3826, %v3749, %v3837
          %v3839 = vsel %vm3828, %v3763, %v3838
          %v3840 = vsel %vm3830, %v3777, %v3839
          %v3841 = vsel %vm3832, %v3791, %v3840
          %v3842 = vsel %vm3834, %v3805, %v3841
          %s3845 = smul.addr %s2946, 8
          %s3846 = scalar_lea.vmem [#allocation7], %s3845
          %3847 = vst [vmem:[%s3846] sm:$0xff] %v3835
          %3848 = vst [vmem:[%s3846 + $0x8] sm:$0xff] %v3842
        $region96: #{tpu_custom_call.1} parent=75 // loop_footer
          %s2937 = sadd.s32 1, %s2933
        $region97: #{tpu_custom_call.1} parent=75 // loop_footer_branch
          %2932 = sbr.rel target = $region93
        $region98: #{tpu_custom_call.1} parent=75 // loop_exit
          _
        %v3849 = vld [vmem:[#allocation7] sm:$0xff]
        %v3850 = vld [vmem:[#allocation7 + $0x8] sm:$0xff]
        %v3851 = vld [vmem:[#allocation7 + $0x10] sm:$0xff]
        %v3852 = vld [vmem:[#allocation7 + $0x18] sm:$0xff]
        %v3853 = vld [vmem:[#allocation7 + $0x20] sm:$0xff]
        %v3854 = vld [vmem:[#allocation7 + $0x28] sm:$0xff]
        %v3855 = vld [vmem:[#allocation7 + $0x30] sm:$0xff]
        %v3856 = vld [vmem:[#allocation7 + $0x38] sm:$0xff]
        %v3857 = vld [vmem:[%s12] sm:$0x3]
        %v3859 = vlaneseq
        %v3860 = vshrl.u32 %v3859, 7
        %v3861 = vsub.s32 0, %v3860
        %v3862 = vrot.slane %v3857, %v3861
        %v3863 = vlaneseq
        %v3864 = vshrl.u32 %v3863, 7
        %v3865 = vsub.s32 1, %v3864
        %v3866 = vrot.slane %v3857, %v3865
        %v3869 = vmul.f32 %v3862, %v1205
        %v3870 = vmul.f32 %v3866, %v1206
        %v3871 = vmul.f32 %v3862, %v1207
        %v3872 = vmul.f32 %v3866, %v1208
        %v3873 = vmul.f32 %v3862, %v1209
        %v3874 = vmul.f32 %v3866, %v1210
        %v3875 = vmul.f32 %v3862, %v1211
        %v3876 = vmul.f32 %v3866, %v1212
        %v3877 = vadd.f32 %v3849, %v3869
        %v3878 = vadd.f32 %v3850, %v3870
        %v3879 = vadd.f32 %v3851, %v3871
        %v3880 = vadd.f32 %v3852, %v3872
        %v3881 = vadd.f32 %v3853, %v3873
        %v3882 = vadd.f32 %v3854, %v3874
        %v3883 = vadd.f32 %v3855, %v3875
        %v3884 = vadd.f32 %v3856, %v3876
        %v3885 = vxor.u32 %v905, 2147483648
        %v3886 = vxor.u32 %v907, 2147483648
        %v3887 = vxor.u32 %v909, 2147483648
        %v3888 = vxor.u32 %v911, 2147483648
        %v3889 = vxor.u32 %v915, 2147483648
        %v3890 = vxor.u32 %v917, 2147483648
        %v3891 = vxor.u32 %v919, 2147483648
        %v3892 = vxor.u32 %v921, 2147483648
        %v3893 = vmul.f32 %v3885, 1.442695
        %v3894 = vpow.pop %v3893
        %v3895 = vmul.f32 %v3886, 1.442695
        %v3896 = vpow.pop %v3895
        %v3897 = vmul.f32 %v3887, 1.442695
        %v3898 = vpow.pop %v3897
        %v3899 = vmul.f32 %v3888, 1.442695
        %v3900 = vpow.pop %v3899
        %v3901 = vmul.f32 %v3889, 1.442695
        %v3902 = vpow.pop %v3901
        %v3903 = vmul.f32 %v3890, 1.442695
        %v3904 = vpow.pop %v3903
        %v3905 = vmul.f32 %v3891, 1.442695
        %v3906 = vpow.pop %v3905
        %v3907 = vmul.f32 %v3892, 1.442695
        %v3908 = vpow.pop %v3907
        %v3909 = vadd.f32 %v3894, 1.0
        %v3910 = vadd.f32 %v3896, 1.0
        %v3911 = vadd.f32 %v3898, 1.0
        %v3912 = vadd.f32 %v3900, 1.0
        %v3913 = vadd.f32 %v3902, 1.0
        %v3914 = vadd.f32 %v3904, 1.0
        %v3915 = vadd.f32 %v3906, 1.0
        %v3916 = vadd.f32 %v3908, 1.0
        %v3917 = vrcp.pop %v3909
        %v3918 = vmul.f32 1.0, %v3917
        %v3919 = vrcp.pop %v3910
        %v3920 = vmul.f32 1.0, %v3919
        %v3921 = vrcp.pop %v3911
        %v3922 = vmul.f32 1.0, %v3921
        %v3923 = vrcp.pop %v3912
        %v3924 = vmul.f32 1.0, %v3923
        %v3925 = vrcp.pop %v3913
        %v3926 = vmul.f32 1.0, %v3925
        %v3927 = vrcp.pop %v3914
        %v3928 = vmul.f32 1.0, %v3927
        %v3929 = vrcp.pop %v3915
        %v3930 = vmul.f32 1.0, %v3929
        %v3931 = vrcp.pop %v3916
        %v3932 = vmul.f32 1.0, %v3931
        %v3933 = vmul.f32 %v905, %v3918
        %v3934 = vmul.f32 %v907, %v3920
        %v3935 = vmul.f32 %v909, %v3922
        %v3936 = vmul.f32 %v911, %v3924
        %v3937 = vmul.f32 %v915, %v3926
        %v3938 = vmul.f32 %v917, %v3928
        %v3939 = vmul.f32 %v919, %v3930
        %v3940 = vmul.f32 %v921, %v3932
        %v3941 = vmul.f32 %v3877, %v3933
        %v3942 = vmul.f32 %v3878, %v3934
        %v3943 = vmul.f32 %v3879, %v3935
        %v3944 = vmul.f32 %v3880, %v3936
        %v3945 = vmul.f32 %v3881, %v3937
        %v3946 = vmul.f32 %v3882, %v3938
        %v3947 = vmul.f32 %v3883, %v3939
        %v3948 = vmul.f32 %v3884, %v3940
        %v3949 = vpack.c.bf16 %v3943, %v3941
        %v3950 = vpack.c.bf16 %v3944, %v3942
        %v3951 = vpack.c.bf16 %v3947, %v3945
        %v3952 = vpack.c.bf16 %v3948, %v3946
        %v3953 = vld [vmem:[%s13] sm:$0xf]
        %v3954 = vld [vmem:[%s13 + $0x4] sm:$0xf]
        %v3955 = vld [vmem:[%s13 + $0x8] sm:$0xf]
        %v3956 = vld [vmem:[%s13 + $0xc] sm:$0xf]
        %v3957 = vld [vmem:[%s13 + $0x10] sm:$0xf]
        %v3958 = vld [vmem:[%s13 + $0x14] sm:$0xf]
        %v3959 = vld [vmem:[%s13 + $0x18] sm:$0xf]
        %v3960 = vld [vmem:[%s13 + $0x1c] sm:$0xf]
        %v3961 = vld [vmem:[%s13 + $0x20] sm:$0xf]
        %v3962 = vld [vmem:[%s13 + $0x24] sm:$0xf]
        %v3963 = vld [vmem:[%s13 + $0x28] sm:$0xf]
        %v3964 = vld [vmem:[%s13 + $0x2c] sm:$0xf]
        %v3965 = vld [vmem:[%s13 + $0x30] sm:$0xf]
        %v3966 = vld [vmem:[%s13 + $0x34] sm:$0xf]
        %v3967 = vld [vmem:[%s13 + $0x38] sm:$0xf]
        %v3968 = vld [vmem:[%s13 + $0x3c] sm:$0xf]
        %v3969 = vld [vmem:[%s13 + $0x40] sm:$0xf]
        %v3970 = vld [vmem:[%s13 + $0x44] sm:$0xf]
        %v3971 = vld [vmem:[%s13 + $0x48] sm:$0xf]
        %v3972 = vld [vmem:[%s13 + $0x4c] sm:$0xf]
        %v3973 = vld [vmem:[%s13 + $0x50] sm:$0xf]
        %v3974 = vld [vmem:[%s13 + $0x54] sm:$0xf]
        %v3975 = vld [vmem:[%s13 + $0x58] sm:$0xf]
        %v3976 = vld [vmem:[%s13 + $0x5c] sm:$0xf]
        %v3977 = vld [vmem:[%s13 + $0x60] sm:$0xf]
        %v3978 = vld [vmem:[%s13 + $0x64] sm:$0xf]
        %v3979 = vld [vmem:[%s13 + $0x68] sm:$0xf]
        %v3980 = vld [vmem:[%s13 + $0x6c] sm:$0xf]
        %v3981 = vld [vmem:[%s13 + $0x70] sm:$0xf]
        %v3982 = vld [vmem:[%s13 + $0x74] sm:$0xf]
        %v3983 = vld [vmem:[%s13 + $0x78] sm:$0xf]
        %v3984 = vld [vmem:[%s13 + $0x7c] sm:$0xf]
        %v4017 = vunpack.c.l.b16 %v3953
        %v4018 = vunpack.c.l.b16 %v3954
        %v4019 = vunpack.c.l.b16 %v3955
        %v4020 = vunpack.c.l.b16 %v3956
        %v4021 = vunpack.c.l.b16 %v3957
        %v4022 = vunpack.c.l.b16 %v3958
        %v4023 = vunpack.c.l.b16 %v3959
        %v4024 = vunpack.c.l.b16 %v3960
        %v4025 = vunpack.c.l.b16 %v3961
        %v4026 = vunpack.c.l.b16 %v3962
        %v4027 = vunpack.c.l.b16 %v3963
        %v4028 = vunpack.c.l.b16 %v3964
        %v4029 = vunpack.c.l.b16 %v3965
        %v4030 = vunpack.c.l.b16 %v3966
        %v4031 = vunpack.c.l.b16 %v3967
        %v4032 = vunpack.c.l.b16 %v3968
        %v4033 = vunpack.c.l.b16 %v3969
        %v4034 = vunpack.c.l.b16 %v3970
        %v4035 = vunpack.c.l.b16 %v3971
        %v4036 = vunpack.c.l.b16 %v3972
        %v4037 = vunpack.c.l.b16 %v3973
        %v4038 = vunpack.c.l.b16 %v3974
        %v4039 = vunpack.c.l.b16 %v3975
        %v4040 = vunpack.c.l.b16 %v3976
        %v4041 = vunpack.c.l.b16 %v3977
        %v4042 = vunpack.c.l.b16 %v3978
        %v4043 = vunpack.c.l.b16 %v3979
        %v4044 = vunpack.c.l.b16 %v3980
        %v4045 = vunpack.c.l.b16 %v3981
        %v4046 = vunpack.c.l.b16 %v3982
        %v4047 = vunpack.c.l.b16 %v3983
        %v4048 = vunpack.c.l.b16 %v3984
        %v4049 = vpack.c.b16 %v4018, %v4017
        %v4050 = vpack.c.b16 %v4020, %v4019
        %v4051 = vpack.c.b16 %v4022, %v4021
        %v4052 = vpack.c.b16 %v4024, %v4023
        %v4053 = vpack.c.b16 %v4026, %v4025
        %v4054 = vpack.c.b16 %v4028, %v4027
        %v4055 = vpack.c.b16 %v4030, %v4029
        %v4056 = vpack.c.b16 %v4032, %v4031
        %v4057 = vpack.c.b16 %v4034, %v4033
        %v4058 = vpack.c.b16 %v4036, %v4035
        %v4059 = vpack.c.b16 %v4038, %v4037
        %v4060 = vpack.c.b16 %v4040, %v4039
        %v4061 = vpack.c.b16 %v4042, %v4041
        %v4062 = vpack.c.b16 %v4044, %v4043
        %v4063 = vpack.c.b16 %v4046, %v4045
        %v4064 = vpack.c.b16 %v4048, %v4047
        %4081 = vmatprep.subr.bf16.mxu0 0
        %4082 = vmatpush1.bf16.msra.mxu0 %v4049
        %4083 = vmatprep.subr.bf16.mxu0 0
        %4084 = vmatpush1.bf16.msra.mxu0 %v4050
        %4085 = vmatprep.subr.bf16.mxu0 0
        %4086 = vmatpush1.bf16.msra.mxu0 %v4051
        %4087 = vmatprep.subr.bf16.mxu0 0
        %4088 = vmatpush1.bf16.msra.mxu0 %v4052
        %4089 = vmatprep.subr.bf16.mxu0 0
        %4090 = vmatpush1.bf16.msra.mxu0 %v4053
        %4091 = vmatprep.subr.bf16.mxu0 0
        %4092 = vmatpush1.bf16.msra.mxu0 %v4054
        %4093 = vmatprep.subr.bf16.mxu0 0
        %4094 = vmatpush1.bf16.msra.mxu0 %v4055
        %4095 = vmatprep.subr.bf16.mxu0 0
        %4096 = vmatpush1.bf16.msra.mxu0 %v4056
        %4097 = vmatprep.subr.bf16.mxu0 0
        %4098 = vmatpush1.bf16.msra.mxu0 %v4057
        %4099 = vmatprep.subr.bf16.mxu0 0
        %4100 = vmatpush1.bf16.msra.mxu0 %v4058
        %4101 = vmatprep.subr.bf16.mxu0 0
        %4102 = vmatpush1.bf16.msra.mxu0 %v4059
        %4103 = vmatprep.subr.bf16.mxu0 0
        %4104 = vmatpush1.bf16.msra.mxu0 %v4060
        %4105 = vmatprep.subr.bf16.mxu0 0
        %4106 = vmatpush1.bf16.msra.mxu0 %v4061
        %4107 = vmatprep.subr.bf16.mxu0 0
        %4108 = vmatpush1.bf16.msra.mxu0 %v4062
        %4109 = vmatprep.subr.bf16.mxu0 0
        %4110 = vmatpush1.bf16.msra.mxu0 %v4063
        %4111 = vmatprep.subr.bf16.mxu0 0
        %4112 = vmatpush1.bf16.msra.mxu0 %v4064
        %4113 = vmatprep.mubr.bf16.mxu0 %v3950
        %4114 = vmatmul.mubr.bf16.gmra.mrb[0].mxu0 %v3949
        %v4115 = vpop.f32.mrb[0].mxu0
        %v4116 = vadd.f32 0.0, %v4115
        %v4117 = vpop.f32.mrb[0].mxu0
        %v4118 = vpop.f32.mrb[0].mxu0
        %v4119 = vadd.f32 0.0, %v4118
        %v4120 = vpop.f32.mrb[0].mxu0
        %4121 = vmatprep.mubr.bf16.mxu0 %v3952
        %4122 = vmatmul.mubr.bf16.gmra.mrb[0].mxu0 %v3951
        %v4123 = vpop.f32.mrb[0].mxu0
        %v4124 = vadd.f32 0.0, %v4123
        %v4125 = vpop.f32.mrb[0].mxu0
        %v4126 = vpop.f32.mrb[0].mxu0
        %v4127 = vadd.f32 0.0, %v4126
        %v4128 = vpop.f32.mrb[0].mxu0
        %4129 = vdwg.mxu0
        %4130 = vst [vmem:[%s558] sm:$0xff] %v4116
        %4131 = vst [vmem:[%s558 + $0x8] sm:$0xff] %v4119
        %4132 = vst [vmem:[%s558 + $0x10] sm:$0xff] %v4124
        %4133 = vst [vmem:[%s558 + $0x18] sm:$0xff] %v4127
        %4134 = vst [vmem:[%s565] sm:$0xff] %v579
        %4135 = vst [vmem:[%s565 + $0x8] sm:$0xff] %v580
        %4136 = vst [vmem:[%s565 + $0x10] sm:$0xff] %v581
        %4137 = vst [vmem:[%s565 + $0x18] sm:$0xff] %v582
        %s4138 = sand.u32 %s351, 1
        %s4139 = scalar_lea.sflag [#allocation10], %s4138
        %s4140 = sand.u32 %s351, 1
        %s4141 = smul.addr %s4140, 32
        %s4142 = scalar_lea.vmem [#allocation13], %s4141
        %s4143 = sand.u32 %s377, 1
        %s4144 = scalar_lea.sflag [#allocation15], %s4143
        %s4145 = sand.u32 %s377, 1
        %s4146 = smul.addr %s4145, 32
        %s4147 = scalar_lea.vmem [#allocation14], %s4146
        // Predicated region
        $region99: #{tpu_custom_call.1} parent=75 // pred_check
          %p4148 = pneg %p361
        $region100: #{tpu_custom_call.1} parent=75 // pred_check_branch
          %4150 = sbr.rel (%p4148) target = $region102
        $region101: #{tpu_custom_call.1} parent=75 // pred_region
          %s4151 = smul.u32 2, %s39
          %s4153 = ssub.s32 512, 512
          %4154 = vsyncadd %s4139, %s4153
          %s4155 = smul.addr %s4151, 2
          %s4156 = smul.addr %s4155, 128
          %s4157 = scalar_lea.hbm %s14, %s4156
          %s4158 = sshll.u32 %s4142, 4
          %s4159 = int_to_ptr.vmem [resolvable:$true] %s4158
          %4164 = dma.vmem_to_hbm [thread:$0]  %s4159, 512, %s4157, %s4139, 128, 128, 8
        $region102: #{tpu_custom_call.1} parent=75 // pred_fallthru
          _
        // Predicated region
        $region103: #{tpu_custom_call.1} parent=75 // pred_check
          %p4165 = pneg %p387
        $region104: #{tpu_custom_call.1} parent=75 // pred_check_branch
          %4167 = sbr.rel (%p4165) target = $region106
        $region105: #{tpu_custom_call.1} parent=75 // pred_region
          %s4168 = smul.u32 2, %s39
          %s4170 = ssub.s32 512, 512
          %4171 = vsyncadd %s4144, %s4170
          %s4172 = smul.addr %s4168, 2
          %s4173 = smul.addr %s4172, 128
          %s4174 = scalar_lea.hbm %s15, %s4173
          %s4175 = sshll.u32 %s4147, 4
          %s4176 = int_to_ptr.vmem [resolvable:$true] %s4175
          %4181 = dma.vmem_to_hbm [thread:$0]  %s4176, 512, %s4174, %s4144, 128, 128, 8
        $region106: #{tpu_custom_call.1} parent=75 // pred_fallthru
          _
      $region76: #{tpu_custom_call.1} parent=5 // pred_fallthru
        _
      %p4182 = scmp.le.s32.totalorder 2, %s34
      // Predicated region
      $region107: #{tpu_custom_call.1} parent=5 // pred_check
        %p4183 = pneg %p4182
      $region108: #{tpu_custom_call.1} parent=5 // pred_check_branch
        %4185 = sbr.rel (%p4183) target = $region110
      $region109: #{tpu_custom_call.1} parent=5 // pred_region
        %s4186 = ssub.s32 %s34, 2
        // Predicated region
        $region111: #{tpu_custom_call.1} parent=109 // pred_check
          %p4187 = pneg %p367
        $region112: #{tpu_custom_call.1} parent=109 // pred_check_branch
          %4189 = sbr.rel (%p4187) target = $region114
        $region113: #{tpu_custom_call.1} parent=109 // pred_region
          %s4190 = sand.u32 %s352, 1
          %s4191 = scalar_lea.sflag [#allocation10], %s4190
          %s4192 = sand.u32 %s352, 1
          %s4193 = smul.addr %s4192, 32
          %s4194 = scalar_lea.vmem [#allocation13], %s4193
          %4195 = dma.done %s4191, 512
        $region114: #{tpu_custom_call.1} parent=109 // pred_fallthru
          _
        // Predicated region
        $region115: #{tpu_custom_call.1} parent=109 // pred_check
          %p4196 = pneg %p393
        $region116: #{tpu_custom_call.1} parent=109 // pred_check_branch
          %4198 = sbr.rel (%p4196) target = $region118
        $region117: #{tpu_custom_call.1} parent=109 // pred_region
          %s4199 = sand.u32 %s378, 1
          %s4200 = scalar_lea.sflag [#allocation15], %s4199
          %s4201 = sand.u32 %s378, 1
          %s4202 = smul.addr %s4201, 32
          %s4203 = scalar_lea.vmem [#allocation14], %s4202
          %4204 = dma.done %s4200, 512
        $region118: #{tpu_custom_call.1} parent=109 // pred_fallthru
          _
      $region110: #{tpu_custom_call.1} parent=5 // pred_fallthru
        _
    $region6: #{tpu_custom_call.1} parent=1 // loop_footer
      %s38 = sadd.s32 1, %s34
    $region7: #{tpu_custom_call.1} parent=1 // loop_footer_branch
      %33 = sbr.rel target = $region3
    $region8: #{tpu_custom_call.1} parent=1 // loop_exit
      _
    %4205 = vsyncpa [#allocation9], 1
    %s4206 = scalar_lea.sflag [#allocation9], 1
    %4207 = vsyncpa %s4206, 1
    %4208 = vsyncpa [#allocation12], 1
    %s4209 = scalar_lea.sflag [#allocation12], 1
    %4210 = vsyncpa %s4209, 1
    %4211 = vsyncpa [#allocation10], 1
    %s4212 = scalar_lea.sflag [#allocation10], 1
    %4213 = vsyncpa %s4212, 1
    %4214 = vsyncpa [#allocation15], 1
    %s4215 = scalar_lea.sflag [#allocation15], 1
    %4216 = vsyncpa %s4215, 1

</llo_original>
